<compile_context>
chip_gen: v5e
topology: v5e:2x2
jax: 0.10.0
libtpu: 0.0.40
codegen_flags: <defaults>
</compile_context>

<pallas_src>
import functools

import numpy as np
import jax
import jax.numpy as jnp
from jax import lax
from jax.experimental import pallas as pl
from jax.experimental.pallas import tpu as pltpu

LN_EPS = 1e-5          # python float (never capture jnp consts in kernels)
NEG_INF = -1e30        # python float


# ----------------------------- kernel helpers -----------------------------

def _layer_norm(y, gamma, beta):
    # y: (R, D) f32; gamma/beta: (1, D) f32
    mu = jnp.mean(y, axis=-1, keepdims=True)
    var = jnp.mean((y - mu) ** 2, axis=-1, keepdims=True)
    return (y - mu) * lax.rsqrt(var + LN_EPS) * gamma + beta


def _matmul_bf16(x, w):
    """bf16 MXU matmul with f32 accumulation; w is already bf16 (from HBM)."""
    return jnp.dot(x.astype(jnp.bfloat16), w,
                   preferred_element_type=jnp.float32)


def _mha(Q, K, V, num_head, causal):
    """All-heads-at-once attention per batch element.

    Q, K, V: (B, S, D) f32.  Q is already pre-scaled by 1/sqrt(dh) (folded
    into the projection weights host-side).  Returns (B, S, D) f32.
    B is a static block dim -> the loop below is fully unrolled and each
    einsum has a single (head) batch dim.
    """
    B, S, D = Q.shape
    dh = D // num_head
    if causal:
        row = lax.broadcasted_iota(jnp.int32, (S, S), 0)
        col = lax.broadcasted_iota(jnp.int32, (S, S), 1)
        keep = row >= col
    outs = []
    for b in range(B):
        Qh = jnp.swapaxes(Q[b].reshape(S, num_head, dh), 0, 1)  # (H, S, dh)
        Kh = jnp.swapaxes(K[b].reshape(S, num_head, dh), 0, 1)
        Vh = jnp.swapaxes(V[b].reshape(S, num_head, dh), 0, 1)
        s = jnp.einsum("hqd,hkd->hqk",
                       Qh.astype(jnp.bfloat16), Kh.astype(jnp.bfloat16),
                       preferred_element_type=jnp.float32)      # (H, S, S)
        if causal:
            s = jnp.where(keep[None, :, :], s, NEG_INF)
        s = s - jnp.max(s, axis=-1, keepdims=True)
        p = jnp.exp(s)
        p = p * pl.reciprocal(jnp.sum(p, axis=-1, keepdims=True), approx=True)
        # output directly in (S, H, dh) order -> contiguous head merge,
        # no explicit output-side swapaxes.
        o = jnp.einsum("hqk,hkd->qhd",
                       p.astype(jnp.bfloat16), Vh.astype(jnp.bfloat16),
                       preferred_element_type=jnp.float32)       # (S, H, dh)
        outs.append(o.reshape(S, D))
    return jnp.stack(outs, axis=0)                               # (B, S, D)


# ------------------------------- fused kernel -------------------------------

# Row indices into the packed (12, W) bias / LayerNorm vector table
# (must match the packing order in stack_params).
# 0: m_bqkv(3D) 1: m_bo(D) 2: m_g(D) 3: m_b(D)
# 4: e_bq(D)    5: e_bkv(2D) 6: e_g(D) 7: e_b(D)
# 8: f_b1(F)    9: f_b2(D) 10: f_g(D) 11: f_b(D)

def decoder_layer_kernel(enc_ref, dec_ref,
                         m_wqkv, m_wo, e_wq, e_wkv, f_w1, f_w2, vec_ref,
                         x_ref, *, num_head):
    """One grid step = one layer.  x_ref is the VMEM-resident (B, S, D)
    activation accumulator (same output block across the layer axis)."""
    layer = pl.program_id(0)

    @pl.when(layer == 0)
    def _():
        x_ref[...] = dec_ref[...]

    x = x_ref[...]                      # (B, S, D) f32
    enc = enc_ref[...]                  # (B, S, D) f32
    B, S, D = x.shape
    F = f_w1.shape[-1]
    x2 = x.reshape(B * S, D)
    enc2 = enc.reshape(B * S, D)

    vecs = vec_ref[0]                   # (12, W) f32

    def vrow(i, width):                 # -> (1, width) f32
        return vecs[i:i + 1, :width]

    # ---- masked multi-head self-attention (fused QKV projection) ----
    qkv = _matmul_bf16(x2, m_wqkv[0]) + vrow(0, 3 * D)       # (B*S, 3D)
    qkv = qkv.reshape(B, S, 3 * D)
    attn = _mha(qkv[..., :D], qkv[..., D:2 * D], qkv[..., 2 * D:],
                num_head, causal=True)
    y = _matmul_bf16(attn.reshape(B * S, D), m_wo[0]) + vrow(1, D)
    x2 = _layer_norm(y + x2, vrow(2, D), vrow(3, D))

    # ---- encoder-decoder attention (fused K/V projection, no WO) ----
    q = _matmul_bf16(x2, e_wq[0]) + vrow(4, D)
    kv = _matmul_bf16(enc2, e_wkv[0]) + vrow(5, 2 * D)
    q = q.reshape(B, S, D)
    kv = kv.reshape(B, S, 2 * D)
    attn = _mha(q, kv[..., :D], kv[..., D:], num_head, causal=False)
    x2 = _layer_norm(attn.reshape(B * S, D) + x2, vrow(6, D), vrow(7, D))

    # ---- feed-forward ----
    h = jnp.maximum(_matmul_bf16(x2, f_w1[0]) + vrow(8, F), 0.0)
    y = _matmul_bf16(h, f_w2[0]) + vrow(9, D)
    x2 = _layer_norm(y + x2, vrow(10, D), vrow(11, D))

    x_ref[...] = x2.reshape(B, S, D)


# ----------------------------- pallas wrapper -------------------------------

def stacked_decoder(encoder_output, decoder_input, stacked, num_head):
    B, S, D = decoder_input.shape
    L = stacked["m_wqkv"].shape[0]
    F = stacked["f_w1"].shape[-1]
    W = stacked["vec"].shape[-1]

    act_spec = pl.BlockSpec((B, S, D), lambda l: (0, 0, 0))

    def wspec(shape):                  # per-layer stacked weight / vec table
        nd = len(shape)
        return pl.BlockSpec((1,) + shape, lambda l, nd=nd: (l,) + (0,) * nd)

    in_specs = [
        act_spec, act_spec,
        wspec((D, 3 * D)),             # m_wqkv (bf16)
        wspec((D, D)),                 # m_wo   (bf16)
        wspec((D, D)),                 # e_wq   (bf16)
        wspec((D, 2 * D)),             # e_wkv  (bf16)
        wspec((D, F)),                 # f_w1   (bf16)
        wspec((F, D)),                 # f_w2   (bf16)
        wspec((12, W)),                # packed bias / LN vectors (f32)
    ]

    return pl.pallas_call(
        functools.partial(decoder_layer_kernel, num_head=num_head),
        out_shape=jax.ShapeDtypeStruct((B, S, D), decoder_input.dtype),
        grid=(L,),
        in_specs=in_specs,
        out_specs=act_spec,
        compiler_params=pltpu.CompilerParams(
            dimension_semantics=("arbitrary",),
            vmem_limit_bytes=48 * 1024 * 1024),
    )(encoder_output, decoder_input,
      stacked["m_wqkv"], stacked["m_wo"],
      stacked["e_wq"], stacked["e_wkv"],
      stacked["f_w1"], stacked["f_w2"],
      stacked["vec"])


# ---------------------------- pure-JAX reference ----------------------------

def _ref_ln(y, g, b):
    mu = jnp.mean(y, axis=-1, keepdims=True)
    var = jnp.mean((y - mu) ** 2, axis=-1, keepdims=True)
    return (y - mu) / jnp.sqrt(var + LN_EPS) * g + b


def _ref_attention(q_in, kv_in, p, num_head, causal, use_wo):
    B, S, D = q_in.shape
    dh = D // num_head
    Q = q_in @ p["wq"] + p["bq"]
    K = kv_in @ p["wk"] + p["bk"]
    V = kv_in @ p["wv"] + p["bv"]
    Qh = Q.reshape(B, S, num_head, dh).transpose(0, 2, 1, 3)
    Kh = K.reshape(B, S, num_head, dh).transpose(0, 2, 1, 3)
    Vh = V.reshape(B, S, num_head, dh).transpose(0, 2, 1, 3)
    s = jnp.einsum("bhqd,bhkd->bhqk", Qh, Kh) / np.sqrt(dh)
    if causal:
        mask = jnp.tril(jnp.ones((S, S)))
        s = jnp.where(mask == 0, -jnp.inf, s)
    a = jax.nn.softmax(s, axis=-1)
    out = jnp.einsum("bhqk,bhkd->bhqd", a, Vh).transpose(0, 2, 1, 3)
    out = out.reshape(B, S, D)
    if use_wo:
        out = out @ p["wo"] + p["bo"]
    return _ref_ln(out + q_in, p["ln_g"], p["ln_b"])


def ref_stacked_decoder(encoder_output, decoder_input, params, num_head):
    x = decoder_input
    for layer in params:
        x = _ref_attention(x, x, layer["mmha"], num_head, True, True)
        x = _ref_attention(x, encoder_output, layer["eda"], num_head,
                           False, False)
        p = layer["ffn"]
        h = jnp.maximum(x @ p["w1"] + p["b1"], 0.0)
        x = _ref_ln(h @ p["w2"] + p["b2"] + x, p["ln_g"], p["ln_b"])
    return x


# ------------------------------ param init ----------------------------------

class KeyGen:
    def __init__(self, key):
        self.key = key

    def __call__(self):
        self.key, sub = jax.random.split(self.key)
        return sub


def init_params(key, D, F, num_layers):
    kg = KeyGen(key)

    def w(shape):
        return jax.random.normal(kg(), shape, jnp.float32) * 0.05

    layers = []
    for _ in range(num_layers):
        mmha = {"wq": w((D, D)), "bq": w((1, D)),
                "wk": w((D, D)), "bk": w((1, D)),
                "wv": w((D, D)), "bv": w((1, D)),
                "wo": w((D, D)), "bo": w((1, D)),
                "ln_g": jnp.ones((1, D), jnp.float32),
                "ln_b": jnp.zeros((1, D), jnp.float32)}
        eda = {"wq": w((D, D)), "bq": w((1, D)),
               "wk": w((D, D)), "bk": w((1, D)),
               "wv": w((D, D)), "bv": w((1, D)),
               "ln_g": jnp.ones((1, D), jnp.float32),
               "ln_b": jnp.zeros((1, D), jnp.float32)}
        ffn_p = {"w1": w((D, F)), "b1": w((1, F)),
                 "w2": w((F, D)), "b2": w((1, D)),
                 "ln_g": jnp.ones((1, D), jnp.float32),
                 "ln_b": jnp.zeros((1, D), jnp.float32)}
        layers.append({"mmha": mmha, "eda": eda, "ffn": ffn_p})
    return layers


def stack_params(params, num_head):
    """Per-layer dicts -> [L, ...]-stacked tensors for the fused pallas_call:
      * fused QKV / KV weights, stored bf16 (halves HBM traffic + VMEM),
      * 1/sqrt(dh) folded into the Q weight/bias columns,
      * all 12 bias / LayerNorm vectors packed into one (L, 12, W) f32 table.
    """
    D = params[0]["mmha"]["wq"].shape[0]
    F = params[0]["ffn"]["w1"].shape[1]
    dh = D // num_head
    scale = 1.0 / float(np.sqrt(dh))
    W = max(3 * D, F)

    def padded(v):
        v = jnp.reshape(v, (-1,))
        return jnp.pad(v, (0, W - v.shape[0]))

    m_wqkv, m_wo, e_wq, e_wkv, f_w1, f_w2, vec = [], [], [], [], [], [], []
    for p in params:
        m, e, f = p["mmha"], p["eda"], p["ffn"]
        m_wqkv.append(jnp.concatenate(
            [m["wq"] * scale, m["wk"], m["wv"]], axis=1))
        m_wo.append(m["wo"])
        e_wq.append(e["wq"] * scale)
        e_wkv.append(jnp.concatenate([e["wk"], e["wv"]], axis=1))
        f_w1.append(f["w1"])
        f_w2.append(f["w2"])
        rows = [
            jnp.concatenate([m["bq"] * scale, m["bk"], m["bv"]], axis=1),
            m["bo"], m["ln_g"], m["ln_b"],
            e["bq"] * scale,
            jnp.concatenate([e["bk"], e["bv"]], axis=1),
            e["ln_g"], e["ln_b"],
            f["b1"], f["b2"], f["ln_g"], f["ln_b"],
        ]
        vec.append(jnp.stack([padded(r) for r in rows], axis=0))

    def st(xs, dtype):
        return jnp.stack(xs, axis=0).astype(dtype)

    return {
        "m_wqkv": st(m_wqkv, jnp.bfloat16),
        "m_wo": st(m_wo, jnp.bfloat16),
        "e_wq": st(e_wq, jnp.bfloat16),
        "e_wkv": st(e_wkv, jnp.bfloat16),
        "f_w1": st(f_w1, jnp.bfloat16),
        "f_w2": st(f_w2, jnp.bfloat16),
        "vec": st(vec, jnp.float32),
    }


# --------------------------------- main --------------------------------------

if __name__ == "__main__":
    B, S, D = 2, 8, 32
    NUM_HEAD = 4
    FFN_EXPAND = 64
    NUM_LAYERS = 2

    root = jax.random.PRNGKey(0)
    k_enc, k_dec, k_par = jax.random.split(root, 3)
    encoder_output = jax.random.normal(k_enc, (B, S, D), jnp.float32)
    decoder_input = jax.random.normal(k_dec, (B, S, D), jnp.float32)
    params = init_params(k_par, D, FFN_EXPAND, NUM_LAYERS)
    stacked = stack_params(params, NUM_HEAD)

    out = stacked_decoder(encoder_output, decoder_input, stacked, NUM_HEAD)
    out = jax.block_until_ready(out)

    ref = ref_stacked_decoder(encoder_output, decoder_input, params, NUM_HEAD)
    ref = jax.block_until_ready(ref)

    assert out.shape == (B, S, D)
    # bf16 matmul operands (f32 accumulation) + approx softmax reciprocal =>
    # slightly looser agreement with the pure-f32 reference.
    np.testing.assert_allclose(np.asarray(out), np.asarray(ref),
                               rtol=3e-2, atol=3e-2)
    print("KERNEL_OK")
</pallas_src>

<mosaic_0001>
module attributes {stable_mosaic.version = 11 : i64} {
  func.func @decoder_layer_kernel(%arg0: i32, %arg1: memref<2x8x32xf32, #tpu.memory_space<vmem>>, %arg2: memref<2x8x32xf32, #tpu.memory_space<vmem>>, %arg3: memref<1x32x96xbf16, #tpu.memory_space<vmem>>, %arg4: memref<1x32x32xbf16, #tpu.memory_space<vmem>>, %arg5: memref<1x32x32xbf16, #tpu.memory_space<vmem>>, %arg6: memref<1x32x64xbf16, #tpu.memory_space<vmem>>, %arg7: memref<1x32x64xbf16, #tpu.memory_space<vmem>>, %arg8: memref<1x64x32xbf16, #tpu.memory_space<vmem>>, %arg9: memref<1x12x96xf32, #tpu.memory_space<vmem>>, %arg10: memref<2x8x32xf32, #tpu.memory_space<vmem>>) attributes {dimension_semantics = [#tpu.dimension_semantics<arbitrary>], iteration_bounds = array<i64: 2>, scalar_prefetch = 0 : i64, scratch_operands = 0 : i64, tpu.core_type = #tpu.core_type<tc>, window_params = [{pipeline_mode = #tpu.pipeline_mode<synchronous>, transform_indices = @transform_0, window_bounds = array<i64: 2, 8, 32>}, {pipeline_mode = #tpu.pipeline_mode<synchronous>, transform_indices = @transform_1, window_bounds = array<i64: 2, 8, 32>}, {transform_indices = @transform_2, window_bounds = array<i64: 1, 32, 96>}, {transform_indices = @transform_3, window_bounds = array<i64: 1, 32, 32>}, {transform_indices = @transform_4, window_bounds = array<i64: 1, 32, 32>}, {transform_indices = @transform_5, window_bounds = array<i64: 1, 32, 64>}, {transform_indices = @transform_6, window_bounds = array<i64: 1, 32, 64>}, {transform_indices = @transform_7, window_bounds = array<i64: 1, 64, 32>}, {transform_indices = @transform_8, window_bounds = array<i64: 1, 12, 96>}, {pipeline_mode = #tpu.pipeline_mode<synchronous>, transform_indices = @transform_9, window_bounds = array<i64: 2, 8, 32>}]} {
    %c0_i32 = arith.constant 0 : i32
    %0 = arith.cmpi eq, %arg0, %c0_i32 : i32
    %1 = arith.extui %0 : i1 to i32
    %c0_i32_0 = arith.constant 0 : i32
    %2 = arith.cmpi ne, %1, %c0_i32_0 : i32
    scf.if %2 {
      %c0_69 = arith.constant 0 : index
      %c0_70 = arith.constant 0 : index
      %c0_71 = arith.constant 0 : index
      %279 = vector.load %arg2[%c0_69, %c0_70, %c0_71] : memref<2x8x32xf32, #tpu.memory_space<vmem>>, vector<2x8x32xf32>
      %c0_72 = arith.constant 0 : index
      %c0_73 = arith.constant 0 : index
      %c0_74 = arith.constant 0 : index
      %280 = vector.load %arg10[%c0_72, %c0_73, %c0_74] : memref<2x8x32xf32, #tpu.memory_space<vmem>>, vector<2x8x32xf32>
      tpu.vector_store %arg10[%c0_72, %c0_73, %c0_74], %279 {strides = array<i32>} : memref<2x8x32xf32, #tpu.memory_space<vmem>>, vector<2x8x32xf32>,
    } else {
    }
    %c0 = arith.constant 0 : index
    %c0_1 = arith.constant 0 : index
    %c0_2 = arith.constant 0 : index
    %3 = vector.load %arg10[%c0, %c0_1, %c0_2] : memref<2x8x32xf32, #tpu.memory_space<vmem>>, vector<2x8x32xf32>
    %c0_3 = arith.constant 0 : index
    %c0_4 = arith.constant 0 : index
    %c0_5 = arith.constant 0 : index
    %4 = vector.load %arg1[%c0_3, %c0_4, %c0_5] : memref<2x8x32xf32, #tpu.memory_space<vmem>>, vector<2x8x32xf32>
    %5 = vector.shape_cast %3 : vector<2x8x32xf32> to vector<16x32xf32>
    %6 = vector.shape_cast %4 : vector<2x8x32xf32> to vector<16x32xf32>
    %c0_6 = arith.constant 0 : index
    %c0_7 = arith.constant 0 : index
    %c0_8 = arith.constant 0 : index
    %7 = vector.load %arg9[%c0_6, %c0_7, %c0_8] : memref<1x12x96xf32, #tpu.memory_space<vmem>>, vector<1x12x96xf32>
    %8 = vector.shape_cast %7 : vector<1x12x96xf32> to vector<12x96xf32>
    %c0_9 = arith.constant 0 : index
    %c0_10 = arith.constant 0 : index
    %c0_11 = arith.constant 0 : index
    %9 = vector.load %arg3[%c0_9, %c0_10, %c0_11] : memref<1x32x96xbf16, #tpu.memory_space<vmem>>, vector<1x32x96xbf16>
    %10 = vector.shape_cast %9 : vector<1x32x96xbf16> to vector<32x96xbf16>
    %11 = arith.truncf %5 : vector<16x32xf32> to vector<16x32xbf16>
    %cst = arith.constant dense<0.000000e+00> : vector<16x96xf32>
    %12 = tpu.matmul %11, %10, %cst {dimension_numbers = #tpu.dot_dimension_numbers<[1], [0], [0], [1], [0, 0, 1, 1], [], []>} : vector<16x32xbf16>, vector<32x96xbf16>, vector<16x96xf32> -> vector<16x96xf32>
    %13 = vector.extract_strided_slice %8 {offsets = [0, 0], sizes = [1, 96], strides = [1, 1]} : vector<12x96xf32> to vector<1x96xf32>
    %14 = vector.broadcast %13 : vector<1x96xf32> to vector<16x96xf32>
    %15 = arith.addf %12, %14 : vector<16x96xf32>
    %16 = vector.shape_cast %15 : vector<16x96xf32> to vector<2x8x96xf32>
    %17 = vector.extract_strided_slice %16 {offsets = [0, 0, 0], sizes = [2, 8, 32], strides = [1, 1, 1]} : vector<2x8x96xf32> to vector<2x8x32xf32>
    %18 = vector.extract_strided_slice %16 {offsets = [0, 0, 32], sizes = [2, 8, 32], strides = [1, 1, 1]} : vector<2x8x96xf32> to vector<2x8x32xf32>
    %19 = vector.extract_strided_slice %16 {offsets = [0, 0, 64], sizes = [2, 8, 32], strides = [1, 1, 1]} : vector<2x8x96xf32> to vector<2x8x32xf32>
    %20 = tpu.iota {dimensions = array<i32: 0>} : vector<8x8xi32>
    %21 = tpu.iota {dimensions = array<i32: 1>} : vector<8x8xi32>
    %22 = arith.cmpi sge, %20, %21 : vector<8x8xi32>
    %23 = vector.extract_strided_slice %17 {offsets = [0, 0, 0], sizes = [1, 8, 32], strides = [1, 1, 1]} : vector<2x8x32xf32> to vector<1x8x32xf32>
    %24 = vector.shape_cast %23 : vector<1x8x32xf32> to vector<8x32xf32>
    %25 = vector.shape_cast %24 : vector<8x32xf32> to vector<8x4x8xf32>
    %26 = tpu.transpose %25, [1, 0, 2] : vector<8x4x8xf32> -> vector<4x8x8xf32>
    %27 = vector.extract_strided_slice %18 {offsets = [0, 0, 0], sizes = [1, 8, 32], strides = [1, 1, 1]} : vector<2x8x32xf32> to vector<1x8x32xf32>
    %28 = vector.shape_cast %27 : vector<1x8x32xf32> to vector<8x32xf32>
    %29 = vector.shape_cast %28 : vector<8x32xf32> to vector<8x4x8xf32>
    %30 = tpu.transpose %29, [1, 0, 2] : vector<8x4x8xf32> -> vector<4x8x8xf32>
    %31 = vector.extract_strided_slice %19 {offsets = [0, 0, 0], sizes = [1, 8, 32], strides = [1, 1, 1]} : vector<2x8x32xf32> to vector<1x8x32xf32>
    %32 = vector.shape_cast %31 : vector<1x8x32xf32> to vector<8x32xf32>
    %33 = vector.shape_cast %32 : vector<8x32xf32> to vector<8x4x8xf32>
    %34 = tpu.transpose %33, [1, 0, 2] : vector<8x4x8xf32> -> vector<4x8x8xf32>
    %35 = arith.truncf %26 : vector<4x8x8xf32> to vector<4x8x8xbf16>
    %36 = arith.truncf %30 : vector<4x8x8xf32> to vector<4x8x8xbf16>
    "tpu.trace_start"() <{level = 10 : i32, message = "hqd,hkd->hqk"}> : () -> ()
    %cst_12 = arith.constant dense<0.000000e+00> : vector<4x8x8xf32>
    %37 = tpu.matmul %35, %36, %cst_12 {dimension_numbers = #tpu.dot_dimension_numbers<[2], [2], [1], [1], [0, 0, 0, 1, 1, 1], [0], [0]>} : vector<4x8x8xbf16>, vector<4x8x8xbf16>, vector<4x8x8xf32> -> vector<4x8x8xf32>
    "tpu.trace_stop"() : () -> ()
    %38 = vector.shape_cast %22 : vector<8x8xi1> to vector<1x8x8xi1>
    %cst_13 = arith.constant -1.000000e+30 : f32
    %39 = vector.shape_cast %38 : vector<1x8x8xi1> to vector<1x8x8xi1>
    %40 = vector.broadcast %39 : vector<1x8x8xi1> to vector<4x8x8xi1>
    %41 = vector.broadcast %cst_13 : f32 to vector<4x8x8xf32>
    %42 = arith.select %40, %37, %41 : vector<4x8x8xi1>, vector<4x8x8xf32>
    %cst_14 = arith.constant dense<0xFF800000> : vector<4x8xf32>
    %43 = vector.multi_reduction <maximumf>, %42, %cst_14 [2] : vector<4x8x8xf32> to vector<4x8xf32>
    %44 = vector.shape_cast %43 : vector<4x8xf32> to vector<4x8x1xf32>
    %45 = vector.broadcast %44 : vector<4x8x1xf32> to vector<4x8x8xf32>
    %46 = arith.subf %42, %45 : vector<4x8x8xf32>
    %47 = math.exp %46 : vector<4x8x8xf32>
    %cst_15 = arith.constant dense<0.000000e+00> : vector<4x8xf32>
    %48 = vector.multi_reduction <add>, %47, %cst_15 [2] : vector<4x8x8xf32> to vector<4x8xf32>
    %49 = vector.shape_cast %48 : vector<4x8xf32> to vector<4x8x1xf32>
    %50 = tpu.reciprocal %49 {approx = true} : vector<4x8x1xf32> -> vector<4x8x1xf32>
    %51 = vector.broadcast %50 : vector<4x8x1xf32> to vector<4x8x8xf32>
    %52 = arith.mulf %47, %51 : vector<4x8x8xf32>
    %53 = arith.truncf %52 : vector<4x8x8xf32> to vector<4x8x8xbf16>
    %54 = arith.truncf %34 : vector<4x8x8xf32> to vector<4x8x8xbf16>
    "tpu.trace_start"() <{level = 10 : i32, message = "hqk,hkd->qhd"}> : () -> ()
    %cst_16 = arith.constant dense<0.000000e+00> : vector<4x8x8xf32>
    %55 = tpu.matmul %54, %53, %cst_16 {dimension_numbers = #tpu.dot_dimension_numbers<[1], [2], [2], [1], [0, 0, 0, 2, 1, 1], [0], [0]>} : vector<4x8x8xbf16>, vector<4x8x8xbf16>, vector<4x8x8xf32> -> vector<4x8x8xf32>
    %56 = tpu.transpose %55, [2, 0, 1] : vector<4x8x8xf32> -> vector<8x4x8xf32>
    "tpu.trace_stop"() : () -> ()
    %57 = vector.shape_cast %56 : vector<8x4x8xf32> to vector<8x32xf32>
    %58 = vector.extract_strided_slice %17 {offsets = [1, 0, 0], sizes = [1, 8, 32], strides = [1, 1, 1]} : vector<2x8x32xf32> to vector<1x8x32xf32>
    %59 = vector.shape_cast %58 : vector<1x8x32xf32> to vector<8x32xf32>
    %60 = vector.shape_cast %59 : vector<8x32xf32> to vector<8x4x8xf32>
    %61 = tpu.transpose %60, [1, 0, 2] : vector<8x4x8xf32> -> vector<4x8x8xf32>
    %62 = vector.extract_strided_slice %18 {offsets = [1, 0, 0], sizes = [1, 8, 32], strides = [1, 1, 1]} : vector<2x8x32xf32> to vector<1x8x32xf32>
    %63 = vector.shape_cast %62 : vector<1x8x32xf32> to vector<8x32xf32>
    %64 = vector.shape_cast %63 : vector<8x32xf32> to vector<8x4x8xf32>
    %65 = tpu.transpose %64, [1, 0, 2] : vector<8x4x8xf32> -> vector<4x8x8xf32>
    %66 = vector.extract_strided_slice %19 {offsets = [1, 0, 0], sizes = [1, 8, 32], strides = [1, 1, 1]} : vector<2x8x32xf32> to vector<1x8x32xf32>
    %67 = vector.shape_cast %66 : vector<1x8x32xf32> to vector<8x32xf32>
    %68 = vector.shape_cast %67 : vector<8x32xf32> to vector<8x4x8xf32>
    %69 = tpu.transpose %68, [1, 0, 2] : vector<8x4x8xf32> -> vector<4x8x8xf32>
    %70 = arith.truncf %61 : vector<4x8x8xf32> to vector<4x8x8xbf16>
    %71 = arith.truncf %65 : vector<4x8x8xf32> to vector<4x8x8xbf16>
    "tpu.trace_start"() <{level = 10 : i32, message = "hqd,hkd->hqk"}> : () -> ()
    %cst_17 = arith.constant dense<0.000000e+00> : vector<4x8x8xf32>
    %72 = tpu.matmul %70, %71, %cst_17 {dimension_numbers = #tpu.dot_dimension_numbers<[2], [2], [1], [1], [0, 0, 0, 1, 1, 1], [0], [0]>} : vector<4x8x8xbf16>, vector<4x8x8xbf16>, vector<4x8x8xf32> -> vector<4x8x8xf32>
    "tpu.trace_stop"() : () -> ()
    %73 = vector.shape_cast %22 : vector<8x8xi1> to vector<1x8x8xi1>
    %cst_18 = arith.constant -1.000000e+30 : f32
    %74 = vector.shape_cast %73 : vector<1x8x8xi1> to vector<1x8x8xi1>
    %75 = vector.broadcast %74 : vector<1x8x8xi1> to vector<4x8x8xi1>
    %76 = vector.broadcast %cst_18 : f32 to vector<4x8x8xf32>
    %77 = arith.select %75, %72, %76 : vector<4x8x8xi1>, vector<4x8x8xf32>
    %cst_19 = arith.constant dense<0xFF800000> : vector<4x8xf32>
    %78 = vector.multi_reduction <maximumf>, %77, %cst_19 [2] : vector<4x8x8xf32> to vector<4x8xf32>
    %79 = vector.shape_cast %78 : vector<4x8xf32> to vector<4x8x1xf32>
    %80 = vector.broadcast %79 : vector<4x8x1xf32> to vector<4x8x8xf32>
    %81 = arith.subf %77, %80 : vector<4x8x8xf32>
    %82 = math.exp %81 : vector<4x8x8xf32>
    %cst_20 = arith.constant dense<0.000000e+00> : vector<4x8xf32>
    %83 = vector.multi_reduction <add>, %82, %cst_20 [2] : vector<4x8x8xf32> to vector<4x8xf32>
    %84 = vector.shape_cast %83 : vector<4x8xf32> to vector<4x8x1xf32>
    %85 = tpu.reciprocal %84 {approx = true} : vector<4x8x1xf32> -> vector<4x8x1xf32>
    %86 = vector.broadcast %85 : vector<4x8x1xf32> to vector<4x8x8xf32>
    %87 = arith.mulf %82, %86 : vector<4x8x8xf32>
    %88 = arith.truncf %87 : vector<4x8x8xf32> to vector<4x8x8xbf16>
    %89 = arith.truncf %69 : vector<4x8x8xf32> to vector<4x8x8xbf16>
    "tpu.trace_start"() <{level = 10 : i32, message = "hqk,hkd->qhd"}> : () -> ()
    %cst_21 = arith.constant dense<0.000000e+00> : vector<4x8x8xf32>
    %90 = tpu.matmul %89, %88, %cst_21 {dimension_numbers = #tpu.dot_dimension_numbers<[1], [2], [2], [1], [0, 0, 0, 2, 1, 1], [0], [0]>} : vector<4x8x8xbf16>, vector<4x8x8xbf16>, vector<4x8x8xf32> -> vector<4x8x8xf32>
    %91 = tpu.transpose %90, [2, 0, 1] : vector<4x8x8xf32> -> vector<8x4x8xf32>
    "tpu.trace_stop"() : () -> ()
    %92 = vector.shape_cast %91 : vector<8x4x8xf32> to vector<8x32xf32>
    %93 = vector.shape_cast %57 : vector<8x32xf32> to vector<1x8x32xf32>
    %94 = vector.shape_cast %92 : vector<8x32xf32> to vector<1x8x32xf32>
    %95 = tpu.concatenate %93, %94 in 0 : vector<1x8x32xf32>, vector<1x8x32xf32> -> vector<2x8x32xf32>
    %96 = vector.shape_cast %95 : vector<2x8x32xf32> to vector<16x32xf32>
    %c0_22 = arith.constant 0 : index
    %c0_23 = arith.constant 0 : index
    %c0_24 = arith.constant 0 : index
    %97 = vector.load %arg4[%c0_22, %c0_23, %c0_24] : memref<1x32x32xbf16, #tpu.memory_space<vmem>>, vector<1x32x32xbf16>
    %98 = vector.shape_cast %97 : vector<1x32x32xbf16> to vector<32x32xbf16>
    %99 = arith.truncf %96 : vector<16x32xf32> to vector<16x32xbf16>
    %cst_25 = arith.constant dense<0.000000e+00> : vector<16x32xf32>
    %100 = tpu.matmul %99, %98, %cst_25 {dimension_numbers = #tpu.dot_dimension_numbers<[1], [0], [0], [1], [0, 0, 1, 1], [], []>} : vector<16x32xbf16>, vector<32x32xbf16>, vector<16x32xf32> -> vector<16x32xf32>
    %101 = vector.extract_strided_slice %8 {offsets = [1, 0], sizes = [1, 32], strides = [1, 1]} : vector<12x96xf32> to vector<1x32xf32>
    %102 = vector.broadcast %101 : vector<1x32xf32> to vector<16x32xf32>
    %103 = arith.addf %100, %102 : vector<16x32xf32>
    %104 = arith.addf %103, %5 : vector<16x32xf32>
    %105 = vector.extract_strided_slice %8 {offsets = [2, 0], sizes = [1, 32], strides = [1, 1]} : vector<12x96xf32> to vector<1x32xf32>
    %106 = vector.extract_strided_slice %8 {offsets = [3, 0], sizes = [1, 32], strides = [1, 1]} : vector<12x96xf32> to vector<1x32xf32>
    %cst_26 = arith.constant dense<0.000000e+00> : vector<16xf32>
    %107 = vector.multi_reduction <add>, %104, %cst_26 [1] : vector<16x32xf32> to vector<16xf32>
    %108 = vector.shape_cast %107 : vector<16xf32> to vector<16x1xf32>
    %cst_27 = arith.constant 3.200000e+01 : f32
    %109 = vector.broadcast %cst_27 : f32 to vector<16x1xf32>
    %110 = arith.divf %108, %109 : vector<16x1xf32>
    %111 = vector.broadcast %110 : vector<16x1xf32> to vector<16x32xf32>
    %112 = arith.subf %104, %111 : vector<16x32xf32>
    %113 = arith.mulf %112, %112 : vector<16x32xf32>
    %cst_28 = arith.constant dense<0.000000e+00> : vector<16xf32>
    %114 = vector.multi_reduction <add>, %113, %cst_28 [1] : vector<16x32xf32> to vector<16xf32>
    %115 = vector.shape_cast %114 : vector<16xf32> to vector<16x1xf32>
    %cst_29 = arith.constant 3.200000e+01 : f32
    %116 = vector.broadcast %cst_29 : f32 to vector<16x1xf32>
    %117 = arith.divf %115, %116 : vector<16x1xf32>
    %118 = vector.broadcast %110 : vector<16x1xf32> to vector<16x32xf32>
    %119 = arith.subf %104, %118 : vector<16x32xf32>
    %cst_30 = arith.constant 9.99999974E-6 : f32
    %120 = vector.broadcast %cst_30 : f32 to vector<16x1xf32>
    %121 = arith.addf %117, %120 : vector<16x1xf32>
    %122 = math.rsqrt %121 : vector<16x1xf32>
    %123 = vector.broadcast %122 : vector<16x1xf32> to vector<16x32xf32>
    %124 = arith.mulf %119, %123 : vector<16x32xf32>
    %125 = vector.broadcast %105 : vector<1x32xf32> to vector<16x32xf32>
    %126 = arith.mulf %124, %125 : vector<16x32xf32>
    %127 = vector.broadcast %106 : vector<1x32xf32> to vector<16x32xf32>
    %128 = arith.addf %126, %127 : vector<16x32xf32>
    %c0_31 = arith.constant 0 : index
    %c0_32 = arith.constant 0 : index
    %c0_33 = arith.constant 0 : index
    %129 = vector.load %arg5[%c0_31, %c0_32, %c0_33] : memref<1x32x32xbf16, #tpu.memory_space<vmem>>, vector<1x32x32xbf16>
    %130 = vector.shape_cast %129 : vector<1x32x32xbf16> to vector<32x32xbf16>
    %131 = arith.truncf %128 : vector<16x32xf32> to vector<16x32xbf16>
    %cst_34 = arith.constant dense<0.000000e+00> : vector<16x32xf32>
    %132 = tpu.matmul %131, %130, %cst_34 {dimension_numbers = #tpu.dot_dimension_numbers<[1], [0], [0], [1], [0, 0, 1, 1], [], []>} : vector<16x32xbf16>, vector<32x32xbf16>, vector<16x32xf32> -> vector<16x32xf32>
    %133 = vector.extract_strided_slice %8 {offsets = [4, 0], sizes = [1, 32], strides = [1, 1]} : vector<12x96xf32> to vector<1x32xf32>
    %134 = vector.broadcast %133 : vector<1x32xf32> to vector<16x32xf32>
    %135 = arith.addf %132, %134 : vector<16x32xf32>
    %c0_35 = arith.constant 0 : index
    %c0_36 = arith.constant 0 : index
    %c0_37 = arith.constant 0 : index
    %136 = vector.load %arg6[%c0_35, %c0_36, %c0_37] : memref<1x32x64xbf16, #tpu.memory_space<vmem>>, vector<1x32x64xbf16>
    %137 = vector.shape_cast %136 : vector<1x32x64xbf16> to vector<32x64xbf16>
    %138 = arith.truncf %6 : vector<16x32xf32> to vector<16x32xbf16>
    %cst_38 = arith.constant dense<0.000000e+00> : vector<16x64xf32>
    %139 = tpu.matmul %138, %137, %cst_38 {dimension_numbers = #tpu.dot_dimension_numbers<[1], [0], [0], [1], [0, 0, 1, 1], [], []>} : vector<16x32xbf16>, vector<32x64xbf16>, vector<16x64xf32> -> vector<16x64xf32>
    %140 = vector.extract_strided_slice %8 {offsets = [5, 0], sizes = [1, 64], strides = [1, 1]} : vector<12x96xf32> to vector<1x64xf32>
    %141 = vector.broadcast %140 : vector<1x64xf32> to vector<16x64xf32>
    %142 = arith.addf %139, %141 : vector<16x64xf32>
    %143 = vector.shape_cast %135 : vector<16x32xf32> to vector<2x8x32xf32>
    %144 = vector.shape_cast %142 : vector<16x64xf32> to vector<2x8x64xf32>
    %145 = vector.extract_strided_slice %144 {offsets = [0, 0, 0], sizes = [2, 8, 32], strides = [1, 1, 1]} : vector<2x8x64xf32> to vector<2x8x32xf32>
    %146 = vector.extract_strided_slice %144 {offsets = [0, 0, 32], sizes = [2, 8, 32], strides = [1, 1, 1]} : vector<2x8x64xf32> to vector<2x8x32xf32>
    %147 = vector.extract_strided_slice %143 {offsets = [0, 0, 0], sizes = [1, 8, 32], strides = [1, 1, 1]} : vector<2x8x32xf32> to vector<1x8x32xf32>
    %148 = vector.shape_cast %147 : vector<1x8x32xf32> to vector<8x32xf32>
    %149 = vector.shape_cast %148 : vector<8x32xf32> to vector<8x4x8xf32>
    %150 = tpu.transpose %149, [1, 0, 2] : vector<8x4x8xf32> -> vector<4x8x8xf32>
    %151 = vector.extract_strided_slice %145 {offsets = [0, 0, 0], sizes = [1, 8, 32], strides = [1, 1, 1]} : vector<2x8x32xf32> to vector<1x8x32xf32>
    %152 = vector.shape_cast %151 : vector<1x8x32xf32> to vector<8x32xf32>
    %153 = vector.shape_cast %152 : vector<8x32xf32> to vector<8x4x8xf32>
    %154 = tpu.transpose %153, [1, 0, 2] : vector<8x4x8xf32> -> vector<4x8x8xf32>
    %155 = vector.extract_strided_slice %146 {offsets = [0, 0, 0], sizes = [1, 8, 32], strides = [1, 1, 1]} : vector<2x8x32xf32> to vector<1x8x32xf32>
    %156 = vector.shape_cast %155 : vector<1x8x32xf32> to vector<8x32xf32>
    %157 = vector.shape_cast %156 : vector<8x32xf32> to vector<8x4x8xf32>
    %158 = tpu.transpose %157, [1, 0, 2] : vector<8x4x8xf32> -> vector<4x8x8xf32>
    %159 = arith.truncf %150 : vector<4x8x8xf32> to vector<4x8x8xbf16>
    %160 = arith.truncf %154 : vector<4x8x8xf32> to vector<4x8x8xbf16>
    "tpu.trace_start"() <{level = 10 : i32, message = "hqd,hkd->hqk"}> : () -> ()
    %cst_39 = arith.constant dense<0.000000e+00> : vector<4x8x8xf32>
    %161 = tpu.matmul %159, %160, %cst_39 {dimension_numbers = #tpu.dot_dimension_numbers<[2], [2], [1], [1], [0, 0, 0, 1, 1, 1], [0], [0]>} : vector<4x8x8xbf16>, vector<4x8x8xbf16>, vector<4x8x8xf32> -> vector<4x8x8xf32>
    "tpu.trace_stop"() : () -> ()
    %cst_40 = arith.constant dense<0xFF800000> : vector<4x8xf32>
    %162 = vector.multi_reduction <maximumf>, %161, %cst_40 [2] : vector<4x8x8xf32> to vector<4x8xf32>
    %163 = vector.shape_cast %162 : vector<4x8xf32> to vector<4x8x1xf32>
    %164 = vector.broadcast %163 : vector<4x8x1xf32> to vector<4x8x8xf32>
    %165 = arith.subf %161, %164 : vector<4x8x8xf32>
    %166 = math.exp %165 : vector<4x8x8xf32>
    %cst_41 = arith.constant dense<0.000000e+00> : vector<4x8xf32>
    %167 = vector.multi_reduction <add>, %166, %cst_41 [2] : vector<4x8x8xf32> to vector<4x8xf32>
    %168 = vector.shape_cast %167 : vector<4x8xf32> to vector<4x8x1xf32>
    %169 = tpu.reciprocal %168 {approx = true} : vector<4x8x1xf32> -> vector<4x8x1xf32>
    %170 = vector.broadcast %169 : vector<4x8x1xf32> to vector<4x8x8xf32>
    %171 = arith.mulf %166, %170 : vector<4x8x8xf32>
    %172 = arith.truncf %171 : vector<4x8x8xf32> to vector<4x8x8xbf16>
    %173 = arith.truncf %158 : vector<4x8x8xf32> to vector<4x8x8xbf16>
    "tpu.trace_start"() <{level = 10 : i32, message = "hqk,hkd->qhd"}> : () -> ()
    %cst_42 = arith.constant dense<0.000000e+00> : vector<4x8x8xf32>
    %174 = tpu.matmul %173, %172, %cst_42 {dimension_numbers = #tpu.dot_dimension_numbers<[1], [2], [2], [1], [0, 0, 0, 2, 1, 1], [0], [0]>} : vector<4x8x8xbf16>, vector<4x8x8xbf16>, vector<4x8x8xf32> -> vector<4x8x8xf32>
    %175 = tpu.transpose %174, [2, 0, 1] : vector<4x8x8xf32> -> vector<8x4x8xf32>
    "tpu.trace_stop"() : () -> ()
    %176 = vector.shape_cast %175 : vector<8x4x8xf32> to vector<8x32xf32>
    %177 = vector.extract_strided_slice %143 {offsets = [1, 0, 0], sizes = [1, 8, 32], strides = [1, 1, 1]} : vector<2x8x32xf32> to vector<1x8x32xf32>
    %178 = vector.shape_cast %177 : vector<1x8x32xf32> to vector<8x32xf32>
    %179 = vector.shape_cast %178 : vector<8x32xf32> to vector<8x4x8xf32>
    %180 = tpu.transpose %179, [1, 0, 2] : vector<8x4x8xf32> -> vector<4x8x8xf32>
    %181 = vector.extract_strided_slice %145 {offsets = [1, 0, 0], sizes = [1, 8, 32], strides = [1, 1, 1]} : vector<2x8x32xf32> to vector<1x8x32xf32>
    %182 = vector.shape_cast %181 : vector<1x8x32xf32> to vector<8x32xf32>
    %183 = vector.shape_cast %182 : vector<8x32xf32> to vector<8x4x8xf32>
    %184 = tpu.transpose %183, [1, 0, 2] : vector<8x4x8xf32> -> vector<4x8x8xf32>
    %185 = vector.extract_strided_slice %146 {offsets = [1, 0, 0], sizes = [1, 8, 32], strides = [1, 1, 1]} : vector<2x8x32xf32> to vector<1x8x32xf32>
    %186 = vector.shape_cast %185 : vector<1x8x32xf32> to vector<8x32xf32>
    %187 = vector.shape_cast %186 : vector<8x32xf32> to vector<8x4x8xf32>
    %188 = tpu.transpose %187, [1, 0, 2] : vector<8x4x8xf32> -> vector<4x8x8xf32>
    %189 = arith.truncf %180 : vector<4x8x8xf32> to vector<4x8x8xbf16>
    %190 = arith.truncf %184 : vector<4x8x8xf32> to vector<4x8x8xbf16>
    "tpu.trace_start"() <{level = 10 : i32, message = "hqd,hkd->hqk"}> : () -> ()
    %cst_43 = arith.constant dense<0.000000e+00> : vector<4x8x8xf32>
    %191 = tpu.matmul %189, %190, %cst_43 {dimension_numbers = #tpu.dot_dimension_numbers<[2], [2], [1], [1], [0, 0, 0, 1, 1, 1], [0], [0]>} : vector<4x8x8xbf16>, vector<4x8x8xbf16>, vector<4x8x8xf32> -> vector<4x8x8xf32>
    "tpu.trace_stop"() : () -> ()
    %cst_44 = arith.constant dense<0xFF800000> : vector<4x8xf32>
    %192 = vector.multi_reduction <maximumf>, %191, %cst_44 [2] : vector<4x8x8xf32> to vector<4x8xf32>
    %193 = vector.shape_cast %192 : vector<4x8xf32> to vector<4x8x1xf32>
    %194 = vector.broadcast %193 : vector<4x8x1xf32> to vector<4x8x8xf32>
    %195 = arith.subf %191, %194 : vector<4x8x8xf32>
    %196 = math.exp %195 : vector<4x8x8xf32>
    %cst_45 = arith.constant dense<0.000000e+00> : vector<4x8xf32>
    %197 = vector.multi_reduction <add>, %196, %cst_45 [2] : vector<4x8x8xf32> to vector<4x8xf32>
    %198 = vector.shape_cast %197 : vector<4x8xf32> to vector<4x8x1xf32>
    %199 = tpu.reciprocal %198 {approx = true} : vector<4x8x1xf32> -> vector<4x8x1xf32>
    %200 = vector.broadcast %199 : vector<4x8x1xf32> to vector<4x8x8xf32>
    %201 = arith.mulf %196, %200 : vector<4x8x8xf32>
    %202 = arith.truncf %201 : vector<4x8x8xf32> to vector<4x8x8xbf16>
    %203 = arith.truncf %188 : vector<4x8x8xf32> to vector<4x8x8xbf16>
    "tpu.trace_start"() <{level = 10 : i32, message = "hqk,hkd->qhd"}> : () -> ()
    %cst_46 = arith.constant dense<0.000000e+00> : vector<4x8x8xf32>
    %204 = tpu.matmul %203, %202, %cst_46 {dimension_numbers = #tpu.dot_dimension_numbers<[1], [2], [2], [1], [0, 0, 0, 2, 1, 1], [0], [0]>} : vector<4x8x8xbf16>, vector<4x8x8xbf16>, vector<4x8x8xf32> -> vector<4x8x8xf32>
    %205 = tpu.transpose %204, [2, 0, 1] : vector<4x8x8xf32> -> vector<8x4x8xf32>
    "tpu.trace_stop"() : () -> ()
    %206 = vector.shape_cast %205 : vector<8x4x8xf32> to vector<8x32xf32>
    %207 = vector.shape_cast %176 : vector<8x32xf32> to vector<1x8x32xf32>
    %208 = vector.shape_cast %206 : vector<8x32xf32> to vector<1x8x32xf32>
    %209 = tpu.concatenate %207, %208 in 0 : vector<1x8x32xf32>, vector<1x8x32xf32> -> vector<2x8x32xf32>
    %210 = vector.shape_cast %209 : vector<2x8x32xf32> to vector<16x32xf32>
    %211 = arith.addf %210, %128 : vector<16x32xf32>
    %212 = vector.extract_strided_slice %8 {offsets = [6, 0], sizes = [1, 32], strides = [1, 1]} : vector<12x96xf32> to vector<1x32xf32>
    %213 = vector.extract_strided_slice %8 {offsets = [7, 0], sizes = [1, 32], strides = [1, 1]} : vector<12x96xf32> to vector<1x32xf32>
    %cst_47 = arith.constant dense<0.000000e+00> : vector<16xf32>
    %214 = vector.multi_reduction <add>, %211, %cst_47 [1] : vector<16x32xf32> to vector<16xf32>
    %215 = vector.shape_cast %214 : vector<16xf32> to vector<16x1xf32>
    %cst_48 = arith.constant 3.200000e+01 : f32
    %216 = vector.broadcast %cst_48 : f32 to vector<16x1xf32>
    %217 = arith.divf %215, %216 : vector<16x1xf32>
    %218 = vector.broadcast %217 : vector<16x1xf32> to vector<16x32xf32>
    %219 = arith.subf %211, %218 : vector<16x32xf32>
    %220 = arith.mulf %219, %219 : vector<16x32xf32>
    %cst_49 = arith.constant dense<0.000000e+00> : vector<16xf32>
    %221 = vector.multi_reduction <add>, %220, %cst_49 [1] : vector<16x32xf32> to vector<16xf32>
    %222 = vector.shape_cast %221 : vector<16xf32> to vector<16x1xf32>
    %cst_50 = arith.constant 3.200000e+01 : f32
    %223 = vector.broadcast %cst_50 : f32 to vector<16x1xf32>
    %224 = arith.divf %222, %223 : vector<16x1xf32>
    %225 = vector.broadcast %217 : vector<16x1xf32> to vector<16x32xf32>
    %226 = arith.subf %211, %225 : vector<16x32xf32>
    %cst_51 = arith.constant 9.99999974E-6 : f32
    %227 = vector.broadcast %cst_51 : f32 to vector<16x1xf32>
    %228 = arith.addf %224, %227 : vector<16x1xf32>
    %229 = math.rsqrt %228 : vector<16x1xf32>
    %230 = vector.broadcast %229 : vector<16x1xf32> to vector<16x32xf32>
    %231 = arith.mulf %226, %230 : vector<16x32xf32>
    %232 = vector.broadcast %212 : vector<1x32xf32> to vector<16x32xf32>
    %233 = arith.mulf %231, %232 : vector<16x32xf32>
    %234 = vector.broadcast %213 : vector<1x32xf32> to vector<16x32xf32>
    %235 = arith.addf %233, %234 : vector<16x32xf32>
    %c0_52 = arith.constant 0 : index
    %c0_53 = arith.constant 0 : index
    %c0_54 = arith.constant 0 : index
    %236 = vector.load %arg7[%c0_52, %c0_53, %c0_54] : memref<1x32x64xbf16, #tpu.memory_space<vmem>>, vector<1x32x64xbf16>
    %237 = vector.shape_cast %236 : vector<1x32x64xbf16> to vector<32x64xbf16>
    %238 = arith.truncf %235 : vector<16x32xf32> to vector<16x32xbf16>
    %cst_55 = arith.constant dense<0.000000e+00> : vector<16x64xf32>
    %239 = tpu.matmul %238, %237, %cst_55 {dimension_numbers = #tpu.dot_dimension_numbers<[1], [0], [0], [1], [0, 0, 1, 1], [], []>} : vector<16x32xbf16>, vector<32x64xbf16>, vector<16x64xf32> -> vector<16x64xf32>
    %240 = vector.extract_strided_slice %8 {offsets = [8, 0], sizes = [1, 64], strides = [1, 1]} : vector<12x96xf32> to vector<1x64xf32>
    %241 = vector.broadcast %240 : vector<1x64xf32> to vector<16x64xf32>
    %242 = arith.addf %239, %241 : vector<16x64xf32>
    %cst_56 = arith.constant 0.000000e+00 : f32
    %243 = vector.broadcast %cst_56 : f32 to vector<16x64xf32>
    %244 = arith.maximumf %242, %243 : vector<16x64xf32>
    %c0_57 = arith.constant 0 : index
    %c0_58 = arith.constant 0 : index
    %c0_59 = arith.constant 0 : index
    %245 = vector.load %arg8[%c0_57, %c0_58, %c0_59] : memref<1x64x32xbf16, #tpu.memory_space<vmem>>, vector<1x64x32xbf16>
    %246 = vector.shape_cast %245 : vector<1x64x32xbf16> to vector<64x32xbf16>
    %247 = arith.truncf %244 : vector<16x64xf32> to vector<16x64xbf16>
    %cst_60 = arith.constant dense<0.000000e+00> : vector<16x32xf32>
    %248 = tpu.matmul %247, %246, %cst_60 {dimension_numbers = #tpu.dot_dimension_numbers<[1], [0], [0], [1], [0, 0, 1, 1], [], []>} : vector<16x64xbf16>, vector<64x32xbf16>, vector<16x32xf32> -> vector<16x32xf32>
    %249 = vector.extract_strided_slice %8 {offsets = [9, 0], sizes = [1, 32], strides = [1, 1]} : vector<12x96xf32> to vector<1x32xf32>
    %250 = vector.broadcast %249 : vector<1x32xf32> to vector<16x32xf32>
    %251 = arith.addf %248, %250 : vector<16x32xf32>
    %252 = arith.addf %251, %235 : vector<16x32xf32>
    %253 = vector.extract_strided_slice %8 {offsets = [10, 0], sizes = [1, 32], strides = [1, 1]} : vector<12x96xf32> to vector<1x32xf32>
    %254 = vector.extract_strided_slice %8 {offsets = [11, 0], sizes = [1, 32], strides = [1, 1]} : vector<12x96xf32> to vector<1x32xf32>
    %cst_61 = arith.constant dense<0.000000e+00> : vector<16xf32>
    %255 = vector.multi_reduction <add>, %252, %cst_61 [1] : vector<16x32xf32> to vector<16xf32>
    %256 = vector.shape_cast %255 : vector<16xf32> to vector<16x1xf32>
    %cst_62 = arith.constant 3.200000e+01 : f32
    %257 = vector.broadcast %cst_62 : f32 to vector<16x1xf32>
    %258 = arith.divf %256, %257 : vector<16x1xf32>
    %259 = vector.broadcast %258 : vector<16x1xf32> to vector<16x32xf32>
    %260 = arith.subf %252, %259 : vector<16x32xf32>
    %261 = arith.mulf %260, %260 : vector<16x32xf32>
    %cst_63 = arith.constant dense<0.000000e+00> : vector<16xf32>
    %262 = vector.multi_reduction <add>, %261, %cst_63 [1] : vector<16x32xf32> to vector<16xf32>
    %263 = vector.shape_cast %262 : vector<16xf32> to vector<16x1xf32>
    %cst_64 = arith.constant 3.200000e+01 : f32
    %264 = vector.broadcast %cst_64 : f32 to vector<16x1xf32>
    %265 = arith.divf %263, %264 : vector<16x1xf32>
    %266 = vector.broadcast %258 : vector<16x1xf32> to vector<16x32xf32>
    %267 = arith.subf %252, %266 : vector<16x32xf32>
    %cst_65 = arith.constant 9.99999974E-6 : f32
    %268 = vector.broadcast %cst_65 : f32 to vector<16x1xf32>
    %269 = arith.addf %265, %268 : vector<16x1xf32>
    %270 = math.rsqrt %269 : vector<16x1xf32>
    %271 = vector.broadcast %270 : vector<16x1xf32> to vector<16x32xf32>
    %272 = arith.mulf %267, %271 : vector<16x32xf32>
    %273 = vector.broadcast %253 : vector<1x32xf32> to vector<16x32xf32>
    %274 = arith.mulf %272, %273 : vector<16x32xf32>
    %275 = vector.broadcast %254 : vector<1x32xf32> to vector<16x32xf32>
    %276 = arith.addf %274, %275 : vector<16x32xf32>
    %277 = vector.shape_cast %276 : vector<16x32xf32> to vector<2x8x32xf32>
    %c0_66 = arith.constant 0 : index
    %c0_67 = arith.constant 0 : index
    %c0_68 = arith.constant 0 : index
    %278 = vector.load %arg10[%c0_66, %c0_67, %c0_68] : memref<2x8x32xf32, #tpu.memory_space<vmem>>, vector<2x8x32xf32>
    tpu.vector_store %arg10[%c0_66, %c0_67, %c0_68], %277 {strides = array<i32>} : memref<2x8x32xf32, #tpu.memory_space<vmem>>, vector<2x8x32xf32>,
    return
  }
  func.func @transform_0(%arg0: i32) -> (i32, i32, i32) {
    %c0_i32 = arith.constant 0 : i32
    %c0_i32_0 = arith.constant 0 : i32
    %c0_i32_1 = arith.constant 0 : i32
    %c0_i32_2 = arith.constant 0 : i32
    return %c0_i32, %c0_i32_0, %c0_i32_1 : i32, i32, i32
  }
  func.func @transform_1(%arg0: i32) -> (i32, i32, i32) {
    %c0_i32 = arith.constant 0 : i32
    %c0_i32_0 = arith.constant 0 : i32
    %c0_i32_1 = arith.constant 0 : i32
    %c0_i32_2 = arith.constant 0 : i32
    return %c0_i32, %c0_i32_0, %c0_i32_1 : i32, i32, i32
  }
  func.func @transform_2(%arg0: i32) -> (i32, i32, i32) {
    %c0_i32 = arith.constant 0 : i32
    %c0_i32_0 = arith.constant 0 : i32
    %c0_i32_1 = arith.constant 0 : i32
    return %arg0, %c0_i32, %c0_i32_0 : i32, i32, i32
  }
  func.func @transform_3(%arg0: i32) -> (i32, i32, i32) {
    %c0_i32 = arith.constant 0 : i32
    %c0_i32_0 = arith.constant 0 : i32
    %c0_i32_1 = arith.constant 0 : i32
    return %arg0, %c0_i32, %c0_i32_0 : i32, i32, i32
  }
  func.func @transform_4(%arg0: i32) -> (i32, i32, i32) {
    %c0_i32 = arith.constant 0 : i32
    %c0_i32_0 = arith.constant 0 : i32
    %c0_i32_1 = arith.constant 0 : i32
    return %arg0, %c0_i32, %c0_i32_0 : i32, i32, i32
  }
  func.func @transform_5(%arg0: i32) -> (i32, i32, i32) {
    %c0_i32 = arith.constant 0 : i32
    %c0_i32_0 = arith.constant 0 : i32
    %c0_i32_1 = arith.constant 0 : i32
    return %arg0, %c0_i32, %c0_i32_0 : i32, i32, i32
  }
  func.func @transform_6(%arg0: i32) -> (i32, i32, i32) {
    %c0_i32 = arith.constant 0 : i32
    %c0_i32_0 = arith.constant 0 : i32
    %c0_i32_1 = arith.constant 0 : i32
    return %arg0, %c0_i32, %c0_i32_0 : i32, i32, i32
  }
  func.func @transform_7(%arg0: i32) -> (i32, i32, i32) {
    %c0_i32 = arith.constant 0 : i32
    %c0_i32_0 = arith.constant 0 : i32
    %c0_i32_1 = arith.constant 0 : i32
    return %arg0, %c0_i32, %c0_i32_0 : i32, i32, i32
  }
  func.func @transform_8(%arg0: i32) -> (i32, i32, i32) {
    %c0_i32 = arith.constant 0 : i32
    %c0_i32_0 = arith.constant 0 : i32
    %c0_i32_1 = arith.constant 0 : i32
    return %arg0, %c0_i32, %c0_i32_0 : i32, i32, i32
  }
  func.func @transform_9(%arg0: i32) -> (i32, i32, i32) {
    %c0_i32 = arith.constant 0 : i32
    %c0_i32_0 = arith.constant 0 : i32
    %c0_i32_1 = arith.constant 0 : i32
    %c0_i32_2 = arith.constant 0 : i32
    return %c0_i32, %c0_i32_0, %c0_i32_1 : i32, i32, i32
  }
}

</mosaic_0001>

<llo_original>
// kernel: tpu_custom_call.1
$region0: #{tpu_custom_call.1}
  #allocation0 [shape = 'u32[]', space=smem, size = 0x4, offset = 0x4, fixed_abs, tag = 'smem constant byte address 0x4 - core index']
  #allocation1 [shape = 'u32[72,128]{1,0:T(1,128)}', space=vmem, size = 0x9000, scoped, tag = 'internal scratch']
  %s0 = inlined_call_operand.vmem [shape: f32[2,8,32], index: 0, kind: input, shape index: {}]
  %s1 = inlined_call_operand.hbm [shape: f32[2,8,32], index: 1, kind: input, shape index: {}]
  %s2 = inlined_call_operand.vmem [shape: bf16[2,32,96], index: 2, kind: input, shape index: {}]
  %s3 = inlined_call_operand.vmem [shape: bf16[2,32,32], index: 3, kind: input, shape index: {}]
  %s4 = inlined_call_operand.vmem [shape: bf16[2,32,32], index: 4, kind: input, shape index: {}]
  %s5 = inlined_call_operand.hbm [shape: bf16[2,32,64], index: 5, kind: input, shape index: {}]
  %s6 = inlined_call_operand.hbm [shape: bf16[2,32,64], index: 6, kind: input, shape index: {}]
  %s7 = inlined_call_operand.vmem [shape: bf16[2,64,32], index: 7, kind: input, shape index: {}]
  %s8 = inlined_call_operand.vmem [shape: f32[2,12,96], index: 8, kind: input, shape index: {}]
  %s9 = inlined_call_operand.hbm [shape: f32[2,8,32], index: 9, kind: output, shape index: {}]
  %s10 = sld [smem:[#allocation0]]
  $region85: #{tpu_custom_call.1} parent=0
    _
  %s12 = ssub.s32 1, %s10
  %s13 = scalar_select 0, %s12, %s10
  $region1: #{tpu_custom_call.1} parent=0
    #allocation2 [shape = 'u8[8192]{0}', space=vmem, size = 0x2000, scoped, tag = 'input window, operand 1, single buffered']
    #allocation3 [shape = 's32[2]{0}', space=sflag, size = 0x8, scoped, tag = 'scoped memory for tpu_custom_call.1']
    #allocation4 [shape = 's32[2]{0}', space=sflag, size = 0x8, scoped, tag = 'scoped memory for tpu_custom_call.1']
    #allocation5 [shape = 'u8[16384]{0}', space=vmem, size = 0x4000, scoped, tag = 'input window, operand 5']
    #allocation6 [shape = 's32[2]{0}', space=sflag, size = 0x8, scoped, tag = 'scoped memory for tpu_custom_call.1']
    #allocation7 [shape = 'u8[16384]{0}', space=vmem, size = 0x4000, scoped, tag = 'input window, operand 6']
    #allocation8 [shape = 'u8[8192]{0}', space=vmem, size = 0x2000, scoped, tag = 'output window, operand 0, single buffered']
    %14 = vsyncpa [#allocation3], 0
    %15 = vsyncpa [#allocation6], 0
    %s16 = scalar_lea.sflag [#allocation6], 1
    %17 = vsyncpa %s16, 0
    %18 = vsyncpa [#allocation4], 0
    loop: start=0, step=1, limit=4
    $region2: #{tpu_custom_call.1} parent=1 // loop_pre_header
      _
    $region3: #{tpu_custom_call.1} parent=1 // loop_header
      %s20 = sphi 0, %s24
      %p21 = scmp.ge.s32.totalorder %s20, 4
      %s28 = sphi 0, %s28
      %s30 = sphi 0, %s28
      %s31 = sphi 0, %s30
      %s45 = sphi 0, %s31
      %s49 = sphi 0, %s49
      %s51 = sphi 0, %s49
      %s52 = sphi 0, %s51
      %s66 = sphi 0, %s52
      %s72 = sphi 0, %s74
      %s75 = sphi 0, %s72
      %s76 = sphi 0, %s75
      %s92 = sphi 0, %s76
      %s98 = sphi 0, %s100
      %s101 = sphi 0, %s98
      %s102 = sphi 0, %s101
      %s118 = sphi 0, %s102
      %s124 = sphi 0, %s126
      %s127 = sphi 0, %s124
      %s128 = sphi 0, %s127
      %s144 = sphi 0, %s128
      %s150 = sphi 0, %s152
      %s153 = sphi 0, %s150
      %s154 = sphi 0, %s153
      %s170 = sphi 0, %s154
      %s176 = sphi 0, %s178
      %s179 = sphi 0, %s176
      %s180 = sphi 0, %s179
      %s196 = sphi 0, %s180
      %s202 = sphi 0, %s204
      %s205 = sphi 0, %s202
      %s206 = sphi 0, %s205
      %s222 = sphi 0, %s206
      %s228 = sphi 0, %s230
      %s231 = sphi 0, %s228
      %s232 = sphi 0, %s231
      %s248 = sphi 0, %s232
      %s252 = sphi 0, %s252
      %s254 = sphi 0, %s252
      %s255 = sphi 0, %s254
      %s269 = sphi 0, %s255
    $region4: #{tpu_custom_call.1} parent=1 // loop_header_branch
      %23 = sbr.rel (%p21) target = $region8
    $region5: #{tpu_custom_call.1} parent=1 // loop_body
      %s25 = ssub.s32 %s20, 1
      %s26 = ssub.s32 %s20, 2
      %s27 = sadd.s32 %s20, 1
      %s29 = sadd.s32 %s28, 1
      %p32 = scmp.eq.s32.totalorder %s20, 1
      %p33 = scmp.ne.s32.totalorder %s28, %s30
      %p34 = scmp.eq.s32.totalorder %s20, 0
      %p35 = por %p33, %p34
      %p36 = scmp.ne.s32.totalorder %s28, %s30
      %p37 = scmp.eq.s32.totalorder %s25, 1
      %p38 = por %p36, %p37
      %p39 = scmp.ne.s32.totalorder %s30, %s31
      %p40 = scmp.eq.s32.totalorder %s25, 0
      %p41 = por %p39, %p40
      %p42 = scmp.ne.s32.totalorder %s30, %s31
      %p43 = scmp.eq.s32.totalorder %s26, 1
      %p44 = por %p42, %p43
      %p46 = scmp.ne.s32.totalorder %s31, %s45
      %p47 = scmp.eq.s32.totalorder %s26, 0
      %p48 = por %p46, %p47
      %s50 = sadd.s32 %s49, 1
      %p53 = scmp.eq.s32.totalorder %s20, 1
      %p54 = scmp.ne.s32.totalorder %s49, %s51
      %p55 = scmp.eq.s32.totalorder %s20, 0
      %p56 = por %p54, %p55
      %p57 = scmp.ne.s32.totalorder %s49, %s51
      %p58 = scmp.eq.s32.totalorder %s25, 1
      %p59 = por %p57, %p58
      %p60 = scmp.ne.s32.totalorder %s51, %s52
      %p61 = scmp.eq.s32.totalorder %s25, 0
      %p62 = por %p60, %p61
      %p63 = scmp.ne.s32.totalorder %s51, %s52
      %p64 = scmp.eq.s32.totalorder %s26, 1
      %p65 = por %p63, %p64
      %p67 = scmp.ne.s32.totalorder %s52, %s66
      %p68 = scmp.eq.s32.totalorder %s26, 0
      %p69 = por %p67, %p68
      %s70 = ssub.s32 %s20, %s27
      %p71 = scmp.eq.s32.totalorder %s70, 0
      %s73 = sadd.s32 %s72, 1
      %s74 = scalar_select %p71, %s72, %s73
      %p77 = pneg %p71
      %p78 = scmp.eq.s32.totalorder %s20, 1
      %p79 = por %p77, %p78
      %p80 = scmp.ne.s32.totalorder %s72, %s75
      %p81 = scmp.eq.s32.totalorder %s20, 0
      %p82 = por %p80, %p81
      %p83 = scmp.ne.s32.totalorder %s72, %s75
      %p84 = scmp.eq.s32.totalorder %s25, 1
      %p85 = por %p83, %p84
      %p86 = scmp.ne.s32.totalorder %s75, %s76
      %p87 = scmp.eq.s32.totalorder %s25, 0
      %p88 = por %p86, %p87
      %p89 = scmp.ne.s32.totalorder %s75, %s76
      %p90 = scmp.eq.s32.totalorder %s26, 1
      %p91 = por %p89, %p90
      %p93 = scmp.ne.s32.totalorder %s76, %s92
      %p94 = scmp.eq.s32.totalorder %s26, 0
      %p95 = por %p93, %p94
      %s96 = ssub.s32 %s20, %s27
      %p97 = scmp.eq.s32.totalorder %s96, 0
      %s99 = sadd.s32 %s98, 1
      %s100 = scalar_select %p97, %s98, %s99
      %p103 = pneg %p97
      %p104 = scmp.eq.s32.totalorder %s20, 1
      %p105 = por %p103, %p104
      %p106 = scmp.ne.s32.totalorder %s98, %s101
      %p107 = scmp.eq.s32.totalorder %s20, 0
      %p108 = por %p106, %p107
      %p109 = scmp.ne.s32.totalorder %s98, %s101
      %p110 = scmp.eq.s32.totalorder %s25, 1
      %p111 = por %p109, %p110
      %p112 = scmp.ne.s32.totalorder %s101, %s102
      %p113 = scmp.eq.s32.totalorder %s25, 0
      %p114 = por %p112, %p113
      %p115 = scmp.ne.s32.totalorder %s101, %s102
      %p116 = scmp.eq.s32.totalorder %s26, 1
      %p117 = por %p115, %p116
      %p119 = scmp.ne.s32.totalorder %s102, %s118
      %p120 = scmp.eq.s32.totalorder %s26, 0
      %p121 = por %p119, %p120
      %s122 = ssub.s32 %s20, %s27
      %p123 = scmp.eq.s32.totalorder %s122, 0
      %s125 = sadd.s32 %s124, 1
      %s126 = scalar_select %p123, %s124, %s125
      %p129 = pneg %p123
      %p130 = scmp.eq.s32.totalorder %s20, 1
      %p131 = por %p129, %p130
      %p132 = scmp.ne.s32.totalorder %s124, %s127
      %p133 = scmp.eq.s32.totalorder %s20, 0
      %p134 = por %p132, %p133
      %p135 = scmp.ne.s32.totalorder %s124, %s127
      %p136 = scmp.eq.s32.totalorder %s25, 1
      %p137 = por %p135, %p136
      %p138 = scmp.ne.s32.totalorder %s127, %s128
      %p139 = scmp.eq.s32.totalorder %s25, 0
      %p140 = por %p138, %p139
      %p141 = scmp.ne.s32.totalorder %s127, %s128
      %p142 = scmp.eq.s32.totalorder %s26, 1
      %p143 = por %p141, %p142
      %p145 = scmp.ne.s32.totalorder %s128, %s144
      %p146 = scmp.eq.s32.totalorder %s26, 0
      %p147 = por %p145, %p146
      %s148 = ssub.s32 %s20, %s27
      %p149 = scmp.eq.s32.totalorder %s148, 0
      %s151 = sadd.s32 %s150, 1
      %s152 = scalar_select %p149, %s150, %s151
      %p155 = pneg %p149
      %p156 = scmp.eq.s32.totalorder %s20, 1
      %p157 = por %p155, %p156
      %p158 = scmp.ne.s32.totalorder %s150, %s153
      %p159 = scmp.eq.s32.totalorder %s20, 0
      %p160 = por %p158, %p159
      %p161 = scmp.ne.s32.totalorder %s150, %s153
      %p162 = scmp.eq.s32.totalorder %s25, 1
      %p163 = por %p161, %p162
      %p164 = scmp.ne.s32.totalorder %s153, %s154
      %p165 = scmp.eq.s32.totalorder %s25, 0
      %p166 = por %p164, %p165
      %p167 = scmp.ne.s32.totalorder %s153, %s154
      %p168 = scmp.eq.s32.totalorder %s26, 1
      %p169 = por %p167, %p168
      %p171 = scmp.ne.s32.totalorder %s154, %s170
      %p172 = scmp.eq.s32.totalorder %s26, 0
      %p173 = por %p171, %p172
      %s174 = ssub.s32 %s20, %s27
      %p175 = scmp.eq.s32.totalorder %s174, 0
      %s177 = sadd.s32 %s176, 1
      %s178 = scalar_select %p175, %s176, %s177
      %p181 = pneg %p175
      %p182 = scmp.eq.s32.totalorder %s20, 1
      %p183 = por %p181, %p182
      %p184 = scmp.ne.s32.totalorder %s176, %s179
      %p185 = scmp.eq.s32.totalorder %s20, 0
      %p186 = por %p184, %p185
      %p187 = scmp.ne.s32.totalorder %s176, %s179
      %p188 = scmp.eq.s32.totalorder %s25, 1
      %p189 = por %p187, %p188
      %p190 = scmp.ne.s32.totalorder %s179, %s180
      %p191 = scmp.eq.s32.totalorder %s25, 0
      %p192 = por %p190, %p191
      %p193 = scmp.ne.s32.totalorder %s179, %s180
      %p194 = scmp.eq.s32.totalorder %s26, 1
      %p195 = por %p193, %p194
      %p197 = scmp.ne.s32.totalorder %s180, %s196
      %p198 = scmp.eq.s32.totalorder %s26, 0
      %p199 = por %p197, %p198
      %s200 = ssub.s32 %s20, %s27
      %p201 = scmp.eq.s32.totalorder %s200, 0
      %s203 = sadd.s32 %s202, 1
      %s204 = scalar_select %p201, %s202, %s203
      %p207 = pneg %p201
      %p208 = scmp.eq.s32.totalorder %s20, 1
      %p209 = por %p207, %p208
      %p210 = scmp.ne.s32.totalorder %s202, %s205
      %p211 = scmp.eq.s32.totalorder %s20, 0
      %p212 = por %p210, %p211
      %p213 = scmp.ne.s32.totalorder %s202, %s205
      %p214 = scmp.eq.s32.totalorder %s25, 1
      %p215 = por %p213, %p214
      %p216 = scmp.ne.s32.totalorder %s205, %s206
      %p217 = scmp.eq.s32.totalorder %s25, 0
      %p218 = por %p216, %p217
      %p219 = scmp.ne.s32.totalorder %s205, %s206
      %p220 = scmp.eq.s32.totalorder %s26, 1
      %p221 = por %p219, %p220
      %p223 = scmp.ne.s32.totalorder %s206, %s222
      %p224 = scmp.eq.s32.totalorder %s26, 0
      %p225 = por %p223, %p224
      %s226 = ssub.s32 %s20, %s27
      %p227 = scmp.eq.s32.totalorder %s226, 0
      %s229 = sadd.s32 %s228, 1
      %s230 = scalar_select %p227, %s228, %s229
      %p233 = pneg %p227
      %p234 = scmp.eq.s32.totalorder %s20, 1
      %p235 = por %p233, %p234
      %p236 = scmp.ne.s32.totalorder %s228, %s231
      %p237 = scmp.eq.s32.totalorder %s20, 0
      %p238 = por %p236, %p237
      %p239 = scmp.ne.s32.totalorder %s228, %s231
      %p240 = scmp.eq.s32.totalorder %s25, 1
      %p241 = por %p239, %p240
      %p242 = scmp.ne.s32.totalorder %s231, %s232
      %p243 = scmp.eq.s32.totalorder %s25, 0
      %p244 = por %p242, %p243
      %p245 = scmp.ne.s32.totalorder %s231, %s232
      %p246 = scmp.eq.s32.totalorder %s26, 1
      %p247 = por %p245, %p246
      %p249 = scmp.ne.s32.totalorder %s232, %s248
      %p250 = scmp.eq.s32.totalorder %s26, 0
      %p251 = por %p249, %p250
      %s253 = sadd.s32 %s252, 1
      %p256 = scmp.eq.s32.totalorder %s20, 1
      %p257 = scmp.ne.s32.totalorder %s252, %s254
      %p258 = scmp.eq.s32.totalorder %s20, 0
      %p259 = por %p257, %p258
      %p260 = scmp.ne.s32.totalorder %s252, %s254
      %p261 = scmp.eq.s32.totalorder %s25, 1
      %p262 = por %p260, %p261
      %p263 = scmp.ne.s32.totalorder %s254, %s255
      %p264 = scmp.eq.s32.totalorder %s25, 0
      %p265 = por %p263, %p264
      %p266 = scmp.ne.s32.totalorder %s254, %s255
      %p267 = scmp.eq.s32.totalorder %s26, 1
      %p268 = por %p266, %p267
      %p270 = scmp.ne.s32.totalorder %s255, %s269
      %p271 = scmp.eq.s32.totalorder %s26, 0
      %p272 = por %p270, %p271
      %p273 = scmp.le.s32.totalorder 1, %s20
      %p274 = scmp.lt.s32.totalorder %s20, 3
      %p275 = pnand %p273, %p274
      %p276 = pneg %p275
      // Predicated region
      $region9: #{tpu_custom_call.1} parent=5 // pred_check
        _
      $region10: #{tpu_custom_call.1} parent=5 // pred_check_branch
        %278 = sbr.rel (%p275) target = $region12
      $region11: #{tpu_custom_call.1} parent=5 // pred_region
        %s279 = ssub.s32 %s20, 1
        // Predicated region
        $region13: #{tpu_custom_call.1} parent=11 // pred_check
          %p280 = pneg %p41
        $region14: #{tpu_custom_call.1} parent=11 // pred_check_branch
          %282 = sbr.rel (%p280) target = $region16
        $region15: #{tpu_custom_call.1} parent=11 // pred_region
          _
        $region16: #{tpu_custom_call.1} parent=11 // pred_fallthru
          _
        // Predicated region
        $region17: #{tpu_custom_call.1} parent=11 // pred_check
          %p283 = pneg %p62
        $region18: #{tpu_custom_call.1} parent=11 // pred_check_branch
          %285 = sbr.rel (%p283) target = $region20
        $region19: #{tpu_custom_call.1} parent=11 // pred_region
          %287 = vsyncadd [#allocation3], 0
          %s288 = sshll.u32 %s1, 4
          %s289 = int_to_ptr.hbm [resolvable:$true] %s288
          %s290 = sshll.u32 [#allocation2], 4
          %s291 = int_to_ptr.vmem [resolvable:$true] %s290
          %296 = dma.hbm_to_vmem [thread:$0]  %s289, 256, %s291, [#allocation3], 128, 128, 8
        $region20: #{tpu_custom_call.1} parent=11 // pred_fallthru
          _
      $region12: #{tpu_custom_call.1} parent=5 // pred_fallthru
        _
      %p297 = scmp.lt.s32.totalorder %s20, 2
      // Predicated region
      $region21: #{tpu_custom_call.1} parent=5 // pred_check
        %p298 = pneg %p297
      $region22: #{tpu_custom_call.1} parent=5 // pred_check_branch
        %300 = sbr.rel (%p298) target = $region24
      $region23: #{tpu_custom_call.1} parent=5 // pred_region
        // Predicated region
        $region25: #{tpu_custom_call.1} parent=23 // pred_check
          %p301 = pneg %p82
        $region26: #{tpu_custom_call.1} parent=23 // pred_check_branch
          %303 = sbr.rel (%p301) target = $region28
        $region27: #{tpu_custom_call.1} parent=23 // pred_region
          %p304 = scmp.lt.s32.totalorder %s20, 1
          %s305 = scalar_select %p304, %s20, 1
          %s306 = smul.addr %s305, 4
          %s307 = smul.addr %s306, 4
          %s308 = scalar_lea.vmem %s2, %s307
        $region28: #{tpu_custom_call.1} parent=23 // pred_fallthru
          _
        // Predicated region
        $region29: #{tpu_custom_call.1} parent=23 // pred_check
          %p309 = pneg %p108
        $region30: #{tpu_custom_call.1} parent=23 // pred_check_branch
          %311 = sbr.rel (%p309) target = $region32
        $region31: #{tpu_custom_call.1} parent=23 // pred_region
          %p312 = scmp.lt.s32.totalorder %s20, 1
          %s313 = scalar_select %p312, %s20, 1
          %s314 = smul.addr %s313, 4
          %s315 = smul.addr %s314, 4
          %s316 = scalar_lea.vmem %s3, %s315
        $region32: #{tpu_custom_call.1} parent=23 // pred_fallthru
          _
        // Predicated region
        $region33: #{tpu_custom_call.1} parent=23 // pred_check
          %p317 = pneg %p134
        $region34: #{tpu_custom_call.1} parent=23 // pred_check_branch
          %319 = sbr.rel (%p317) target = $region36
        $region35: #{tpu_custom_call.1} parent=23 // pred_region
          %p320 = scmp.lt.s32.totalorder %s20, 1
          %s321 = scalar_select %p320, %s20, 1
          %s322 = smul.addr %s321, 4
          %s323 = smul.addr %s322, 4
          %s324 = scalar_lea.vmem %s4, %s323
        $region36: #{tpu_custom_call.1} parent=23 // pred_fallthru
          _
        // Predicated region
        $region37: #{tpu_custom_call.1} parent=23 // pred_check
          %p325 = pneg %p160
        $region38: #{tpu_custom_call.1} parent=23 // pred_check_branch
          %327 = sbr.rel (%p325) target = $region40
        $region39: #{tpu_custom_call.1} parent=23 // pred_region
          %s328 = sand.u32 %s20, 1
          %s329 = scalar_lea.sflag [#allocation6], %s328
          %s330 = sand.u32 %s150, 1
          %s331 = smul.addr %s330, 16
          %s332 = scalar_lea.vmem [#allocation5], %s331
          %334 = vsyncadd %s329, 0
          %s335 = smul.addr %s20, 4
          %s336 = smul.addr %s335, 4
          %s337 = scalar_lea.hbm %s5, %s336
          %s338 = sshll.u32 %s337, 4
          %s339 = int_to_ptr.hbm [resolvable:$true] %s338
          %s340 = sshll.u32 %s332, 4
          %s341 = int_to_ptr.vmem [resolvable:$true] %s340
          %346 = dma.hbm_to_vmem [thread:$0]  %s339, 256, %s341, %s329, 64, 64, 4
        $region40: #{tpu_custom_call.1} parent=23 // pred_fallthru
          _
        // Predicated region
        $region41: #{tpu_custom_call.1} parent=23 // pred_check
          %p347 = pneg %p186
        $region42: #{tpu_custom_call.1} parent=23 // pred_check_branch
          %349 = sbr.rel (%p347) target = $region44
        $region43: #{tpu_custom_call.1} parent=23 // pred_region
          %s350 = sand.u32 %s20, 1
          %s351 = scalar_lea.sflag [#allocation6], %s350
          %s352 = sand.u32 %s176, 1
          %s353 = smul.addr %s352, 16
          %s354 = scalar_lea.vmem [#allocation7], %s353
          %356 = vsyncadd %s351, 0
          %s357 = smul.addr %s20, 4
          %s358 = smul.addr %s357, 4
          %s359 = scalar_lea.hbm %s6, %s358
          %s360 = sshll.u32 %s359, 4
          %s361 = int_to_ptr.hbm [resolvable:$true] %s360
          %s362 = sshll.u32 %s354, 4
          %s363 = int_to_ptr.vmem [resolvable:$true] %s362
          %368 = dma.hbm_to_vmem [thread:$0]  %s361, 256, %s363, %s351, 64, 64, 4
        $region44: #{tpu_custom_call.1} parent=23 // pred_fallthru
          _
        // Predicated region
        $region45: #{tpu_custom_call.1} parent=23 // pred_check
          %p369 = pneg %p212
        $region46: #{tpu_custom_call.1} parent=23 // pred_check_branch
          %371 = sbr.rel (%p369) target = $region48
        $region47: #{tpu_custom_call.1} parent=23 // pred_region
          %p372 = scmp.lt.s32.totalorder %s20, 1
          %s373 = scalar_select %p372, %s20, 1
          %s374 = smul.addr %s373, 8
          %s375 = smul.addr %s374, 4
          %s376 = scalar_lea.vmem %s7, %s375
        $region48: #{tpu_custom_call.1} parent=23 // pred_fallthru
          _
        // Predicated region
        $region49: #{tpu_custom_call.1} parent=23 // pred_check
          %p377 = pneg %p238
        $region50: #{tpu_custom_call.1} parent=23 // pred_check_branch
          %379 = sbr.rel (%p377) target = $region52
        $region51: #{tpu_custom_call.1} parent=23 // pred_region
          %p380 = scmp.lt.s32.totalorder %s20, 1
          %s381 = scalar_select %p380, %s20, 1
          %s382 = smul.addr %s381, 2
          %s383 = smul.addr %s382, 8
          %s384 = scalar_lea.vmem %s8, %s383
        $region52: #{tpu_custom_call.1} parent=23 // pred_fallthru
          _
      $region24: #{tpu_custom_call.1} parent=5 // pred_fallthru
        _
      %p385 = scmp.le.s32.totalorder 1, %s20
      %p386 = scmp.lt.s32.totalorder %s20, 3
      %p387 = pnand %p385, %p386
      %p388 = pneg %p387
      // Predicated region
      $region53: #{tpu_custom_call.1} parent=5 // pred_check
        _
      $region54: #{tpu_custom_call.1} parent=5 // pred_check_branch
        %390 = sbr.rel (%p387) target = $region56
      $region55: #{tpu_custom_call.1} parent=5 // pred_region
        %s391 = ssub.s32 %s20, 1
        // Predicated region
        $region57: #{tpu_custom_call.1} parent=55 // pred_check
          %p392 = pneg %p62
        $region58: #{tpu_custom_call.1} parent=55 // pred_check_branch
          %394 = sbr.rel (%p392) target = $region60
        $region59: #{tpu_custom_call.1} parent=55 // pred_region
          %396 = dma.done [#allocation3], 256
        $region60: #{tpu_custom_call.1} parent=55 // pred_fallthru
          _
        %s397 = sand.u32 %s25, 1
        %s398 = scalar_lea.sflag [#allocation6], %s397
        %s399 = sand.u32 %s153, 1
        %s400 = smul.addr %s399, 16
        %s401 = scalar_lea.vmem [#allocation5], %s400
        // Predicated region
        $region61: #{tpu_custom_call.1} parent=55 // pred_check
          %p402 = pneg %p166
        $region62: #{tpu_custom_call.1} parent=55 // pred_check_branch
          %404 = sbr.rel (%p402) target = $region64
        $region63: #{tpu_custom_call.1} parent=55 // pred_region
          %406 = dma.done %s398, 256
        $region64: #{tpu_custom_call.1} parent=55 // pred_fallthru
          _
        %s407 = sand.u32 %s25, 1
        %s408 = scalar_lea.sflag [#allocation6], %s407
        %s409 = sand.u32 %s179, 1
        %s410 = smul.addr %s409, 16
        %s411 = scalar_lea.vmem [#allocation7], %s410
        // Predicated region
        $region65: #{tpu_custom_call.1} parent=55 // pred_check
          %p412 = pneg %p192
        $region66: #{tpu_custom_call.1} parent=55 // pred_check_branch
          %414 = sbr.rel (%p412) target = $region68
        $region67: #{tpu_custom_call.1} parent=55 // pred_region
          %416 = dma.done %s408, 256
        $region68: #{tpu_custom_call.1} parent=55 // pred_fallthru
          _
        %p417 = pneg %p41
        %p418 = pneg %p38
        %p419 = pneg %p62
        %p420 = pneg %p59
        %p421 = scmp.lt.s32.totalorder %s25, 1
        %s422 = scalar_select %p421, %s25, 1
        %s423 = smul.addr %s422, 4
        %s424 = smul.addr %s423, 4
        %s425 = scalar_lea.vmem %s2, %s424
        %p426 = pneg %p88
        %p427 = pneg %p85
        %p428 = scmp.lt.s32.totalorder %s25, 1
        %s429 = scalar_select %p428, %s25, 1
        %s430 = smul.addr %s429, 4
        %s431 = smul.addr %s430, 4
        %s432 = scalar_lea.vmem %s3, %s431
        %p433 = pneg %p114
        %p434 = pneg %p111
        %p435 = scmp.lt.s32.totalorder %s25, 1
        %s436 = scalar_select %p435, %s25, 1
        %s437 = smul.addr %s436, 4
        %s438 = smul.addr %s437, 4
        %s439 = scalar_lea.vmem %s4, %s438
        %p440 = pneg %p140
        %p441 = pneg %p137
        %s442 = sand.u32 %s25, 1
        %s443 = scalar_lea.sflag [#allocation6], %s442
        %s444 = sand.u32 %s153, 1
        %s445 = smul.addr %s444, 16
        %s446 = scalar_lea.vmem [#allocation5], %s445
        %p447 = pneg %p166
        %p448 = pneg %p163
        %s449 = sand.u32 %s25, 1
        %s450 = scalar_lea.sflag [#allocation6], %s449
        %s451 = sand.u32 %s179, 1
        %s452 = smul.addr %s451, 16
        %s453 = scalar_lea.vmem [#allocation7], %s452
        %p454 = pneg %p192
        %p455 = pneg %p189
        %p456 = scmp.lt.s32.totalorder %s25, 1
        %s457 = scalar_select %p456, %s25, 1
        %s458 = smul.addr %s457, 8
        %s459 = smul.addr %s458, 4
        %s460 = scalar_lea.vmem %s7, %s459
        %p461 = pneg %p218
        %p462 = pneg %p215
        %p463 = scmp.lt.s32.totalorder %s25, 1
        %s464 = scalar_select %p463, %s25, 1
        %s465 = smul.addr %s464, 2
        %s466 = smul.addr %s465, 8
        %s467 = scalar_lea.vmem %s8, %s466
        %p468 = pneg %p244
        %p469 = pneg %p241
        %p470 = pneg %p265
        %p471 = pneg %p262
        %p472 = scmp.lt.s32.totalorder %s25, 1
        %s473 = scalar_select %p472, %s25, 1
        %s474 = smul.addr %s473, 4
        %s475 = smul.addr %s474, 4
        %s476 = scalar_lea.vmem %s2, %s475
        %p477 = scmp.lt.s32.totalorder %s25, 1
        %s478 = scalar_select %p477, %s25, 1
        %s479 = smul.addr %s478, 4
        %s480 = smul.addr %s479, 4
        %s481 = scalar_lea.vmem %s3, %s480
        %p482 = scmp.lt.s32.totalorder %s25, 1
        %s483 = scalar_select %p482, %s25, 1
        %s484 = smul.addr %s483, 4
        %s485 = smul.addr %s484, 4
        %s486 = scalar_lea.vmem %s4, %s485
        %p487 = scmp.lt.s32.totalorder %s25, 1
        %s488 = scalar_select %p487, %s25, 1
        %s489 = smul.addr %s488, 8
        %s490 = smul.addr %s489, 4
        %s491 = scalar_lea.vmem %s7, %s490
        %p492 = scmp.lt.s32.totalorder %s25, 1
        %s493 = scalar_select %p492, %s25, 1
        %s494 = smul.addr %s493, 2
        %s495 = smul.addr %s494, 8
        %s496 = scalar_lea.vmem %s8, %s495
        %p498 = scmp.eq.s32.totalorder %s25, 0
        // Predicated region
        $region69: #{tpu_custom_call.1} parent=55 // pred_check
          %p499 = pneg %p498
        $region70: #{tpu_custom_call.1} parent=55 // pred_check_branch
          %501 = sbr.rel (%p499) target = $region72
        $region71: #{tpu_custom_call.1} parent=55 // pred_region
          %v502 = vld [vmem:[#allocation2] sm:$0xff]
          %v503 = vld [vmem:[#allocation2 + $0x8] sm:$0xff]
          %vm504 = vcmask 261120
          %505 = vst.msk [vmem:[#allocation8] sm:$0xff] %vm504, %v502
          %506 = vst.msk [vmem:[#allocation8 + $0x8] sm:$0xff] %vm504, %v503
        $region72: #{tpu_custom_call.1} parent=55 // pred_fallthru
          _
        %v507 = vld [vmem:[#allocation8] sm:$0xff]
        %v508 = vld [vmem:[#allocation8 + $0x8] sm:$0xff]
        %v509 = vld [vmem:[%s0] sm:$0xff]
        %v510 = vld [vmem:[%s0 + $0x8] sm:$0xff]
        %v511 = vld [vmem:[%s496] sm:$0xff]
        %v512 = vld [vmem:[%s496 + $0x8] sm:$0xf]
        %v513 = vld [vmem:[%s476] sm:$0xf]
        %v514 = vld [vmem:[%s476 + $0x4] sm:$0xf]
        %v515 = vld [vmem:[%s476 + $0x8] sm:$0xf]
        %v516 = vld [vmem:[%s476 + $0xc] sm:$0xf]
        %v517 = vpack.c.bf16 %v508, %v507
        %v518 = vperm.slane %v511, 0
        %v523 = vunpack.c.l.b16 %v513
        %v524 = vunpack.c.l.b16 %v514
        %v525 = vunpack.c.l.b16 %v515
        %v526 = vunpack.c.l.b16 %v516
        %v527 = vpack.c.b16 %v524, %v523
        %v528 = vpack.c.b16 %v526, %v525
        %vm531 = vcmask 261120
        %v533 = vsel %vm531, %v517, 0
        %535 = vmatpush.bf16.msra.mxu0 0
        %536 = vmatpush.bf16.msra.mxu0 0
        %537 = vmatpush.bf16.msra.mxu0 0
        %538 = vmatpush.bf16.msra.mxu0 0
        %539 = vmatpush.bf16.msra.mxu0 0
        %540 = vmatpush.bf16.msra.mxu0 0
        %541 = vmatpush.bf16.msra.mxu0 %v528
        %542 = vmatpush.bf16.msra.mxu0 %v527
        %543 = vmatmul.bf16.gmra.mxu0 %v533
        %v544 = vpop.f32.mrf.mxu0
        %v545 = vadd.f32 %v518, %v544
        %v546 = vpop.f32.mrf.mxu0
        %v547 = vadd.f32 %v518, %v546
        %548 = vdwg.mxu0
        %v549 = vlaneseq
        %v550 = vshrl.u32 %v549, 7
        %v551 = vlaneseq
        %v552 = vand.u32 %v551, 127
        %vm553 = vcmp.ge.s32.totalorder %v550, %v552
        %555 = vrot.lane.b32.xlu0 %v545, 120
        %v556 = vpop.permute.xlu0 %555
        %558 = vrot.lane.b32.xlu0 %v545, 112
        %v559 = vpop.permute.xlu0 %558
        %561 = vrot.lane.b32.xlu0 %v545, 104
        %v562 = vpop.permute.xlu0 %561
        %v564 = vrot.slane %v559, 4
        %vm565 = vcmask 1047556
        %v566 = vsel %vm565, %v564, %v545
        %v567 = vrot.slane %v545, 4
        %v568 = vsel %vm565, %v559, %v567
        %v570 = vunpack.c.l.s4 1983009808
        %v571 = vunpack.c.0.s8 %v570
        %v572 = vperm.slane %v566, %v571
        %v574 = vunpack.c.l.s4 1983009808
        %v575 = vunpack.c.0.s8 %v574
        %v576 = vperm.slane %v568, %v575
        %v577 = vrot.slane %v562, 4
        %v578 = vsel %vm565, %v577, %v556
        %v579 = vrot.slane %v556, 4
        %v580 = vsel %vm565, %v562, %v579
        %v582 = vunpack.c.l.s4 1983009808
        %v583 = vunpack.c.0.s8 %v582
        %v584 = vperm.slane %v578, %v583
        %v586 = vunpack.c.l.s4 1983009808
        %v587 = vunpack.c.0.s8 %v586
        %v588 = vperm.slane %v580, %v587
        %v589 = vrot.slane %v584, 4
        %v590 = vsel %vm565, %v589, %v572
        %v591 = vrot.slane %v572, 4
        %v592 = vsel %vm565, %v584, %v591
        %v594 = vunpack.c.l.s4 1934713408
        %v595 = vunpack.c.0.s8 %v594
        %v596 = vperm.slane %v590, %v595
        %v598 = vunpack.c.l.s4 1934713408
        %v599 = vunpack.c.0.s8 %v598
        %v600 = vperm.slane %v592, %v599
        %v601 = vrot.slane %v588, 4
        %v602 = vsel %vm565, %v601, %v576
        %v603 = vrot.slane %v576, 4
        %v604 = vsel %vm565, %v588, %v603
        %v606 = vunpack.c.l.s4 1934713408
        %v607 = vunpack.c.0.s8 %v606
        %v608 = vperm.slane %v602, %v607
        %v610 = vunpack.c.l.s4 1934713408
        %v611 = vunpack.c.0.s8 %v610
        %v612 = vperm.slane %v604, %v611
        %v613 = vrot.slane %v596, 4
        %v614 = vsel %vm565, 0.0, %v613
        %v615 = vrot.slane %v600, 4
        %v616 = vsel %vm565, 0.0, %v615
        %v617 = vrot.slane %v608, 4
        %v618 = vsel %vm565, 0.0, %v617
        %v619 = vrot.slane %v612, 4
        %v620 = vsel %vm565, 0.0, %v619
        %v621 = vsel %vm565, %v615, %v596
        %v623 = vunpack.c.l.s4 1983009808
        %v624 = vunpack.c.0.s8 %v623
        %v625 = vperm.slane %v621, %v624
        %v626 = vrot.slane %v616, 4
        %v627 = vsel %vm565, %v626, %v614
        %v629 = vunpack.c.l.s4 1983009808
        %v630 = vunpack.c.0.s8 %v629
        %v631 = vperm.slane %v627, %v630
        %v632 = vsel %vm565, %v619, %v608
        %v634 = vunpack.c.l.s4 1983009808
        %v635 = vunpack.c.0.s8 %v634
        %v636 = vperm.slane %v632, %v635
        %v637 = vrot.slane %v620, 4
        %v638 = vsel %vm565, %v637, %v618
        %v640 = vunpack.c.l.s4 1983009808
        %v641 = vunpack.c.0.s8 %v640
        %v642 = vperm.slane %v638, %v641
        %v643 = vrot.slane %v631, 4
        %v644 = vsel %vm565, %v643, %v625
        %v645 = vrot.slane %v625, 4
        %v646 = vsel %vm565, %v631, %v645
        %v648 = vunpack.c.l.s4 1934713408
        %v649 = vunpack.c.0.s8 %v648
        %v650 = vperm.slane %v644, %v649
        %v652 = vunpack.c.l.s4 1934713408
        %v653 = vunpack.c.0.s8 %v652
        %v654 = vperm.slane %v646, %v653
        %v655 = vrot.slane %v642, 4
        %v656 = vsel %vm565, %v655, %v636
        %v657 = vrot.slane %v636, 4
        %v658 = vsel %vm565, %v642, %v657
        %v660 = vunpack.c.l.s4 1934713408
        %v661 = vunpack.c.0.s8 %v660
        %v662 = vperm.slane %v656, %v661
        %v664 = vunpack.c.l.s4 1934713408
        %v665 = vunpack.c.0.s8 %v664
        %v666 = vperm.slane %v658, %v665
        %v667 = vrot.slane %v662, 4
        %v668 = vsel %vm565, %v667, %v650
        %v669 = vrot.slane %v650, 4
        %v670 = vsel %vm565, %v662, %v669
        %v671 = vrot.slane %v666, 4
        %v672 = vsel %vm565, %v671, %v654
        %v673 = vrot.slane %v654, 4
        %v674 = vsel %vm565, %v666, %v673
        %675 = vrot.lane.b32.xlu0 %v545, 96
        %v676 = vpop.permute.xlu0 %675
        %677 = vrot.lane.b32.xlu0 %v556, 96
        %v678 = vpop.permute.xlu0 %677
        %679 = vrot.lane.b32.xlu0 %v559, 96
        %v680 = vpop.permute.xlu0 %679
        %681 = vrot.lane.b32.xlu0 %v562, 96
        %v682 = vpop.permute.xlu0 %681
        %v687 = vrot.slane %v680, 4
        %v688 = vsel %vm565, %v687, %v676
        %v689 = vrot.slane %v676, 4
        %v690 = vsel %vm565, %v680, %v689
        %v692 = vunpack.c.l.s4 1983009808
        %v693 = vunpack.c.0.s8 %v692
        %v694 = vperm.slane %v688, %v693
        %v696 = vunpack.c.l.s4 1983009808
        %v697 = vunpack.c.0.s8 %v696
        %v698 = vperm.slane %v690, %v697
        %v699 = vrot.slane %v682, 4
        %v700 = vsel %vm565, %v699, %v678
        %v701 = vrot.slane %v678, 4
        %v702 = vsel %vm565, %v682, %v701
        %v704 = vunpack.c.l.s4 1983009808
        %v705 = vunpack.c.0.s8 %v704
        %v706 = vperm.slane %v700, %v705
        %v708 = vunpack.c.l.s4 1983009808
        %v709 = vunpack.c.0.s8 %v708
        %v710 = vperm.slane %v702, %v709
        %v711 = vrot.slane %v706, 4
        %v712 = vsel %vm565, %v711, %v694
        %v713 = vrot.slane %v694, 4
        %v714 = vsel %vm565, %v706, %v713
        %v716 = vunpack.c.l.s4 1934713408
        %v717 = vunpack.c.0.s8 %v716
        %v718 = vperm.slane %v712, %v717
        %v720 = vunpack.c.l.s4 1934713408
        %v721 = vunpack.c.0.s8 %v720
        %v722 = vperm.slane %v714, %v721
        %v723 = vrot.slane %v710, 4
        %v724 = vsel %vm565, %v723, %v698
        %v725 = vrot.slane %v698, 4
        %v726 = vsel %vm565, %v710, %v725
        %v728 = vunpack.c.l.s4 1934713408
        %v729 = vunpack.c.0.s8 %v728
        %v730 = vperm.slane %v724, %v729
        %v732 = vunpack.c.l.s4 1934713408
        %v733 = vunpack.c.0.s8 %v732
        %v734 = vperm.slane %v726, %v733
        %v735 = vrot.slane %v718, 4
        %v736 = vsel %vm565, 0.0, %v735
        %v737 = vrot.slane %v722, 4
        %v738 = vsel %vm565, 0.0, %v737
        %v739 = vrot.slane %v730, 4
        %v740 = vsel %vm565, 0.0, %v739
        %v741 = vrot.slane %v734, 4
        %v742 = vsel %vm565, 0.0, %v741
        %v743 = vsel %vm565, %v737, %v718
        %v745 = vunpack.c.l.s4 1983009808
        %v746 = vunpack.c.0.s8 %v745
        %v747 = vperm.slane %v743, %v746
        %v748 = vrot.slane %v738, 4
        %v749 = vsel %vm565, %v748, %v736
        %v751 = vunpack.c.l.s4 1983009808
        %v752 = vunpack.c.0.s8 %v751
        %v753 = vperm.slane %v749, %v752
        %v754 = vsel %vm565, %v741, %v730
        %v756 = vunpack.c.l.s4 1983009808
        %v757 = vunpack.c.0.s8 %v756
        %v758 = vperm.slane %v754, %v757
        %v759 = vrot.slane %v742, 4
        %v760 = vsel %vm565, %v759, %v740
        %v762 = vunpack.c.l.s4 1983009808
        %v763 = vunpack.c.0.s8 %v762
        %v764 = vperm.slane %v760, %v763
        %v765 = vrot.slane %v753, 4
        %v766 = vsel %vm565, %v765, %v747
        %v767 = vrot.slane %v747, 4
        %v768 = vsel %vm565, %v753, %v767
        %v770 = vunpack.c.l.s4 1934713408
        %v771 = vunpack.c.0.s8 %v770
        %v772 = vperm.slane %v766, %v771
        %v774 = vunpack.c.l.s4 1934713408
        %v775 = vunpack.c.0.s8 %v774
        %v776 = vperm.slane %v768, %v775
        %v777 = vrot.slane %v764, 4
        %v778 = vsel %vm565, %v777, %v758
        %v779 = vrot.slane %v758, 4
        %v780 = vsel %vm565, %v764, %v779
        %v782 = vunpack.c.l.s4 1934713408
        %v783 = vunpack.c.0.s8 %v782
        %v784 = vperm.slane %v778, %v783
        %v786 = vunpack.c.l.s4 1934713408
        %v787 = vunpack.c.0.s8 %v786
        %v788 = vperm.slane %v780, %v787
        %v789 = vrot.slane %v784, 4
        %v790 = vsel %vm565, %v789, %v772
        %v791 = vrot.slane %v772, 4
        %v792 = vsel %vm565, %v784, %v791
        %v793 = vrot.slane %v788, 4
        %v794 = vsel %vm565, %v793, %v776
        %v795 = vrot.slane %v776, 4
        %v796 = vsel %vm565, %v788, %v795
        %797 = vrot.lane.b32.xlu0 %v545, 64
        %v798 = vpop.permute.xlu0 %797
        %799 = vrot.lane.b32.xlu0 %v556, 64
        %v800 = vpop.permute.xlu0 %799
        %801 = vrot.lane.b32.xlu0 %v559, 64
        %v802 = vpop.permute.xlu0 %801
        %803 = vrot.lane.b32.xlu0 %v562, 64
        %v804 = vpop.permute.xlu0 %803
        %v809 = vrot.slane %v802, 4
        %v810 = vsel %vm565, %v809, %v798
        %v811 = vrot.slane %v798, 4
        %v812 = vsel %vm565, %v802, %v811
        %v814 = vunpack.c.l.s4 1983009808
        %v815 = vunpack.c.0.s8 %v814
        %v816 = vperm.slane %v810, %v815
        %v818 = vunpack.c.l.s4 1983009808
        %v819 = vunpack.c.0.s8 %v818
        %v820 = vperm.slane %v812, %v819
        %v821 = vrot.slane %v804, 4
        %v822 = vsel %vm565, %v821, %v800
        %v823 = vrot.slane %v800, 4
        %v824 = vsel %vm565, %v804, %v823
        %v826 = vunpack.c.l.s4 1983009808
        %v827 = vunpack.c.0.s8 %v826
        %v828 = vperm.slane %v822, %v827
        %v830 = vunpack.c.l.s4 1983009808
        %v831 = vunpack.c.0.s8 %v830
        %v832 = vperm.slane %v824, %v831
        %v833 = vrot.slane %v828, 4
        %v834 = vsel %vm565, %v833, %v816
        %v835 = vrot.slane %v816, 4
        %v836 = vsel %vm565, %v828, %v835
        %v838 = vunpack.c.l.s4 1934713408
        %v839 = vunpack.c.0.s8 %v838
        %v840 = vperm.slane %v834, %v839
        %v842 = vunpack.c.l.s4 1934713408
        %v843 = vunpack.c.0.s8 %v842
        %v844 = vperm.slane %v836, %v843
        %v845 = vrot.slane %v832, 4
        %v846 = vsel %vm565, %v845, %v820
        %v847 = vrot.slane %v820, 4
        %v848 = vsel %vm565, %v832, %v847
        %v850 = vunpack.c.l.s4 1934713408
        %v851 = vunpack.c.0.s8 %v850
        %v852 = vperm.slane %v846, %v851
        %v854 = vunpack.c.l.s4 1934713408
        %v855 = vunpack.c.0.s8 %v854
        %v856 = vperm.slane %v848, %v855
        %v857 = vrot.slane %v840, 4
        %v858 = vsel %vm565, 0.0, %v857
        %v859 = vrot.slane %v844, 4
        %v860 = vsel %vm565, 0.0, %v859
        %v861 = vrot.slane %v852, 4
        %v862 = vsel %vm565, 0.0, %v861
        %v863 = vrot.slane %v856, 4
        %v864 = vsel %vm565, 0.0, %v863
        %v865 = vsel %vm565, %v859, %v840
        %v867 = vunpack.c.l.s4 1983009808
        %v868 = vunpack.c.0.s8 %v867
        %v869 = vperm.slane %v865, %v868
        %v870 = vrot.slane %v860, 4
        %v871 = vsel %vm565, %v870, %v858
        %v873 = vunpack.c.l.s4 1983009808
        %v874 = vunpack.c.0.s8 %v873
        %v875 = vperm.slane %v871, %v874
        %v876 = vsel %vm565, %v863, %v852
        %v878 = vunpack.c.l.s4 1983009808
        %v879 = vunpack.c.0.s8 %v878
        %v880 = vperm.slane %v876, %v879
        %v881 = vrot.slane %v864, 4
        %v882 = vsel %vm565, %v881, %v862
        %v884 = vunpack.c.l.s4 1983009808
        %v885 = vunpack.c.0.s8 %v884
        %v886 = vperm.slane %v882, %v885
        %v887 = vrot.slane %v875, 4
        %v888 = vsel %vm565, %v887, %v869
        %v889 = vrot.slane %v869, 4
        %v890 = vsel %vm565, %v875, %v889
        %v892 = vunpack.c.l.s4 1934713408
        %v893 = vunpack.c.0.s8 %v892
        %v894 = vperm.slane %v888, %v893
        %v896 = vunpack.c.l.s4 1934713408
        %v897 = vunpack.c.0.s8 %v896
        %v898 = vperm.slane %v890, %v897
        %v899 = vrot.slane %v886, 4
        %v900 = vsel %vm565, %v899, %v880
        %v901 = vrot.slane %v880, 4
        %v902 = vsel %vm565, %v886, %v901
        %v904 = vunpack.c.l.s4 1934713408
        %v905 = vunpack.c.0.s8 %v904
        %v906 = vperm.slane %v900, %v905
        %v908 = vunpack.c.l.s4 1934713408
        %v909 = vunpack.c.0.s8 %v908
        %v910 = vperm.slane %v902, %v909
        %v911 = vrot.slane %v906, 4
        %v912 = vsel %vm565, %v911, %v894
        %v913 = vrot.slane %v894, 4
        %v914 = vsel %vm565, %v906, %v913
        %v915 = vrot.slane %v910, 4
        %v916 = vsel %vm565, %v915, %v898
        %v917 = vrot.slane %v898, 4
        %v918 = vsel %vm565, %v910, %v917
        %v919 = vpack.c.bf16 %v668, %v668
        %v920 = vpack.c.bf16 %v670, %v670
        %v921 = vpack.c.bf16 %v672, %v672
        %v922 = vpack.c.bf16 %v674, %v674
        %v923 = vpack.c.bf16 %v790, %v790
        %v924 = vpack.c.bf16 %v792, %v792
        %v925 = vpack.c.bf16 %v794, %v794
        %v926 = vpack.c.bf16 %v796, %v796
        %vm927 = vcmask 64512
        %v929 = vsel %vm927, %v919, 0
        %v932 = vsel %vm927, %v923, 0
        %934 = vmatpush.bf16.xpose.msra.mxu0 0
        %935 = vmatpush.bf16.xpose.msra.mxu0 0
        %936 = vmatpush.bf16.xpose.msra.mxu0 0
        %937 = vmatpush.bf16.xpose.msra.mxu0 0
        %938 = vmatpush.bf16.xpose.msra.mxu0 0
        %939 = vmatpush.bf16.xpose.msra.mxu0 0
        %940 = vmatpush.bf16.xpose.msra.mxu0 0
        %941 = vmatpush.bf16.xpose.msra.mxu0 %v932
        %942 = vmatmul.bf16.gmra.mxu0 %v929
        %v943 = vpop.f32.mrf.mxu0
        %v944 = vadd.f32 0.0, %v943
        %v945 = vpop.f32.mrf.mxu0
        %946 = vdwg.mxu0
        %v948 = vsel %vm927, %v920, 0
        %v951 = vsel %vm927, %v924, 0
        %953 = vmatpush.bf16.xpose.msra.mxu0 0
        %954 = vmatpush.bf16.xpose.msra.mxu0 0
        %955 = vmatpush.bf16.xpose.msra.mxu0 0
        %956 = vmatpush.bf16.xpose.msra.mxu0 0
        %957 = vmatpush.bf16.xpose.msra.mxu0 0
        %958 = vmatpush.bf16.xpose.msra.mxu0 0
        %959 = vmatpush.bf16.xpose.msra.mxu0 0
        %960 = vmatpush.bf16.xpose.msra.mxu0 %v951
        %961 = vmatmul.bf16.gmra.mxu0 %v948
        %v962 = vpop.f32.mrf.mxu0
        %v963 = vadd.f32 0.0, %v962
        %v964 = vpop.f32.mrf.mxu0
        %965 = vdwg.mxu0
        %v967 = vsel %vm927, %v921, 0
        %v970 = vsel %vm927, %v925, 0
        %972 = vmatpush.bf16.xpose.msra.mxu0 0
        %973 = vmatpush.bf16.xpose.msra.mxu0 0
        %974 = vmatpush.bf16.xpose.msra.mxu0 0
        %975 = vmatpush.bf16.xpose.msra.mxu0 0
        %976 = vmatpush.bf16.xpose.msra.mxu0 0
        %977 = vmatpush.bf16.xpose.msra.mxu0 0
        %978 = vmatpush.bf16.xpose.msra.mxu0 0
        %979 = vmatpush.bf16.xpose.msra.mxu0 %v970
        %980 = vmatmul.bf16.gmra.mxu0 %v967
        %v981 = vpop.f32.mrf.mxu0
        %v982 = vadd.f32 0.0, %v981
        %v983 = vpop.f32.mrf.mxu0
        %984 = vdwg.mxu0
        %v986 = vsel %vm927, %v922, 0
        %v989 = vsel %vm927, %v926, 0
        %991 = vmatpush.bf16.xpose.msra.mxu0 0
        %992 = vmatpush.bf16.xpose.msra.mxu0 0
        %993 = vmatpush.bf16.xpose.msra.mxu0 0
        %994 = vmatpush.bf16.xpose.msra.mxu0 0
        %995 = vmatpush.bf16.xpose.msra.mxu0 0
        %996 = vmatpush.bf16.xpose.msra.mxu0 0
        %997 = vmatpush.bf16.xpose.msra.mxu0 0
        %998 = vmatpush.bf16.xpose.msra.mxu0 %v989
        %999 = vmatmul.bf16.gmra.mxu0 %v986
        %v1000 = vpop.f32.mrf.mxu0
        %v1001 = vadd.f32 0.0, %v1000
        %v1002 = vpop.f32.mrf.mxu0
        %1003 = vdwg.mxu0
        %v1004 = vsel %vm553, 1, 0
        %vm1005 = vcmp.eq.s32.totalorder %v1004, 1
        %v1006 = vsel %vm1005, %v944, -1e+30
        %v1007 = vsel %vm1005, %v963, -1e+30
        %v1008 = vsel %vm1005, %v982, -1e+30
        %v1009 = vsel %vm1005, %v1001, -1e+30
        %v1010 = vsel %vm927, %v1006, -inf
        %1011 = vmax.xlane.f32.xlu0 %v1010
        %v1012 = vpop.xlane.xlu0 %1011
        %v1013 = vsel %vm927, %v1007, -inf
        %1014 = vmax.xlane.f32.xlu0 %v1013
        %v1015 = vpop.xlane.xlu0 %1014
        %v1016 = vsel %vm927, %v1008, -inf
        %1017 = vmax.xlane.f32.xlu0 %v1016
        %v1018 = vpop.xlane.xlu0 %1017
        %v1019 = vsel %vm927, %v1009, -inf
        %1020 = vmax.xlane.f32.xlu0 %v1019
        %v1021 = vpop.xlane.xlu0 %1020
        %v1022 = vsub.f32 %v1006, %v1012
        %v1023 = vsub.f32 %v1007, %v1015
        %v1024 = vsub.f32 %v1008, %v1018
        %v1025 = vsub.f32 %v1009, %v1021
        %v1026 = vmul.f32 %v1022, 1.442695
        %v1027 = vpow.pop %v1026
        %v1028 = vmul.f32 %v1023, 1.442695
        %v1029 = vpow.pop %v1028
        %v1030 = vmul.f32 %v1024, 1.442695
        %v1031 = vpow.pop %v1030
        %v1032 = vmul.f32 %v1025, 1.442695
        %v1033 = vpow.pop %v1032
        %v1034 = vsel %vm927, %v1027, 0.0
        %1035 = vadd.xlane.f32.xlu0 %v1034
        %v1036 = vpop.xlane.xlu0 %1035
        %v1037 = vsel %vm927, %v1029, 0.0
        %1038 = vadd.xlane.f32.xlu0 %v1037
        %v1039 = vpop.xlane.xlu0 %1038
        %v1040 = vsel %vm927, %v1031, 0.0
        %1041 = vadd.xlane.f32.xlu0 %v1040
        %v1042 = vpop.xlane.xlu0 %1041
        %v1043 = vsel %vm927, %v1033, 0.0
        %1044 = vadd.xlane.f32.xlu0 %v1043
        %v1045 = vpop.xlane.xlu0 %1044
        %v1046 = vrcp.pop %v1036
        %v1047 = vrcp.pop %v1039
        %v1048 = vrcp.pop %v1042
        %v1049 = vrcp.pop %v1045
        %v1050 = vmul.f32 %v1027, %v1046
        %v1051 = vmul.f32 %v1029, %v1047
        %v1052 = vmul.f32 %v1031, %v1048
        %v1053 = vmul.f32 %v1033, %v1049
        %v1054 = vpack.c.bf16 %v1050, %v1050
        %v1055 = vpack.c.bf16 %v1051, %v1051
        %v1056 = vpack.c.bf16 %v1052, %v1052
        %v1057 = vpack.c.bf16 %v1053, %v1053
        %v1058 = vpack.c.bf16 %v912, %v912
        %v1059 = vpack.c.bf16 %v914, %v914
        %v1060 = vpack.c.bf16 %v916, %v916
        %v1061 = vpack.c.bf16 %v918, %v918
        %1062 = vxpose.xlu0.c.b16.start [1/8] %v1058, 128
        %1063 = vxpose.xlu0.c.b16.cont [2/8] 0, 128
        %1064 = vxpose.xlu0.c.b16.cont [3/8] 0, 128
        %1065 = vxpose.xlu0.c.b16.cont [4/8] 0, 128
        %1066 = vxpose.xlu0.c.b16.cont [5/8] 0, 128
        %1067 = vxpose.xlu0.c.b16.cont [6/8] 0, 128
        %1068 = vxpose.xlu0.c.b16.cont [7/8] 0, 128
        %1069 = vxpose.xlu0.c.b16.end [8/8] 0, 128
        %v1070 = vpop.trf.xlu0
        %v1071 = vpop.trf.xlu0
        %v1072 = vpop.trf.xlu0
        %v1073 = vpop.trf.xlu0
        %v1074 = vpop.trf.xlu0
        %v1075 = vpop.trf.xlu0
        %v1076 = vpop.trf.xlu0
        %v1077 = vpop.trf.xlu0
        %v1079 = vsel %vm927, %v1070, 0
        %v1082 = vsel %vm927, %v1054, 0
        %1084 = vmatpush.bf16.xpose.msra.mxu0 0
        %1085 = vmatpush.bf16.xpose.msra.mxu0 0
        %1086 = vmatpush.bf16.xpose.msra.mxu0 0
        %1087 = vmatpush.bf16.xpose.msra.mxu0 0
        %1088 = vmatpush.bf16.xpose.msra.mxu0 0
        %1089 = vmatpush.bf16.xpose.msra.mxu0 0
        %1090 = vmatpush.bf16.xpose.msra.mxu0 0
        %1091 = vmatpush.bf16.xpose.msra.mxu0 %v1082
        %1092 = vmatmul.bf16.gmra.mxu0 %v1079
        %v1093 = vpop.f32.mrf.mxu0
        %v1094 = vadd.f32 0.0, %v1093
        %v1095 = vpop.f32.mrf.mxu0
        %1096 = vdwg.mxu0
        %1097 = vxpose.xlu0.c.b16.start [1/8] %v1059, 128
        %1098 = vxpose.xlu0.c.b16.cont [2/8] 0, 128
        %1099 = vxpose.xlu0.c.b16.cont [3/8] 0, 128
        %1100 = vxpose.xlu0.c.b16.cont [4/8] 0, 128
        %1101 = vxpose.xlu0.c.b16.cont [5/8] 0, 128
        %1102 = vxpose.xlu0.c.b16.cont [6/8] 0, 128
        %1103 = vxpose.xlu0.c.b16.cont [7/8] 0, 128
        %1104 = vxpose.xlu0.c.b16.end [8/8] 0, 128
        %v1105 = vpop.trf.xlu0
        %v1106 = vpop.trf.xlu0
        %v1107 = vpop.trf.xlu0
        %v1108 = vpop.trf.xlu0
        %v1109 = vpop.trf.xlu0
        %v1110 = vpop.trf.xlu0
        %v1111 = vpop.trf.xlu0
        %v1112 = vpop.trf.xlu0
        %v1114 = vsel %vm927, %v1105, 0
        %v1117 = vsel %vm927, %v1055, 0
        %1119 = vmatpush.bf16.xpose.msra.mxu0 0
        %1120 = vmatpush.bf16.xpose.msra.mxu0 0
        %1121 = vmatpush.bf16.xpose.msra.mxu0 0
        %1122 = vmatpush.bf16.xpose.msra.mxu0 0
        %1123 = vmatpush.bf16.xpose.msra.mxu0 0
        %1124 = vmatpush.bf16.xpose.msra.mxu0 0
        %1125 = vmatpush.bf16.xpose.msra.mxu0 0
        %1126 = vmatpush.bf16.xpose.msra.mxu0 %v1117
        %1127 = vmatmul.bf16.gmra.mxu0 %v1114
        %v1128 = vpop.f32.mrf.mxu0
        %v1129 = vadd.f32 0.0, %v1128
        %v1130 = vpop.f32.mrf.mxu0
        %1131 = vdwg.mxu0
        %1132 = vxpose.xlu0.c.b16.start [1/8] %v1060, 128
        %1133 = vxpose.xlu0.c.b16.cont [2/8] 0, 128
        %1134 = vxpose.xlu0.c.b16.cont [3/8] 0, 128
        %1135 = vxpose.xlu0.c.b16.cont [4/8] 0, 128
        %1136 = vxpose.xlu0.c.b16.cont [5/8] 0, 128
        %1137 = vxpose.xlu0.c.b16.cont [6/8] 0, 128
        %1138 = vxpose.xlu0.c.b16.cont [7/8] 0, 128
        %1139 = vxpose.xlu0.c.b16.end [8/8] 0, 128
        %v1140 = vpop.trf.xlu0
        %v1141 = vpop.trf.xlu0
        %v1142 = vpop.trf.xlu0
        %v1143 = vpop.trf.xlu0
        %v1144 = vpop.trf.xlu0
        %v1145 = vpop.trf.xlu0
        %v1146 = vpop.trf.xlu0
        %v1147 = vpop.trf.xlu0
        %v1149 = vsel %vm927, %v1140, 0
        %v1152 = vsel %vm927, %v1056, 0
        %1154 = vmatpush.bf16.xpose.msra.mxu0 0
        %1155 = vmatpush.bf16.xpose.msra.mxu0 0
        %1156 = vmatpush.bf16.xpose.msra.mxu0 0
        %1157 = vmatpush.bf16.xpose.msra.mxu0 0
        %1158 = vmatpush.bf16.xpose.msra.mxu0 0
        %1159 = vmatpush.bf16.xpose.msra.mxu0 0
        %1160 = vmatpush.bf16.xpose.msra.mxu0 0
        %1161 = vmatpush.bf16.xpose.msra.mxu0 %v1152
        %1162 = vmatmul.bf16.gmra.mxu0 %v1149
        %v1163 = vpop.f32.mrf.mxu0
        %v1164 = vadd.f32 0.0, %v1163
        %v1165 = vpop.f32.mrf.mxu0
        %1166 = vdwg.mxu0
        %1167 = vxpose.xlu0.c.b16.start [1/8] %v1061, 128
        %1168 = vxpose.xlu0.c.b16.cont [2/8] 0, 128
        %1169 = vxpose.xlu0.c.b16.cont [3/8] 0, 128
        %1170 = vxpose.xlu0.c.b16.cont [4/8] 0, 128
        %1171 = vxpose.xlu0.c.b16.cont [5/8] 0, 128
        %1172 = vxpose.xlu0.c.b16.cont [6/8] 0, 128
        %1173 = vxpose.xlu0.c.b16.cont [7/8] 0, 128
        %1174 = vxpose.xlu0.c.b16.end [8/8] 0, 128
        %v1175 = vpop.trf.xlu0
        %v1176 = vpop.trf.xlu0
        %v1177 = vpop.trf.xlu0
        %v1178 = vpop.trf.xlu0
        %v1179 = vpop.trf.xlu0
        %v1180 = vpop.trf.xlu0
        %v1181 = vpop.trf.xlu0
        %v1182 = vpop.trf.xlu0
        %v1184 = vsel %vm927, %v1175, 0
        %v1187 = vsel %vm927, %v1057, 0
        %1189 = vmatpush.bf16.xpose.msra.mxu0 0
        %1190 = vmatpush.bf16.xpose.msra.mxu0 0
        %1191 = vmatpush.bf16.xpose.msra.mxu0 0
        %1192 = vmatpush.bf16.xpose.msra.mxu0 0
        %1193 = vmatpush.bf16.xpose.msra.mxu0 0
        %1194 = vmatpush.bf16.xpose.msra.mxu0 0
        %1195 = vmatpush.bf16.xpose.msra.mxu0 0
        %1196 = vmatpush.bf16.xpose.msra.mxu0 %v1187
        %1197 = vmatmul.bf16.gmra.mxu0 %v1184
        %v1198 = vpop.f32.mrf.mxu0
        %v1199 = vadd.f32 0.0, %v1198
        %v1200 = vpop.f32.mrf.mxu0
        %1201 = vdwg.mxu0
        %1202 = vxpose.xlu0.b32.start [1/16] %v1094, 128
        %1203 = vxpose.xlu0.b32.cont [2/16] 0.0, 128
        %1204 = vxpose.xlu0.b32.cont [3/16] 0.0, 128
        %1205 = vxpose.xlu0.b32.cont [4/16] 0.0, 128
        %1206 = vxpose.xlu0.b32.cont [5/16] 0.0, 128
        %1207 = vxpose.xlu0.b32.cont [6/16] 0.0, 128
        %1208 = vxpose.xlu0.b32.cont [7/16] 0.0, 128
        %1209 = vxpose.xlu0.b32.cont [8/16] 0.0, 128
        %1210 = vxpose.xlu0.b32.cont [9/16] 0.0, 128
        %1211 = vxpose.xlu0.b32.cont [10/16] 0.0, 128
        %1212 = vxpose.xlu0.b32.cont [11/16] 0.0, 128
        %1213 = vxpose.xlu0.b32.cont [12/16] 0.0, 128
        %1214 = vxpose.xlu0.b32.cont [13/16] 0.0, 128
        %1215 = vxpose.xlu0.b32.cont [14/16] 0.0, 128
        %1216 = vxpose.xlu0.b32.cont [15/16] 0.0, 128
        %1217 = vxpose.xlu0.b32.end [16/16] 0.0, 128
        %v1218 = vpop.trf.xlu0
        %v1219 = vpop.trf.xlu0
        %v1220 = vpop.trf.xlu0
        %v1221 = vpop.trf.xlu0
        %v1222 = vpop.trf.xlu0
        %v1223 = vpop.trf.xlu0
        %v1224 = vpop.trf.xlu0
        %v1225 = vpop.trf.xlu0
        %v1226 = vpop.trf.xlu0
        %v1227 = vpop.trf.xlu0
        %v1228 = vpop.trf.xlu0
        %v1229 = vpop.trf.xlu0
        %v1230 = vpop.trf.xlu0
        %v1231 = vpop.trf.xlu0
        %v1232 = vpop.trf.xlu0
        %v1233 = vpop.trf.xlu0
        %1234 = vxpose.xlu0.b32.start [1/16] %v1129, 128
        %1235 = vxpose.xlu0.b32.cont [2/16] 0.0, 128
        %1236 = vxpose.xlu0.b32.cont [3/16] 0.0, 128
        %1237 = vxpose.xlu0.b32.cont [4/16] 0.0, 128
        %1238 = vxpose.xlu0.b32.cont [5/16] 0.0, 128
        %1239 = vxpose.xlu0.b32.cont [6/16] 0.0, 128
        %1240 = vxpose.xlu0.b32.cont [7/16] 0.0, 128
        %1241 = vxpose.xlu0.b32.cont [8/16] 0.0, 128
        %1242 = vxpose.xlu0.b32.cont [9/16] 0.0, 128
        %1243 = vxpose.xlu0.b32.cont [10/16] 0.0, 128
        %1244 = vxpose.xlu0.b32.cont [11/16] 0.0, 128
        %1245 = vxpose.xlu0.b32.cont [12/16] 0.0, 128
        %1246 = vxpose.xlu0.b32.cont [13/16] 0.0, 128
        %1247 = vxpose.xlu0.b32.cont [14/16] 0.0, 128
        %1248 = vxpose.xlu0.b32.cont [15/16] 0.0, 128
        %1249 = vxpose.xlu0.b32.end [16/16] 0.0, 128
        %v1250 = vpop.trf.xlu0
        %v1251 = vpop.trf.xlu0
        %v1252 = vpop.trf.xlu0
        %v1253 = vpop.trf.xlu0
        %v1254 = vpop.trf.xlu0
        %v1255 = vpop.trf.xlu0
        %v1256 = vpop.trf.xlu0
        %v1257 = vpop.trf.xlu0
        %v1258 = vpop.trf.xlu0
        %v1259 = vpop.trf.xlu0
        %v1260 = vpop.trf.xlu0
        %v1261 = vpop.trf.xlu0
        %v1262 = vpop.trf.xlu0
        %v1263 = vpop.trf.xlu0
        %v1264 = vpop.trf.xlu0
        %v1265 = vpop.trf.xlu0
        %1266 = vxpose.xlu0.b32.start [1/16] %v1164, 128
        %1267 = vxpose.xlu0.b32.cont [2/16] 0.0, 128
        %1268 = vxpose.xlu0.b32.cont [3/16] 0.0, 128
        %1269 = vxpose.xlu0.b32.cont [4/16] 0.0, 128
        %1270 = vxpose.xlu0.b32.cont [5/16] 0.0, 128
        %1271 = vxpose.xlu0.b32.cont [6/16] 0.0, 128
        %1272 = vxpose.xlu0.b32.cont [7/16] 0.0, 128
        %1273 = vxpose.xlu0.b32.cont [8/16] 0.0, 128
        %1274 = vxpose.xlu0.b32.cont [9/16] 0.0, 128
        %1275 = vxpose.xlu0.b32.cont [10/16] 0.0, 128
        %1276 = vxpose.xlu0.b32.cont [11/16] 0.0, 128
        %1277 = vxpose.xlu0.b32.cont [12/16] 0.0, 128
        %1278 = vxpose.xlu0.b32.cont [13/16] 0.0, 128
        %1279 = vxpose.xlu0.b32.cont [14/16] 0.0, 128
        %1280 = vxpose.xlu0.b32.cont [15/16] 0.0, 128
        %1281 = vxpose.xlu0.b32.end [16/16] 0.0, 128
        %v1282 = vpop.trf.xlu0
        %v1283 = vpop.trf.xlu0
        %v1284 = vpop.trf.xlu0
        %v1285 = vpop.trf.xlu0
        %v1286 = vpop.trf.xlu0
        %v1287 = vpop.trf.xlu0
        %v1288 = vpop.trf.xlu0
        %v1289 = vpop.trf.xlu0
        %v1290 = vpop.trf.xlu0
        %v1291 = vpop.trf.xlu0
        %v1292 = vpop.trf.xlu0
        %v1293 = vpop.trf.xlu0
        %v1294 = vpop.trf.xlu0
        %v1295 = vpop.trf.xlu0
        %v1296 = vpop.trf.xlu0
        %v1297 = vpop.trf.xlu0
        %1298 = vxpose.xlu0.b32.start [1/16] %v1199, 128
        %1299 = vxpose.xlu0.b32.cont [2/16] 0.0, 128
        %1300 = vxpose.xlu0.b32.cont [3/16] 0.0, 128
        %1301 = vxpose.xlu0.b32.cont [4/16] 0.0, 128
        %1302 = vxpose.xlu0.b32.cont [5/16] 0.0, 128
        %1303 = vxpose.xlu0.b32.cont [6/16] 0.0, 128
        %1304 = vxpose.xlu0.b32.cont [7/16] 0.0, 128
        %1305 = vxpose.xlu0.b32.cont [8/16] 0.0, 128
        %1306 = vxpose.xlu0.b32.cont [9/16] 0.0, 128
        %1307 = vxpose.xlu0.b32.cont [10/16] 0.0, 128
        %1308 = vxpose.xlu0.b32.cont [11/16] 0.0, 128
        %1309 = vxpose.xlu0.b32.cont [12/16] 0.0, 128
        %1310 = vxpose.xlu0.b32.cont [13/16] 0.0, 128
        %1311 = vxpose.xlu0.b32.cont [14/16] 0.0, 128
        %1312 = vxpose.xlu0.b32.cont [15/16] 0.0, 128
        %1313 = vxpose.xlu0.b32.end [16/16] 0.0, 128
        %v1314 = vpop.trf.xlu0
        %v1315 = vpop.trf.xlu0
        %v1316 = vpop.trf.xlu0
        %v1317 = vpop.trf.xlu0
        %v1318 = vpop.trf.xlu0
        %v1319 = vpop.trf.xlu0
        %v1320 = vpop.trf.xlu0
        %v1321 = vpop.trf.xlu0
        %v1322 = vpop.trf.xlu0
        %v1323 = vpop.trf.xlu0
        %v1324 = vpop.trf.xlu0
        %v1325 = vpop.trf.xlu0
        %v1326 = vpop.trf.xlu0
        %v1327 = vpop.trf.xlu0
        %v1328 = vpop.trf.xlu0
        %v1329 = vpop.trf.xlu0
        %v1330 = vrot.slane %v1282, 4
        %v1331 = vsel %vm565, %v1330, %v1218
        %v1332 = vrot.slane %v1218, 4
        %v1333 = vsel %vm565, %v1282, %v1332
        %v1335 = vunpack.c.l.s4 1983009808
        %v1336 = vunpack.c.0.s8 %v1335
        %v1337 = vperm.slane %v1331, %v1336
        %v1339 = vunpack.c.l.s4 1983009808
        %v1340 = vunpack.c.0.s8 %v1339
        %v1341 = vperm.slane %v1333, %v1340
        %v1342 = vrot.slane %v1314, 4
        %v1343 = vsel %vm565, %v1342, %v1250
        %v1344 = vrot.slane %v1250, 4
        %v1345 = vsel %vm565, %v1314, %v1344
        %v1347 = vunpack.c.l.s4 1983009808
        %v1348 = vunpack.c.0.s8 %v1347
        %v1349 = vperm.slane %v1343, %v1348
        %v1351 = vunpack.c.l.s4 1983009808
        %v1352 = vunpack.c.0.s8 %v1351
        %v1353 = vperm.slane %v1345, %v1352
        %v1354 = vrot.slane %v1349, 4
        %v1355 = vsel %vm565, %v1354, %v1337
        %v1356 = vrot.slane %v1337, 4
        %v1357 = vsel %vm565, %v1349, %v1356
        %v1359 = vunpack.c.l.s4 1934713408
        %v1360 = vunpack.c.0.s8 %v1359
        %v1361 = vperm.slane %v1355, %v1360
        %v1363 = vunpack.c.l.s4 1934713408
        %v1364 = vunpack.c.0.s8 %v1363
        %v1365 = vperm.slane %v1357, %v1364
        %v1366 = vrot.slane %v1353, 4
        %v1367 = vsel %vm565, %v1366, %v1341
        %v1368 = vrot.slane %v1341, 4
        %v1369 = vsel %vm565, %v1353, %v1368
        %v1371 = vunpack.c.l.s4 1934713408
        %v1372 = vunpack.c.0.s8 %v1371
        %v1373 = vperm.slane %v1367, %v1372
        %v1375 = vunpack.c.l.s4 1934713408
        %v1376 = vunpack.c.0.s8 %v1375
        %v1377 = vperm.slane %v1369, %v1376
        %v1378 = vrot.slane %v1361, 4
        %v1379 = vsel %vm565, 0.0, %v1378
        %v1380 = vrot.slane %v1365, 4
        %v1381 = vsel %vm565, 0.0, %v1380
        %v1382 = vrot.slane %v1373, 4
        %v1383 = vsel %vm565, 0.0, %v1382
        %v1384 = vrot.slane %v1377, 4
        %v1385 = vsel %vm565, 0.0, %v1384
        %1387 = vrot.lane.b32.xlu0 %v547, 120
        %v1388 = vpop.permute.xlu0 %1387
        %1390 = vrot.lane.b32.xlu0 %v547, 112
        %v1391 = vpop.permute.xlu0 %1390
        %1393 = vrot.lane.b32.xlu0 %v547, 104
        %v1394 = vpop.permute.xlu0 %1393
        %v1396 = vrot.slane %v1391, 4
        %v1397 = vsel %vm565, %v1396, %v547
        %v1398 = vrot.slane %v547, 4
        %v1399 = vsel %vm565, %v1391, %v1398
        %v1401 = vunpack.c.l.s4 1983009808
        %v1402 = vunpack.c.0.s8 %v1401
        %v1403 = vperm.slane %v1397, %v1402
        %v1405 = vunpack.c.l.s4 1983009808
        %v1406 = vunpack.c.0.s8 %v1405
        %v1407 = vperm.slane %v1399, %v1406
        %v1408 = vrot.slane %v1394, 4
        %v1409 = vsel %vm565, %v1408, %v1388
        %v1410 = vrot.slane %v1388, 4
        %v1411 = vsel %vm565, %v1394, %v1410
        %v1413 = vunpack.c.l.s4 1983009808
        %v1414 = vunpack.c.0.s8 %v1413
        %v1415 = vperm.slane %v1409, %v1414
        %v1417 = vunpack.c.l.s4 1983009808
        %v1418 = vunpack.c.0.s8 %v1417
        %v1419 = vperm.slane %v1411, %v1418
        %v1420 = vrot.slane %v1415, 4
        %v1421 = vsel %vm565, %v1420, %v1403
        %v1422 = vrot.slane %v1403, 4
        %v1423 = vsel %vm565, %v1415, %v1422
        %v1425 = vunpack.c.l.s4 1934713408
        %v1426 = vunpack.c.0.s8 %v1425
        %v1427 = vperm.slane %v1421, %v1426
        %v1429 = vunpack.c.l.s4 1934713408
        %v1430 = vunpack.c.0.s8 %v1429
        %v1431 = vperm.slane %v1423, %v1430
        %v1432 = vrot.slane %v1419, 4
        %v1433 = vsel %vm565, %v1432, %v1407
        %v1434 = vrot.slane %v1407, 4
        %v1435 = vsel %vm565, %v1419, %v1434
        %v1437 = vunpack.c.l.s4 1934713408
        %v1438 = vunpack.c.0.s8 %v1437
        %v1439 = vperm.slane %v1433, %v1438
        %v1441 = vunpack.c.l.s4 1934713408
        %v1442 = vunpack.c.0.s8 %v1441
        %v1443 = vperm.slane %v1435, %v1442
        %v1444 = vrot.slane %v1427, 4
        %v1445 = vsel %vm565, 0.0, %v1444
        %v1446 = vrot.slane %v1431, 4
        %v1447 = vsel %vm565, 0.0, %v1446
        %v1448 = vrot.slane %v1439, 4
        %v1449 = vsel %vm565, 0.0, %v1448
        %v1450 = vrot.slane %v1443, 4
        %v1451 = vsel %vm565, 0.0, %v1450
        %v1452 = vsel %vm565, %v1446, %v1427
        %v1454 = vunpack.c.l.s4 1983009808
        %v1455 = vunpack.c.0.s8 %v1454
        %v1456 = vperm.slane %v1452, %v1455
        %v1457 = vrot.slane %v1447, 4
        %v1458 = vsel %vm565, %v1457, %v1445
        %v1460 = vunpack.c.l.s4 1983009808
        %v1461 = vunpack.c.0.s8 %v1460
        %v1462 = vperm.slane %v1458, %v1461
        %v1463 = vsel %vm565, %v1450, %v1439
        %v1465 = vunpack.c.l.s4 1983009808
        %v1466 = vunpack.c.0.s8 %v1465
        %v1467 = vperm.slane %v1463, %v1466
        %v1468 = vrot.slane %v1451, 4
        %v1469 = vsel %vm565, %v1468, %v1449
        %v1471 = vunpack.c.l.s4 1983009808
        %v1472 = vunpack.c.0.s8 %v1471
        %v1473 = vperm.slane %v1469, %v1472
        %v1474 = vrot.slane %v1462, 4
        %v1475 = vsel %vm565, %v1474, %v1456
        %v1476 = vrot.slane %v1456, 4
        %v1477 = vsel %vm565, %v1462, %v1476
        %v1479 = vunpack.c.l.s4 1934713408
        %v1480 = vunpack.c.0.s8 %v1479
        %v1481 = vperm.slane %v1475, %v1480
        %v1483 = vunpack.c.l.s4 1934713408
        %v1484 = vunpack.c.0.s8 %v1483
        %v1485 = vperm.slane %v1477, %v1484
        %v1486 = vrot.slane %v1473, 4
        %v1487 = vsel %vm565, %v1486, %v1467
        %v1488 = vrot.slane %v1467, 4
        %v1489 = vsel %vm565, %v1473, %v1488
        %v1491 = vunpack.c.l.s4 1934713408
        %v1492 = vunpack.c.0.s8 %v1491
        %v1493 = vperm.slane %v1487, %v1492
        %v1495 = vunpack.c.l.s4 1934713408
        %v1496 = vunpack.c.0.s8 %v1495
        %v1497 = vperm.slane %v1489, %v1496
        %v1498 = vrot.slane %v1493, 4
        %v1499 = vsel %vm565, %v1498, %v1481
        %v1500 = vrot.slane %v1481, 4
        %v1501 = vsel %vm565, %v1493, %v1500
        %v1502 = vrot.slane %v1497, 4
        %v1503 = vsel %vm565, %v1502, %v1485
        %v1504 = vrot.slane %v1485, 4
        %v1505 = vsel %vm565, %v1497, %v1504
        %1506 = vrot.lane.b32.xlu0 %v547, 96
        %v1507 = vpop.permute.xlu0 %1506
        %1508 = vrot.lane.b32.xlu0 %v1388, 96
        %v1509 = vpop.permute.xlu0 %1508
        %1510 = vrot.lane.b32.xlu0 %v1391, 96
        %v1511 = vpop.permute.xlu0 %1510
        %1512 = vrot.lane.b32.xlu0 %v1394, 96
        %v1513 = vpop.permute.xlu0 %1512
        %v1518 = vrot.slane %v1511, 4
        %v1519 = vsel %vm565, %v1518, %v1507
        %v1520 = vrot.slane %v1507, 4
        %v1521 = vsel %vm565, %v1511, %v1520
        %v1523 = vunpack.c.l.s4 1983009808
        %v1524 = vunpack.c.0.s8 %v1523
        %v1525 = vperm.slane %v1519, %v1524
        %v1527 = vunpack.c.l.s4 1983009808
        %v1528 = vunpack.c.0.s8 %v1527
        %v1529 = vperm.slane %v1521, %v1528
        %v1530 = vrot.slane %v1513, 4
        %v1531 = vsel %vm565, %v1530, %v1509
        %v1532 = vrot.slane %v1509, 4
        %v1533 = vsel %vm565, %v1513, %v1532
        %v1535 = vunpack.c.l.s4 1983009808
        %v1536 = vunpack.c.0.s8 %v1535
        %v1537 = vperm.slane %v1531, %v1536
        %v1539 = vunpack.c.l.s4 1983009808
        %v1540 = vunpack.c.0.s8 %v1539
        %v1541 = vperm.slane %v1533, %v1540
        %v1542 = vrot.slane %v1537, 4
        %v1543 = vsel %vm565, %v1542, %v1525
        %v1544 = vrot.slane %v1525, 4
        %v1545 = vsel %vm565, %v1537, %v1544
        %v1547 = vunpack.c.l.s4 1934713408
        %v1548 = vunpack.c.0.s8 %v1547
        %v1549 = vperm.slane %v1543, %v1548
        %v1551 = vunpack.c.l.s4 1934713408
        %v1552 = vunpack.c.0.s8 %v1551
        %v1553 = vperm.slane %v1545, %v1552
        %v1554 = vrot.slane %v1541, 4
        %v1555 = vsel %vm565, %v1554, %v1529
        %v1556 = vrot.slane %v1529, 4
        %v1557 = vsel %vm565, %v1541, %v1556
        %v1559 = vunpack.c.l.s4 1934713408
        %v1560 = vunpack.c.0.s8 %v1559
        %v1561 = vperm.slane %v1555, %v1560
        %v1563 = vunpack.c.l.s4 1934713408
        %v1564 = vunpack.c.0.s8 %v1563
        %v1565 = vperm.slane %v1557, %v1564
        %v1566 = vrot.slane %v1549, 4
        %v1567 = vsel %vm565, 0.0, %v1566
        %v1568 = vrot.slane %v1553, 4
        %v1569 = vsel %vm565, 0.0, %v1568
        %v1570 = vrot.slane %v1561, 4
        %v1571 = vsel %vm565, 0.0, %v1570
        %v1572 = vrot.slane %v1565, 4
        %v1573 = vsel %vm565, 0.0, %v1572
        %v1574 = vsel %vm565, %v1568, %v1549
        %v1576 = vunpack.c.l.s4 1983009808
        %v1577 = vunpack.c.0.s8 %v1576
        %v1578 = vperm.slane %v1574, %v1577
        %v1579 = vrot.slane %v1569, 4
        %v1580 = vsel %vm565, %v1579, %v1567
        %v1582 = vunpack.c.l.s4 1983009808
        %v1583 = vunpack.c.0.s8 %v1582
        %v1584 = vperm.slane %v1580, %v1583
        %v1585 = vsel %vm565, %v1572, %v1561
        %v1587 = vunpack.c.l.s4 1983009808
        %v1588 = vunpack.c.0.s8 %v1587
        %v1589 = vperm.slane %v1585, %v1588
        %v1590 = vrot.slane %v1573, 4
        %v1591 = vsel %vm565, %v1590, %v1571
        %v1593 = vunpack.c.l.s4 1983009808
        %v1594 = vunpack.c.0.s8 %v1593
        %v1595 = vperm.slane %v1591, %v1594
        %v1596 = vrot.slane %v1584, 4
        %v1597 = vsel %vm565, %v1596, %v1578
        %v1598 = vrot.slane %v1578, 4
        %v1599 = vsel %vm565, %v1584, %v1598
        %v1601 = vunpack.c.l.s4 1934713408
        %v1602 = vunpack.c.0.s8 %v1601
        %v1603 = vperm.slane %v1597, %v1602
        %v1605 = vunpack.c.l.s4 1934713408
        %v1606 = vunpack.c.0.s8 %v1605
        %v1607 = vperm.slane %v1599, %v1606
        %v1608 = vrot.slane %v1595, 4
        %v1609 = vsel %vm565, %v1608, %v1589
        %v1610 = vrot.slane %v1589, 4
        %v1611 = vsel %vm565, %v1595, %v1610
        %v1613 = vunpack.c.l.s4 1934713408
        %v1614 = vunpack.c.0.s8 %v1613
        %v1615 = vperm.slane %v1609, %v1614
        %v1617 = vunpack.c.l.s4 1934713408
        %v1618 = vunpack.c.0.s8 %v1617
        %v1619 = vperm.slane %v1611, %v1618
        %v1620 = vrot.slane %v1615, 4
        %v1621 = vsel %vm565, %v1620, %v1603
        %v1622 = vrot.slane %v1603, 4
        %v1623 = vsel %vm565, %v1615, %v1622
        %v1624 = vrot.slane %v1619, 4
        %v1625 = vsel %vm565, %v1624, %v1607
        %v1626 = vrot.slane %v1607, 4
        %v1627 = vsel %vm565, %v1619, %v1626
        %1628 = vrot.lane.b32.xlu0 %v547, 64
        %v1629 = vpop.permute.xlu0 %1628
        %1630 = vrot.lane.b32.xlu0 %v1388, 64
        %v1631 = vpop.permute.xlu0 %1630
        %1632 = vrot.lane.b32.xlu0 %v1391, 64
        %v1633 = vpop.permute.xlu0 %1632
        %1634 = vrot.lane.b32.xlu0 %v1394, 64
        %v1635 = vpop.permute.xlu0 %1634
        %v1640 = vrot.slane %v1633, 4
        %v1641 = vsel %vm565, %v1640, %v1629
        %v1642 = vrot.slane %v1629, 4
        %v1643 = vsel %vm565, %v1633, %v1642
        %v1645 = vunpack.c.l.s4 1983009808
        %v1646 = vunpack.c.0.s8 %v1645
        %v1647 = vperm.slane %v1641, %v1646
        %v1649 = vunpack.c.l.s4 1983009808
        %v1650 = vunpack.c.0.s8 %v1649
        %v1651 = vperm.slane %v1643, %v1650
        %v1652 = vrot.slane %v1635, 4
        %v1653 = vsel %vm565, %v1652, %v1631
        %v1654 = vrot.slane %v1631, 4
        %v1655 = vsel %vm565, %v1635, %v1654
        %v1657 = vunpack.c.l.s4 1983009808
        %v1658 = vunpack.c.0.s8 %v1657
        %v1659 = vperm.slane %v1653, %v1658
        %v1661 = vunpack.c.l.s4 1983009808
        %v1662 = vunpack.c.0.s8 %v1661
        %v1663 = vperm.slane %v1655, %v1662
        %v1664 = vrot.slane %v1659, 4
        %v1665 = vsel %vm565, %v1664, %v1647
        %v1666 = vrot.slane %v1647, 4
        %v1667 = vsel %vm565, %v1659, %v1666
        %v1669 = vunpack.c.l.s4 1934713408
        %v1670 = vunpack.c.0.s8 %v1669
        %v1671 = vperm.slane %v1665, %v1670
        %v1673 = vunpack.c.l.s4 1934713408
        %v1674 = vunpack.c.0.s8 %v1673
        %v1675 = vperm.slane %v1667, %v1674
        %v1676 = vrot.slane %v1663, 4
        %v1677 = vsel %vm565, %v1676, %v1651
        %v1678 = vrot.slane %v1651, 4
        %v1679 = vsel %vm565, %v1663, %v1678
        %v1681 = vunpack.c.l.s4 1934713408
        %v1682 = vunpack.c.0.s8 %v1681
        %v1683 = vperm.slane %v1677, %v1682
        %v1685 = vunpack.c.l.s4 1934713408
        %v1686 = vunpack.c.0.s8 %v1685
        %v1687 = vperm.slane %v1679, %v1686
        %v1688 = vrot.slane %v1671, 4
        %v1689 = vsel %vm565, 0.0, %v1688
        %v1690 = vrot.slane %v1675, 4
        %v1691 = vsel %vm565, 0.0, %v1690
        %v1692 = vrot.slane %v1683, 4
        %v1693 = vsel %vm565, 0.0, %v1692
        %v1694 = vrot.slane %v1687, 4
        %v1695 = vsel %vm565, 0.0, %v1694
        %v1696 = vsel %vm565, %v1690, %v1671
        %v1698 = vunpack.c.l.s4 1983009808
        %v1699 = vunpack.c.0.s8 %v1698
        %v1700 = vperm.slane %v1696, %v1699
        %v1701 = vrot.slane %v1691, 4
        %v1702 = vsel %vm565, %v1701, %v1689
        %v1704 = vunpack.c.l.s4 1983009808
        %v1705 = vunpack.c.0.s8 %v1704
        %v1706 = vperm.slane %v1702, %v1705
        %v1707 = vsel %vm565, %v1694, %v1683
        %v1709 = vunpack.c.l.s4 1983009808
        %v1710 = vunpack.c.0.s8 %v1709
        %v1711 = vperm.slane %v1707, %v1710
        %v1712 = vrot.slane %v1695, 4
        %v1713 = vsel %vm565, %v1712, %v1693
        %v1715 = vunpack.c.l.s4 1983009808
        %v1716 = vunpack.c.0.s8 %v1715
        %v1717 = vperm.slane %v1713, %v1716
        %v1718 = vrot.slane %v1706, 4
        %v1719 = vsel %vm565, %v1718, %v1700
        %v1720 = vrot.slane %v1700, 4
        %v1721 = vsel %vm565, %v1706, %v1720
        %v1723 = vunpack.c.l.s4 1934713408
        %v1724 = vunpack.c.0.s8 %v1723
        %v1725 = vperm.slane %v1719, %v1724
        %v1727 = vunpack.c.l.s4 1934713408
        %v1728 = vunpack.c.0.s8 %v1727
        %v1729 = vperm.slane %v1721, %v1728
        %v1730 = vrot.slane %v1717, 4
        %v1731 = vsel %vm565, %v1730, %v1711
        %v1732 = vrot.slane %v1711, 4
        %v1733 = vsel %vm565, %v1717, %v1732
        %v1735 = vunpack.c.l.s4 1934713408
        %v1736 = vunpack.c.0.s8 %v1735
        %v1737 = vperm.slane %v1731, %v1736
        %v1739 = vunpack.c.l.s4 1934713408
        %v1740 = vunpack.c.0.s8 %v1739
        %v1741 = vperm.slane %v1733, %v1740
        %v1742 = vrot.slane %v1737, 4
        %v1743 = vsel %vm565, %v1742, %v1725
        %v1744 = vrot.slane %v1725, 4
        %v1745 = vsel %vm565, %v1737, %v1744
        %v1746 = vrot.slane %v1741, 4
        %v1747 = vsel %vm565, %v1746, %v1729
        %v1748 = vrot.slane %v1729, 4
        %v1749 = vsel %vm565, %v1741, %v1748
        %v1750 = vpack.c.bf16 %v1499, %v1499
        %v1751 = vpack.c.bf16 %v1501, %v1501
        %v1752 = vpack.c.bf16 %v1503, %v1503
        %v1753 = vpack.c.bf16 %v1505, %v1505
        %v1754 = vpack.c.bf16 %v1621, %v1621
        %v1755 = vpack.c.bf16 %v1623, %v1623
        %v1756 = vpack.c.bf16 %v1625, %v1625
        %v1757 = vpack.c.bf16 %v1627, %v1627
        %v1759 = vsel %vm927, %v1750, 0
        %v1762 = vsel %vm927, %v1754, 0
        %1764 = vmatpush.bf16.xpose.msra.mxu0 0
        %1765 = vmatpush.bf16.xpose.msra.mxu0 0
        %1766 = vmatpush.bf16.xpose.msra.mxu0 0
        %1767 = vmatpush.bf16.xpose.msra.mxu0 0
        %1768 = vmatpush.bf16.xpose.msra.mxu0 0
        %1769 = vmatpush.bf16.xpose.msra.mxu0 0
        %1770 = vmatpush.bf16.xpose.msra.mxu0 0
        %1771 = vmatpush.bf16.xpose.msra.mxu0 %v1762
        %1772 = vmatmul.bf16.gmra.mxu0 %v1759
        %v1773 = vpop.f32.mrf.mxu0
        %v1774 = vadd.f32 0.0, %v1773
        %v1775 = vpop.f32.mrf.mxu0
        %1776 = vdwg.mxu0
        %v1778 = vsel %vm927, %v1751, 0
        %v1781 = vsel %vm927, %v1755, 0
        %1783 = vmatpush.bf16.xpose.msra.mxu0 0
        %1784 = vmatpush.bf16.xpose.msra.mxu0 0
        %1785 = vmatpush.bf16.xpose.msra.mxu0 0
        %1786 = vmatpush.bf16.xpose.msra.mxu0 0
        %1787 = vmatpush.bf16.xpose.msra.mxu0 0
        %1788 = vmatpush.bf16.xpose.msra.mxu0 0
        %1789 = vmatpush.bf16.xpose.msra.mxu0 0
        %1790 = vmatpush.bf16.xpose.msra.mxu0 %v1781
        %1791 = vmatmul.bf16.gmra.mxu0 %v1778
        %v1792 = vpop.f32.mrf.mxu0
        %v1793 = vadd.f32 0.0, %v1792
        %v1794 = vpop.f32.mrf.mxu0
        %1795 = vdwg.mxu0
        %v1797 = vsel %vm927, %v1752, 0
        %v1800 = vsel %vm927, %v1756, 0
        %1802 = vmatpush.bf16.xpose.msra.mxu0 0
        %1803 = vmatpush.bf16.xpose.msra.mxu0 0
        %1804 = vmatpush.bf16.xpose.msra.mxu0 0
        %1805 = vmatpush.bf16.xpose.msra.mxu0 0
        %1806 = vmatpush.bf16.xpose.msra.mxu0 0
        %1807 = vmatpush.bf16.xpose.msra.mxu0 0
        %1808 = vmatpush.bf16.xpose.msra.mxu0 0
        %1809 = vmatpush.bf16.xpose.msra.mxu0 %v1800
        %1810 = vmatmul.bf16.gmra.mxu0 %v1797
        %v1811 = vpop.f32.mrf.mxu0
        %v1812 = vadd.f32 0.0, %v1811
        %v1813 = vpop.f32.mrf.mxu0
        %1814 = vdwg.mxu0
        %v1816 = vsel %vm927, %v1753, 0
        %v1819 = vsel %vm927, %v1757, 0
        %1821 = vmatpush.bf16.xpose.msra.mxu0 0
        %1822 = vmatpush.bf16.xpose.msra.mxu0 0
        %1823 = vmatpush.bf16.xpose.msra.mxu0 0
        %1824 = vmatpush.bf16.xpose.msra.mxu0 0
        %1825 = vmatpush.bf16.xpose.msra.mxu0 0
        %1826 = vmatpush.bf16.xpose.msra.mxu0 0
        %1827 = vmatpush.bf16.xpose.msra.mxu0 0
        %1828 = vmatpush.bf16.xpose.msra.mxu0 %v1819
        %1829 = vmatmul.bf16.gmra.mxu0 %v1816
        %v1830 = vpop.f32.mrf.mxu0
        %v1831 = vadd.f32 0.0, %v1830
        %v1832 = vpop.f32.mrf.mxu0
        %1833 = vdwg.mxu0
        %v1834 = vsel %vm1005, %v1774, -1e+30
        %v1835 = vsel %vm1005, %v1793, -1e+30
        %v1836 = vsel %vm1005, %v1812, -1e+30
        %v1837 = vsel %vm1005, %v1831, -1e+30
        %v1838 = vsel %vm927, %v1834, -inf
        %1839 = vmax.xlane.f32.xlu0 %v1838
        %v1840 = vpop.xlane.xlu0 %1839
        %v1841 = vsel %vm927, %v1835, -inf
        %1842 = vmax.xlane.f32.xlu0 %v1841
        %v1843 = vpop.xlane.xlu0 %1842
        %v1844 = vsel %vm927, %v1836, -inf
        %1845 = vmax.xlane.f32.xlu0 %v1844
        %v1846 = vpop.xlane.xlu0 %1845
        %v1847 = vsel %vm927, %v1837, -inf
        %1848 = vmax.xlane.f32.xlu0 %v1847
        %v1849 = vpop.xlane.xlu0 %1848
        %v1850 = vsub.f32 %v1834, %v1840
        %v1851 = vsub.f32 %v1835, %v1843
        %v1852 = vsub.f32 %v1836, %v1846
        %v1853 = vsub.f32 %v1837, %v1849
        %v1854 = vmul.f32 %v1850, 1.442695
        %v1855 = vpow.pop %v1854
        %v1856 = vmul.f32 %v1851, 1.442695
        %v1857 = vpow.pop %v1856
        %v1858 = vmul.f32 %v1852, 1.442695
        %v1859 = vpow.pop %v1858
        %v1860 = vmul.f32 %v1853, 1.442695
        %v1861 = vpow.pop %v1860
        %v1862 = vsel %vm927, %v1855, 0.0
        %1863 = vadd.xlane.f32.xlu0 %v1862
        %v1864 = vpop.xlane.xlu0 %1863
        %v1865 = vsel %vm927, %v1857, 0.0
        %1866 = vadd.xlane.f32.xlu0 %v1865
        %v1867 = vpop.xlane.xlu0 %1866
        %v1868 = vsel %vm927, %v1859, 0.0
        %1869 = vadd.xlane.f32.xlu0 %v1868
        %v1870 = vpop.xlane.xlu0 %1869
        %v1871 = vsel %vm927, %v1861, 0.0
        %1872 = vadd.xlane.f32.xlu0 %v1871
        %v1873 = vpop.xlane.xlu0 %1872
        %v1874 = vrcp.pop %v1864
        %v1875 = vrcp.pop %v1867
        %v1876 = vrcp.pop %v1870
        %v1877 = vrcp.pop %v1873
        %v1878 = vmul.f32 %v1855, %v1874
        %v1879 = vmul.f32 %v1857, %v1875
        %v1880 = vmul.f32 %v1859, %v1876
        %v1881 = vmul.f32 %v1861, %v1877
        %v1882 = vpack.c.bf16 %v1878, %v1878
        %v1883 = vpack.c.bf16 %v1879, %v1879
        %v1884 = vpack.c.bf16 %v1880, %v1880
        %v1885 = vpack.c.bf16 %v1881, %v1881
        %v1886 = vpack.c.bf16 %v1743, %v1743
        %v1887 = vpack.c.bf16 %v1745, %v1745
        %v1888 = vpack.c.bf16 %v1747, %v1747
        %v1889 = vpack.c.bf16 %v1749, %v1749
        %1890 = vxpose.xlu0.c.b16.start [1/8] %v1886, 128
        %1891 = vxpose.xlu0.c.b16.cont [2/8] 0, 128
        %1892 = vxpose.xlu0.c.b16.cont [3/8] 0, 128
        %1893 = vxpose.xlu0.c.b16.cont [4/8] 0, 128
        %1894 = vxpose.xlu0.c.b16.cont [5/8] 0, 128
        %1895 = vxpose.xlu0.c.b16.cont [6/8] 0, 128
        %1896 = vxpose.xlu0.c.b16.cont [7/8] 0, 128
        %1897 = vxpose.xlu0.c.b16.end [8/8] 0, 128
        %v1898 = vpop.trf.xlu0
        %v1899 = vpop.trf.xlu0
        %v1900 = vpop.trf.xlu0
        %v1901 = vpop.trf.xlu0
        %v1902 = vpop.trf.xlu0
        %v1903 = vpop.trf.xlu0
        %v1904 = vpop.trf.xlu0
        %v1905 = vpop.trf.xlu0
        %v1907 = vsel %vm927, %v1898, 0
        %v1910 = vsel %vm927, %v1882, 0
        %1912 = vmatpush.bf16.xpose.msra.mxu0 0
        %1913 = vmatpush.bf16.xpose.msra.mxu0 0
        %1914 = vmatpush.bf16.xpose.msra.mxu0 0
        %1915 = vmatpush.bf16.xpose.msra.mxu0 0
        %1916 = vmatpush.bf16.xpose.msra.mxu0 0
        %1917 = vmatpush.bf16.xpose.msra.mxu0 0
        %1918 = vmatpush.bf16.xpose.msra.mxu0 0
        %1919 = vmatpush.bf16.xpose.msra.mxu0 %v1910
        %1920 = vmatmul.bf16.gmra.mxu0 %v1907
        %v1921 = vpop.f32.mrf.mxu0
        %v1922 = vadd.f32 0.0, %v1921
        %v1923 = vpop.f32.mrf.mxu0
        %1924 = vdwg.mxu0
        %1925 = vxpose.xlu0.c.b16.start [1/8] %v1887, 128
        %1926 = vxpose.xlu0.c.b16.cont [2/8] 0, 128
        %1927 = vxpose.xlu0.c.b16.cont [3/8] 0, 128
        %1928 = vxpose.xlu0.c.b16.cont [4/8] 0, 128
        %1929 = vxpose.xlu0.c.b16.cont [5/8] 0, 128
        %1930 = vxpose.xlu0.c.b16.cont [6/8] 0, 128
        %1931 = vxpose.xlu0.c.b16.cont [7/8] 0, 128
        %1932 = vxpose.xlu0.c.b16.end [8/8] 0, 128
        %v1933 = vpop.trf.xlu0
        %v1934 = vpop.trf.xlu0
        %v1935 = vpop.trf.xlu0
        %v1936 = vpop.trf.xlu0
        %v1937 = vpop.trf.xlu0
        %v1938 = vpop.trf.xlu0
        %v1939 = vpop.trf.xlu0
        %v1940 = vpop.trf.xlu0
        %v1942 = vsel %vm927, %v1933, 0
        %v1945 = vsel %vm927, %v1883, 0
        %1947 = vmatpush.bf16.xpose.msra.mxu0 0
        %1948 = vmatpush.bf16.xpose.msra.mxu0 0
        %1949 = vmatpush.bf16.xpose.msra.mxu0 0
        %1950 = vmatpush.bf16.xpose.msra.mxu0 0
        %1951 = vmatpush.bf16.xpose.msra.mxu0 0
        %1952 = vmatpush.bf16.xpose.msra.mxu0 0
        %1953 = vmatpush.bf16.xpose.msra.mxu0 0
        %1954 = vmatpush.bf16.xpose.msra.mxu0 %v1945
        %1955 = vmatmul.bf16.gmra.mxu0 %v1942
        %v1956 = vpop.f32.mrf.mxu0
        %v1957 = vadd.f32 0.0, %v1956
        %v1958 = vpop.f32.mrf.mxu0
        %1959 = vdwg.mxu0
        %1960 = vxpose.xlu0.c.b16.start [1/8] %v1888, 128
        %1961 = vxpose.xlu0.c.b16.cont [2/8] 0, 128
        %1962 = vxpose.xlu0.c.b16.cont [3/8] 0, 128
        %1963 = vxpose.xlu0.c.b16.cont [4/8] 0, 128
        %1964 = vxpose.xlu0.c.b16.cont [5/8] 0, 128
        %1965 = vxpose.xlu0.c.b16.cont [6/8] 0, 128
        %1966 = vxpose.xlu0.c.b16.cont [7/8] 0, 128
        %1967 = vxpose.xlu0.c.b16.end [8/8] 0, 128
        %v1968 = vpop.trf.xlu0
        %v1969 = vpop.trf.xlu0
        %v1970 = vpop.trf.xlu0
        %v1971 = vpop.trf.xlu0
        %v1972 = vpop.trf.xlu0
        %v1973 = vpop.trf.xlu0
        %v1974 = vpop.trf.xlu0
        %v1975 = vpop.trf.xlu0
        %v1977 = vsel %vm927, %v1968, 0
        %v1980 = vsel %vm927, %v1884, 0
        %1982 = vmatpush.bf16.xpose.msra.mxu0 0
        %1983 = vmatpush.bf16.xpose.msra.mxu0 0
        %1984 = vmatpush.bf16.xpose.msra.mxu0 0
        %1985 = vmatpush.bf16.xpose.msra.mxu0 0
        %1986 = vmatpush.bf16.xpose.msra.mxu0 0
        %1987 = vmatpush.bf16.xpose.msra.mxu0 0
        %1988 = vmatpush.bf16.xpose.msra.mxu0 0
        %1989 = vmatpush.bf16.xpose.msra.mxu0 %v1980
        %1990 = vmatmul.bf16.gmra.mxu0 %v1977
        %v1991 = vpop.f32.mrf.mxu0
        %v1992 = vadd.f32 0.0, %v1991
        %v1993 = vpop.f32.mrf.mxu0
        %1994 = vdwg.mxu0
        %1995 = vxpose.xlu0.c.b16.start [1/8] %v1889, 128
        %1996 = vxpose.xlu0.c.b16.cont [2/8] 0, 128
        %1997 = vxpose.xlu0.c.b16.cont [3/8] 0, 128
        %1998 = vxpose.xlu0.c.b16.cont [4/8] 0, 128
        %1999 = vxpose.xlu0.c.b16.cont [5/8] 0, 128
        %2000 = vxpose.xlu0.c.b16.cont [6/8] 0, 128
        %2001 = vxpose.xlu0.c.b16.cont [7/8] 0, 128
        %2002 = vxpose.xlu0.c.b16.end [8/8] 0, 128
        %v2003 = vpop.trf.xlu0
        %v2004 = vpop.trf.xlu0
        %v2005 = vpop.trf.xlu0
        %v2006 = vpop.trf.xlu0
        %v2007 = vpop.trf.xlu0
        %v2008 = vpop.trf.xlu0
        %v2009 = vpop.trf.xlu0
        %v2010 = vpop.trf.xlu0
        %v2012 = vsel %vm927, %v2003, 0
        %v2015 = vsel %vm927, %v1885, 0
        %2017 = vmatpush.bf16.xpose.msra.mxu0 0
        %2018 = vmatpush.bf16.xpose.msra.mxu0 0
        %2019 = vmatpush.bf16.xpose.msra.mxu0 0
        %2020 = vmatpush.bf16.xpose.msra.mxu0 0
        %2021 = vmatpush.bf16.xpose.msra.mxu0 0
        %2022 = vmatpush.bf16.xpose.msra.mxu0 0
        %2023 = vmatpush.bf16.xpose.msra.mxu0 0
        %2024 = vmatpush.bf16.xpose.msra.mxu0 %v2015
        %2025 = vmatmul.bf16.gmra.mxu0 %v2012
        %v2026 = vpop.f32.mrf.mxu0
        %v2027 = vadd.f32 0.0, %v2026
        %v2028 = vpop.f32.mrf.mxu0
        %2029 = vdwg.mxu0
        %2030 = vxpose.xlu0.b32.start [1/16] %v1922, 128
        %2031 = vxpose.xlu0.b32.cont [2/16] 0.0, 128
        %2032 = vxpose.xlu0.b32.cont [3/16] 0.0, 128
        %2033 = vxpose.xlu0.b32.cont [4/16] 0.0, 128
        %2034 = vxpose.xlu0.b32.cont [5/16] 0.0, 128
        %2035 = vxpose.xlu0.b32.cont [6/16] 0.0, 128
        %2036 = vxpose.xlu0.b32.cont [7/16] 0.0, 128
        %2037 = vxpose.xlu0.b32.cont [8/16] 0.0, 128
        %2038 = vxpose.xlu0.b32.cont [9/16] 0.0, 128
        %2039 = vxpose.xlu0.b32.cont [10/16] 0.0, 128
        %2040 = vxpose.xlu0.b32.cont [11/16] 0.0, 128
        %2041 = vxpose.xlu0.b32.cont [12/16] 0.0, 128
        %2042 = vxpose.xlu0.b32.cont [13/16] 0.0, 128
        %2043 = vxpose.xlu0.b32.cont [14/16] 0.0, 128
        %2044 = vxpose.xlu0.b32.cont [15/16] 0.0, 128
        %2045 = vxpose.xlu0.b32.end [16/16] 0.0, 128
        %v2046 = vpop.trf.xlu0
        %v2047 = vpop.trf.xlu0
        %v2048 = vpop.trf.xlu0
        %v2049 = vpop.trf.xlu0
        %v2050 = vpop.trf.xlu0
        %v2051 = vpop.trf.xlu0
        %v2052 = vpop.trf.xlu0
        %v2053 = vpop.trf.xlu0
        %v2054 = vpop.trf.xlu0
        %v2055 = vpop.trf.xlu0
        %v2056 = vpop.trf.xlu0
        %v2057 = vpop.trf.xlu0
        %v2058 = vpop.trf.xlu0
        %v2059 = vpop.trf.xlu0
        %v2060 = vpop.trf.xlu0
        %v2061 = vpop.trf.xlu0
        %2062 = vxpose.xlu0.b32.start [1/16] %v1957, 128
        %2063 = vxpose.xlu0.b32.cont [2/16] 0.0, 128
        %2064 = vxpose.xlu0.b32.cont [3/16] 0.0, 128
        %2065 = vxpose.xlu0.b32.cont [4/16] 0.0, 128
        %2066 = vxpose.xlu0.b32.cont [5/16] 0.0, 128
        %2067 = vxpose.xlu0.b32.cont [6/16] 0.0, 128
        %2068 = vxpose.xlu0.b32.cont [7/16] 0.0, 128
        %2069 = vxpose.xlu0.b32.cont [8/16] 0.0, 128
        %2070 = vxpose.xlu0.b32.cont [9/16] 0.0, 128
        %2071 = vxpose.xlu0.b32.cont [10/16] 0.0, 128
        %2072 = vxpose.xlu0.b32.cont [11/16] 0.0, 128
        %2073 = vxpose.xlu0.b32.cont [12/16] 0.0, 128
        %2074 = vxpose.xlu0.b32.cont [13/16] 0.0, 128
        %2075 = vxpose.xlu0.b32.cont [14/16] 0.0, 128
        %2076 = vxpose.xlu0.b32.cont [15/16] 0.0, 128
        %2077 = vxpose.xlu0.b32.end [16/16] 0.0, 128
        %v2078 = vpop.trf.xlu0
        %v2079 = vpop.trf.xlu0
        %v2080 = vpop.trf.xlu0
        %v2081 = vpop.trf.xlu0
        %v2082 = vpop.trf.xlu0
        %v2083 = vpop.trf.xlu0
        %v2084 = vpop.trf.xlu0
        %v2085 = vpop.trf.xlu0
        %v2086 = vpop.trf.xlu0
        %v2087 = vpop.trf.xlu0
        %v2088 = vpop.trf.xlu0
        %v2089 = vpop.trf.xlu0
        %v2090 = vpop.trf.xlu0
        %v2091 = vpop.trf.xlu0
        %v2092 = vpop.trf.xlu0
        %v2093 = vpop.trf.xlu0
        %2094 = vxpose.xlu0.b32.start [1/16] %v1992, 128
        %2095 = vxpose.xlu0.b32.cont [2/16] 0.0, 128
        %2096 = vxpose.xlu0.b32.cont [3/16] 0.0, 128
        %2097 = vxpose.xlu0.b32.cont [4/16] 0.0, 128
        %2098 = vxpose.xlu0.b32.cont [5/16] 0.0, 128
        %2099 = vxpose.xlu0.b32.cont [6/16] 0.0, 128
        %2100 = vxpose.xlu0.b32.cont [7/16] 0.0, 128
        %2101 = vxpose.xlu0.b32.cont [8/16] 0.0, 128
        %2102 = vxpose.xlu0.b32.cont [9/16] 0.0, 128
        %2103 = vxpose.xlu0.b32.cont [10/16] 0.0, 128
        %2104 = vxpose.xlu0.b32.cont [11/16] 0.0, 128
        %2105 = vxpose.xlu0.b32.cont [12/16] 0.0, 128
        %2106 = vxpose.xlu0.b32.cont [13/16] 0.0, 128
        %2107 = vxpose.xlu0.b32.cont [14/16] 0.0, 128
        %2108 = vxpose.xlu0.b32.cont [15/16] 0.0, 128
        %2109 = vxpose.xlu0.b32.end [16/16] 0.0, 128
        %v2110 = vpop.trf.xlu0
        %v2111 = vpop.trf.xlu0
        %v2112 = vpop.trf.xlu0
        %v2113 = vpop.trf.xlu0
        %v2114 = vpop.trf.xlu0
        %v2115 = vpop.trf.xlu0
        %v2116 = vpop.trf.xlu0
        %v2117 = vpop.trf.xlu0
        %v2118 = vpop.trf.xlu0
        %v2119 = vpop.trf.xlu0
        %v2120 = vpop.trf.xlu0
        %v2121 = vpop.trf.xlu0
        %v2122 = vpop.trf.xlu0
        %v2123 = vpop.trf.xlu0
        %v2124 = vpop.trf.xlu0
        %v2125 = vpop.trf.xlu0
        %2126 = vxpose.xlu0.b32.start [1/16] %v2027, 128
        %2127 = vxpose.xlu0.b32.cont [2/16] 0.0, 128
        %2128 = vxpose.xlu0.b32.cont [3/16] 0.0, 128
        %2129 = vxpose.xlu0.b32.cont [4/16] 0.0, 128
        %2130 = vxpose.xlu0.b32.cont [5/16] 0.0, 128
        %2131 = vxpose.xlu0.b32.cont [6/16] 0.0, 128
        %2132 = vxpose.xlu0.b32.cont [7/16] 0.0, 128
        %2133 = vxpose.xlu0.b32.cont [8/16] 0.0, 128
        %2134 = vxpose.xlu0.b32.cont [9/16] 0.0, 128
        %2135 = vxpose.xlu0.b32.cont [10/16] 0.0, 128
        %2136 = vxpose.xlu0.b32.cont [11/16] 0.0, 128
        %2137 = vxpose.xlu0.b32.cont [12/16] 0.0, 128
        %2138 = vxpose.xlu0.b32.cont [13/16] 0.0, 128
        %2139 = vxpose.xlu0.b32.cont [14/16] 0.0, 128
        %2140 = vxpose.xlu0.b32.cont [15/16] 0.0, 128
        %2141 = vxpose.xlu0.b32.end [16/16] 0.0, 128
        %v2142 = vpop.trf.xlu0
        %v2143 = vpop.trf.xlu0
        %v2144 = vpop.trf.xlu0
        %v2145 = vpop.trf.xlu0
        %v2146 = vpop.trf.xlu0
        %v2147 = vpop.trf.xlu0
        %v2148 = vpop.trf.xlu0
        %v2149 = vpop.trf.xlu0
        %v2150 = vpop.trf.xlu0
        %v2151 = vpop.trf.xlu0
        %v2152 = vpop.trf.xlu0
        %v2153 = vpop.trf.xlu0
        %v2154 = vpop.trf.xlu0
        %v2155 = vpop.trf.xlu0
        %v2156 = vpop.trf.xlu0
        %v2157 = vpop.trf.xlu0
        %v2158 = vrot.slane %v2110, 4
        %v2159 = vsel %vm565, %v2158, %v2046
        %v2160 = vrot.slane %v2046, 4
        %v2161 = vsel %vm565, %v2110, %v2160
        %v2163 = vunpack.c.l.s4 1983009808
        %v2164 = vunpack.c.0.s8 %v2163
        %v2165 = vperm.slane %v2159, %v2164
        %v2167 = vunpack.c.l.s4 1983009808
        %v2168 = vunpack.c.0.s8 %v2167
        %v2169 = vperm.slane %v2161, %v2168
        %v2170 = vrot.slane %v2142, 4
        %v2171 = vsel %vm565, %v2170, %v2078
        %v2172 = vrot.slane %v2078, 4
        %v2173 = vsel %vm565, %v2142, %v2172
        %v2175 = vunpack.c.l.s4 1983009808
        %v2176 = vunpack.c.0.s8 %v2175
        %v2177 = vperm.slane %v2171, %v2176
        %v2179 = vunpack.c.l.s4 1983009808
        %v2180 = vunpack.c.0.s8 %v2179
        %v2181 = vperm.slane %v2173, %v2180
        %v2182 = vrot.slane %v2177, 4
        %v2183 = vsel %vm565, %v2182, %v2165
        %v2184 = vrot.slane %v2165, 4
        %v2185 = vsel %vm565, %v2177, %v2184
        %v2187 = vunpack.c.l.s4 1934713408
        %v2188 = vunpack.c.0.s8 %v2187
        %v2189 = vperm.slane %v2183, %v2188
        %v2191 = vunpack.c.l.s4 1934713408
        %v2192 = vunpack.c.0.s8 %v2191
        %v2193 = vperm.slane %v2185, %v2192
        %v2194 = vrot.slane %v2181, 4
        %v2195 = vsel %vm565, %v2194, %v2169
        %v2196 = vrot.slane %v2169, 4
        %v2197 = vsel %vm565, %v2181, %v2196
        %v2199 = vunpack.c.l.s4 1934713408
        %v2200 = vunpack.c.0.s8 %v2199
        %v2201 = vperm.slane %v2195, %v2200
        %v2203 = vunpack.c.l.s4 1934713408
        %v2204 = vunpack.c.0.s8 %v2203
        %v2205 = vperm.slane %v2197, %v2204
        %v2206 = vrot.slane %v2189, 4
        %v2207 = vsel %vm565, 0.0, %v2206
        %v2208 = vrot.slane %v2193, 4
        %v2209 = vsel %vm565, 0.0, %v2208
        %v2210 = vrot.slane %v2201, 4
        %v2211 = vsel %vm565, 0.0, %v2210
        %v2212 = vrot.slane %v2205, 4
        %v2213 = vsel %vm565, 0.0, %v2212
        %v2214 = vsel %vm565, %v1380, %v1361
        %v2216 = vunpack.c.l.s4 1983009808
        %v2217 = vunpack.c.0.s8 %v2216
        %v2218 = vperm.slane %v2214, %v2217
        %v2219 = vrot.slane %v1381, 4
        %v2220 = vsel %vm565, %v2219, %v1379
        %v2222 = vunpack.c.l.s4 1983009808
        %v2223 = vunpack.c.0.s8 %v2222
        %v2224 = vperm.slane %v2220, %v2223
        %v2225 = vsel %vm565, %v1384, %v1373
        %v2227 = vunpack.c.l.s4 1983009808
        %v2228 = vunpack.c.0.s8 %v2227
        %v2229 = vperm.slane %v2225, %v2228
        %v2230 = vrot.slane %v1385, 4
        %v2231 = vsel %vm565, %v2230, %v1383
        %v2233 = vunpack.c.l.s4 1983009808
        %v2234 = vunpack.c.0.s8 %v2233
        %v2235 = vperm.slane %v2231, %v2234
        %v2236 = vrot.slane %v2224, 4
        %v2237 = vsel %vm565, %v2236, %v2218
        %v2238 = vrot.slane %v2218, 4
        %v2239 = vsel %vm565, %v2224, %v2238
        %v2241 = vunpack.c.l.s4 1934713408
        %v2242 = vunpack.c.0.s8 %v2241
        %v2243 = vperm.slane %v2237, %v2242
        %v2245 = vunpack.c.l.s4 1934713408
        %v2246 = vunpack.c.0.s8 %v2245
        %v2247 = vperm.slane %v2239, %v2246
        %v2248 = vrot.slane %v2235, 4
        %v2249 = vsel %vm565, %v2248, %v2229
        %v2250 = vrot.slane %v2229, 4
        %v2251 = vsel %vm565, %v2235, %v2250
        %v2253 = vunpack.c.l.s4 1934713408
        %v2254 = vunpack.c.0.s8 %v2253
        %v2255 = vperm.slane %v2249, %v2254
        %v2257 = vunpack.c.l.s4 1934713408
        %v2258 = vunpack.c.0.s8 %v2257
        %v2259 = vperm.slane %v2251, %v2258
        %v2260 = vrot.slane %v2255, 4
        %v2261 = vsel %vm565, %v2260, %v2243
        %v2262 = vrot.slane %v2243, 4
        %v2263 = vsel %vm565, %v2255, %v2262
        %v2264 = vrot.slane %v2259, 4
        %v2265 = vsel %vm565, %v2264, %v2247
        %v2266 = vrot.slane %v2247, 4
        %v2267 = vsel %vm565, %v2259, %v2266
        %2269 = vrot.lane.b32.xlu0 %v2263, 8
        %v2270 = vpop.permute.xlu0 %2269
        %2273 = vrot.lane.b32.xlu0 %v2265, 16
        %v2274 = vpop.permute.xlu0 %2273
        %2277 = vrot.lane.b32.xlu0 %v2267, 24
        %v2278 = vpop.permute.xlu0 %2277
        %v2280 = vsel %vm927, %v2261, %v2270
        %vm2281 = vcmask 130048
        %v2282 = vsel %vm2281, %v2280, %v2274
        %vm2283 = vcmask 195584
        %v2284 = vsel %vm2283, %v2282, %v2278
        %v2285 = vsel %vm565, %v2208, %v2189
        %v2287 = vunpack.c.l.s4 1983009808
        %v2288 = vunpack.c.0.s8 %v2287
        %v2289 = vperm.slane %v2285, %v2288
        %v2290 = vrot.slane %v2209, 4
        %v2291 = vsel %vm565, %v2290, %v2207
        %v2293 = vunpack.c.l.s4 1983009808
        %v2294 = vunpack.c.0.s8 %v2293
        %v2295 = vperm.slane %v2291, %v2294
        %v2296 = vsel %vm565, %v2212, %v2201
        %v2298 = vunpack.c.l.s4 1983009808
        %v2299 = vunpack.c.0.s8 %v2298
        %v2300 = vperm.slane %v2296, %v2299
        %v2301 = vrot.slane %v2213, 4
        %v2302 = vsel %vm565, %v2301, %v2211
        %v2304 = vunpack.c.l.s4 1983009808
        %v2305 = vunpack.c.0.s8 %v2304
        %v2306 = vperm.slane %v2302, %v2305
        %v2307 = vrot.slane %v2295, 4
        %v2308 = vsel %vm565, %v2307, %v2289
        %v2309 = vrot.slane %v2289, 4
        %v2310 = vsel %vm565, %v2295, %v2309
        %v2312 = vunpack.c.l.s4 1934713408
        %v2313 = vunpack.c.0.s8 %v2312
        %v2314 = vperm.slane %v2308, %v2313
        %v2316 = vunpack.c.l.s4 1934713408
        %v2317 = vunpack.c.0.s8 %v2316
        %v2318 = vperm.slane %v2310, %v2317
        %v2319 = vrot.slane %v2306, 4
        %v2320 = vsel %vm565, %v2319, %v2300
        %v2321 = vrot.slane %v2300, 4
        %v2322 = vsel %vm565, %v2306, %v2321
        %v2324 = vunpack.c.l.s4 1934713408
        %v2325 = vunpack.c.0.s8 %v2324
        %v2326 = vperm.slane %v2320, %v2325
        %v2328 = vunpack.c.l.s4 1934713408
        %v2329 = vunpack.c.0.s8 %v2328
        %v2330 = vperm.slane %v2322, %v2329
        %v2331 = vrot.slane %v2326, 4
        %v2332 = vsel %vm565, %v2331, %v2314
        %v2333 = vrot.slane %v2314, 4
        %v2334 = vsel %vm565, %v2326, %v2333
        %v2335 = vrot.slane %v2330, 4
        %v2336 = vsel %vm565, %v2335, %v2318
        %v2337 = vrot.slane %v2318, 4
        %v2338 = vsel %vm565, %v2330, %v2337
        %2340 = vrot.lane.b32.xlu0 %v2334, 8
        %v2341 = vpop.permute.xlu0 %2340
        %2344 = vrot.lane.b32.xlu0 %v2336, 16
        %v2345 = vpop.permute.xlu0 %2344
        %2348 = vrot.lane.b32.xlu0 %v2338, 24
        %v2349 = vpop.permute.xlu0 %2348
        %v2351 = vsel %vm927, %v2332, %v2341
        %v2352 = vsel %vm2281, %v2351, %v2345
        %v2353 = vsel %vm2283, %v2352, %v2349
        %v2354 = vld [vmem:[%s481] sm:$0xf]
        %v2355 = vld [vmem:[%s481 + $0x4] sm:$0xf]
        %v2356 = vld [vmem:[%s481 + $0x8] sm:$0xf]
        %v2357 = vld [vmem:[%s481 + $0xc] sm:$0xf]
        %v2358 = vpack.c.bf16 %v2353, %v2284
        %v2359 = vperm.slane %v511, 1
        %v2364 = vunpack.c.l.b16 %v2354
        %v2365 = vunpack.c.l.b16 %v2355
        %v2366 = vunpack.c.l.b16 %v2356
        %v2367 = vunpack.c.l.b16 %v2357
        %v2368 = vpack.c.b16 %v2365, %v2364
        %v2369 = vpack.c.b16 %v2367, %v2366
        %v2373 = vsel %vm531, %v2358, 0
        %2375 = vmatpush.bf16.msra.mxu0 0
        %2376 = vmatpush.bf16.msra.mxu0 0
        %2377 = vmatpush.bf16.msra.mxu0 0
        %2378 = vmatpush.bf16.msra.mxu0 0
        %2379 = vmatpush.bf16.msra.mxu0 0
        %2380 = vmatpush.bf16.msra.mxu0 0
        %2381 = vmatpush.bf16.msra.mxu0 %v2369
        %2382 = vmatpush.bf16.msra.mxu0 %v2368
        %2383 = vmatmul.bf16.gmra.mxu0 %v2373
        %v2384 = vpop.f32.mrf.mxu0
        %v2385 = vadd.f32 %v2359, %v2384
        %v2386 = vpop.f32.mrf.mxu0
        %v2387 = vadd.f32 %v2359, %v2386
        %2388 = vdwg.mxu0
        %v2389 = vadd.f32 %v2385, %v507
        %v2390 = vadd.f32 %v2387, %v508
        %v2391 = vsel %vm531, %v2389, 0.0
        %2392 = vadd.xlane.f32.xlu0 %v2391
        %v2393 = vpop.xlane.xlu0 %2392
        %v2394 = vsel %vm531, %v2390, 0.0
        %2395 = vadd.xlane.f32.xlu0 %v2394
        %v2396 = vpop.xlane.xlu0 %2395
        %v2397 = vrcp.pop 32.0
        %v2398 = vmul.f32 32.0, %v2397
        %v2399 = vsub.f32 1.0, %v2398
        %v2400 = vmul.f32 %v2397, %v2399
        %v2401 = vadd.f32 %v2397, %v2400
        %vm2402 = vweird.f32 %v2397
        %v2403 = vsel %vm2402, %v2397, %v2401
        %v2404 = vmul.f32 %v2393, %v2403
        %v2405 = vmul.f32 %v2396, %v2403
        %v2406 = vsub.f32 %v2389, %v2404
        %v2407 = vsub.f32 %v2390, %v2405
        %v2408 = vmul.f32 %v2406, %v2406
        %v2409 = vmul.f32 %v2407, %v2407
        %v2410 = vsel %vm531, %v2408, 0.0
        %2411 = vadd.xlane.f32.xlu0 %v2410
        %v2412 = vpop.xlane.xlu0 %2411
        %v2413 = vsel %vm531, %v2409, 0.0
        %2414 = vadd.xlane.f32.xlu0 %v2413
        %v2415 = vpop.xlane.xlu0 %2414
        %v2416 = vmul.f32 %v2412, %v2403
        %v2417 = vmul.f32 %v2415, %v2403
        %v2418 = vadd.f32 %v2416, 1e-05
        %v2419 = vadd.f32 %v2417, 1e-05
        %v2420 = vrsqrt.pop %v2418
        %v2421 = vmul.f32 %v2420, %v2418
        %v2422 = vmul.f32 %v2421, %v2420
        %v2423 = vmul.f32 0.5, %v2422
        %v2424 = vsub.f32 1.5, %v2423
        %v2425 = vmul.f32 %v2420, %v2424
        %vm2426 = vweird.f32 %v2418
        %vm2427 = vweird.f32 %v2420
        %vm2428 = vmor %vm2426, %vm2427
        %v2429 = vsel %vm2428, %v2420, %v2425
        %v2430 = vrsqrt.pop %v2419
        %v2431 = vmul.f32 %v2430, %v2419
        %v2432 = vmul.f32 %v2431, %v2430
        %v2433 = vmul.f32 0.5, %v2432
        %v2434 = vsub.f32 1.5, %v2433
        %v2435 = vmul.f32 %v2430, %v2434
        %vm2436 = vweird.f32 %v2419
        %vm2437 = vweird.f32 %v2430
        %vm2438 = vmor %vm2436, %vm2437
        %v2439 = vsel %vm2438, %v2430, %v2435
        %v2440 = vmul.f32 %v2406, %v2429
        %v2441 = vmul.f32 %v2407, %v2439
        %v2442 = vperm.slane %v511, 2
        %v2443 = vmul.f32 %v2440, %v2442
        %v2444 = vmul.f32 %v2441, %v2442
        %v2445 = vperm.slane %v511, 3
        %v2446 = vadd.f32 %v2443, %v2445
        %v2447 = vadd.f32 %v2444, %v2445
        %v2448 = vld [vmem:[%s486] sm:$0xf]
        %v2449 = vld [vmem:[%s486 + $0x4] sm:$0xf]
        %v2450 = vld [vmem:[%s486 + $0x8] sm:$0xf]
        %v2451 = vld [vmem:[%s486 + $0xc] sm:$0xf]
        %v2452 = vpack.c.bf16 %v2447, %v2446
        %v2453 = vperm.slane %v511, 4
        %v2458 = vunpack.c.l.b16 %v2448
        %v2459 = vunpack.c.l.b16 %v2449
        %v2460 = vunpack.c.l.b16 %v2450
        %v2461 = vunpack.c.l.b16 %v2451
        %v2462 = vpack.c.b16 %v2459, %v2458
        %v2463 = vpack.c.b16 %v2461, %v2460
        %v2467 = vsel %vm531, %v2452, 0
        %2469 = vmatpush.bf16.msra.mxu0 0
        %2470 = vmatpush.bf16.msra.mxu0 0
        %2471 = vmatpush.bf16.msra.mxu0 0
        %2472 = vmatpush.bf16.msra.mxu0 0
        %2473 = vmatpush.bf16.msra.mxu0 0
        %2474 = vmatpush.bf16.msra.mxu0 0
        %2475 = vmatpush.bf16.msra.mxu0 %v2463
        %2476 = vmatpush.bf16.msra.mxu0 %v2462
        %2477 = vmatmul.bf16.gmra.mxu0 %v2467
        %v2478 = vpop.f32.mrf.mxu0
        %v2479 = vadd.f32 %v2453, %v2478
        %v2480 = vpop.f32.mrf.mxu0
        %v2481 = vadd.f32 %v2453, %v2480
        %2482 = vdwg.mxu0
        %v2483 = vld [vmem:[%s401] sm:$0xf]
        %v2484 = vld [vmem:[%s401 + $0x4] sm:$0xf]
        %v2485 = vld [vmem:[%s401 + $0x8] sm:$0xf]
        %v2486 = vld [vmem:[%s401 + $0xc] sm:$0xf]
        %v2487 = vpack.c.bf16 %v510, %v509
        %v2488 = vperm.slane %v511, 5
        %v2493 = vunpack.c.l.b16 %v2483
        %v2494 = vunpack.c.l.b16 %v2484
        %v2495 = vunpack.c.l.b16 %v2485
        %v2496 = vunpack.c.l.b16 %v2486
        %v2497 = vpack.c.b16 %v2494, %v2493
        %v2498 = vpack.c.b16 %v2496, %v2495
        %v2502 = vsel %vm531, %v2487, 0
        %2504 = vmatpush.bf16.msra.mxu0 0
        %2505 = vmatpush.bf16.msra.mxu0 0
        %2506 = vmatpush.bf16.msra.mxu0 0
        %2507 = vmatpush.bf16.msra.mxu0 0
        %2508 = vmatpush.bf16.msra.mxu0 0
        %2509 = vmatpush.bf16.msra.mxu0 0
        %2510 = vmatpush.bf16.msra.mxu0 %v2498
        %2511 = vmatpush.bf16.msra.mxu0 %v2497
        %2512 = vmatmul.bf16.gmra.mxu0 %v2502
        %v2513 = vpop.f32.mrf.mxu0
        %v2514 = vadd.f32 %v2488, %v2513
        %v2515 = vpop.f32.mrf.mxu0
        %v2516 = vadd.f32 %v2488, %v2515
        %2517 = vdwg.mxu0
        %2519 = vrot.lane.b32.xlu0 %v2479, 120
        %v2520 = vpop.permute.xlu0 %2519
        %2522 = vrot.lane.b32.xlu0 %v2479, 112
        %v2523 = vpop.permute.xlu0 %2522
        %2525 = vrot.lane.b32.xlu0 %v2479, 104
        %v2526 = vpop.permute.xlu0 %2525
        %v2528 = vrot.slane %v2523, 4
        %v2529 = vsel %vm565, %v2528, %v2479
        %v2530 = vrot.slane %v2479, 4
        %v2531 = vsel %vm565, %v2523, %v2530
        %v2533 = vunpack.c.l.s4 1983009808
        %v2534 = vunpack.c.0.s8 %v2533
        %v2535 = vperm.slane %v2529, %v2534
        %v2537 = vunpack.c.l.s4 1983009808
        %v2538 = vunpack.c.0.s8 %v2537
        %v2539 = vperm.slane %v2531, %v2538
        %v2540 = vrot.slane %v2526, 4
        %v2541 = vsel %vm565, %v2540, %v2520
        %v2542 = vrot.slane %v2520, 4
        %v2543 = vsel %vm565, %v2526, %v2542
        %v2545 = vunpack.c.l.s4 1983009808
        %v2546 = vunpack.c.0.s8 %v2545
        %v2547 = vperm.slane %v2541, %v2546
        %v2549 = vunpack.c.l.s4 1983009808
        %v2550 = vunpack.c.0.s8 %v2549
        %v2551 = vperm.slane %v2543, %v2550
        %v2552 = vrot.slane %v2547, 4
        %v2553 = vsel %vm565, %v2552, %v2535
        %v2554 = vrot.slane %v2535, 4
        %v2555 = vsel %vm565, %v2547, %v2554
        %v2557 = vunpack.c.l.s4 1934713408
        %v2558 = vunpack.c.0.s8 %v2557
        %v2559 = vperm.slane %v2553, %v2558
        %v2561 = vunpack.c.l.s4 1934713408
        %v2562 = vunpack.c.0.s8 %v2561
        %v2563 = vperm.slane %v2555, %v2562
        %v2564 = vrot.slane %v2551, 4
        %v2565 = vsel %vm565, %v2564, %v2539
        %v2566 = vrot.slane %v2539, 4
        %v2567 = vsel %vm565, %v2551, %v2566
        %v2569 = vunpack.c.l.s4 1934713408
        %v2570 = vunpack.c.0.s8 %v2569
        %v2571 = vperm.slane %v2565, %v2570
        %v2573 = vunpack.c.l.s4 1934713408
        %v2574 = vunpack.c.0.s8 %v2573
        %v2575 = vperm.slane %v2567, %v2574
        %v2576 = vrot.slane %v2559, 4
        %v2577 = vsel %vm565, 0.0, %v2576
        %v2578 = vrot.slane %v2563, 4
        %v2579 = vsel %vm565, 0.0, %v2578
        %v2580 = vrot.slane %v2571, 4
        %v2581 = vsel %vm565, 0.0, %v2580
        %v2582 = vrot.slane %v2575, 4
        %v2583 = vsel %vm565, 0.0, %v2582
        %v2584 = vsel %vm565, %v2578, %v2559
        %v2586 = vunpack.c.l.s4 1983009808
        %v2587 = vunpack.c.0.s8 %v2586
        %v2588 = vperm.slane %v2584, %v2587
        %v2589 = vrot.slane %v2579, 4
        %v2590 = vsel %vm565, %v2589, %v2577
        %v2592 = vunpack.c.l.s4 1983009808
        %v2593 = vunpack.c.0.s8 %v2592
        %v2594 = vperm.slane %v2590, %v2593
        %v2595 = vsel %vm565, %v2582, %v2571
        %v2597 = vunpack.c.l.s4 1983009808
        %v2598 = vunpack.c.0.s8 %v2597
        %v2599 = vperm.slane %v2595, %v2598
        %v2600 = vrot.slane %v2583, 4
        %v2601 = vsel %vm565, %v2600, %v2581
        %v2603 = vunpack.c.l.s4 1983009808
        %v2604 = vunpack.c.0.s8 %v2603
        %v2605 = vperm.slane %v2601, %v2604
        %v2606 = vrot.slane %v2594, 4
        %v2607 = vsel %vm565, %v2606, %v2588
        %v2608 = vrot.slane %v2588, 4
        %v2609 = vsel %vm565, %v2594, %v2608
        %v2611 = vunpack.c.l.s4 1934713408
        %v2612 = vunpack.c.0.s8 %v2611
        %v2613 = vperm.slane %v2607, %v2612
        %v2615 = vunpack.c.l.s4 1934713408
        %v2616 = vunpack.c.0.s8 %v2615
        %v2617 = vperm.slane %v2609, %v2616
        %v2618 = vrot.slane %v2605, 4
        %v2619 = vsel %vm565, %v2618, %v2599
        %v2620 = vrot.slane %v2599, 4
        %v2621 = vsel %vm565, %v2605, %v2620
        %v2623 = vunpack.c.l.s4 1934713408
        %v2624 = vunpack.c.0.s8 %v2623
        %v2625 = vperm.slane %v2619, %v2624
        %v2627 = vunpack.c.l.s4 1934713408
        %v2628 = vunpack.c.0.s8 %v2627
        %v2629 = vperm.slane %v2621, %v2628
        %v2630 = vrot.slane %v2625, 4
        %v2631 = vsel %vm565, %v2630, %v2613
        %v2632 = vrot.slane %v2613, 4
        %v2633 = vsel %vm565, %v2625, %v2632
        %v2634 = vrot.slane %v2629, 4
        %v2635 = vsel %vm565, %v2634, %v2617
        %v2636 = vrot.slane %v2617, 4
        %v2637 = vsel %vm565, %v2629, %v2636
        %2639 = vrot.lane.b32.xlu0 %v2514, 120
        %v2640 = vpop.permute.xlu0 %2639
        %2642 = vrot.lane.b32.xlu0 %v2514, 112
        %v2643 = vpop.permute.xlu0 %2642
        %2645 = vrot.lane.b32.xlu0 %v2514, 104
        %v2646 = vpop.permute.xlu0 %2645
        %v2648 = vrot.slane %v2643, 4
        %v2649 = vsel %vm565, %v2648, %v2514
        %v2650 = vrot.slane %v2514, 4
        %v2651 = vsel %vm565, %v2643, %v2650
        %v2653 = vunpack.c.l.s4 1983009808
        %v2654 = vunpack.c.0.s8 %v2653
        %v2655 = vperm.slane %v2649, %v2654
        %v2657 = vunpack.c.l.s4 1983009808
        %v2658 = vunpack.c.0.s8 %v2657
        %v2659 = vperm.slane %v2651, %v2658
        %v2660 = vrot.slane %v2646, 4
        %v2661 = vsel %vm565, %v2660, %v2640
        %v2662 = vrot.slane %v2640, 4
        %v2663 = vsel %vm565, %v2646, %v2662
        %v2665 = vunpack.c.l.s4 1983009808
        %v2666 = vunpack.c.0.s8 %v2665
        %v2667 = vperm.slane %v2661, %v2666
        %v2669 = vunpack.c.l.s4 1983009808
        %v2670 = vunpack.c.0.s8 %v2669
        %v2671 = vperm.slane %v2663, %v2670
        %v2672 = vrot.slane %v2667, 4
        %v2673 = vsel %vm565, %v2672, %v2655
        %v2674 = vrot.slane %v2655, 4
        %v2675 = vsel %vm565, %v2667, %v2674
        %v2677 = vunpack.c.l.s4 1934713408
        %v2678 = vunpack.c.0.s8 %v2677
        %v2679 = vperm.slane %v2673, %v2678
        %v2681 = vunpack.c.l.s4 1934713408
        %v2682 = vunpack.c.0.s8 %v2681
        %v2683 = vperm.slane %v2675, %v2682
        %v2684 = vrot.slane %v2671, 4
        %v2685 = vsel %vm565, %v2684, %v2659
        %v2686 = vrot.slane %v2659, 4
        %v2687 = vsel %vm565, %v2671, %v2686
        %v2689 = vunpack.c.l.s4 1934713408
        %v2690 = vunpack.c.0.s8 %v2689
        %v2691 = vperm.slane %v2685, %v2690
        %v2693 = vunpack.c.l.s4 1934713408
        %v2694 = vunpack.c.0.s8 %v2693
        %v2695 = vperm.slane %v2687, %v2694
        %v2696 = vrot.slane %v2679, 4
        %v2697 = vsel %vm565, 0.0, %v2696
        %v2698 = vrot.slane %v2683, 4
        %v2699 = vsel %vm565, 0.0, %v2698
        %v2700 = vrot.slane %v2691, 4
        %v2701 = vsel %vm565, 0.0, %v2700
        %v2702 = vrot.slane %v2695, 4
        %v2703 = vsel %vm565, 0.0, %v2702
        %v2704 = vsel %vm565, %v2698, %v2679
        %v2706 = vunpack.c.l.s4 1983009808
        %v2707 = vunpack.c.0.s8 %v2706
        %v2708 = vperm.slane %v2704, %v2707
        %v2709 = vrot.slane %v2699, 4
        %v2710 = vsel %vm565, %v2709, %v2697
        %v2712 = vunpack.c.l.s4 1983009808
        %v2713 = vunpack.c.0.s8 %v2712
        %v2714 = vperm.slane %v2710, %v2713
        %v2715 = vsel %vm565, %v2702, %v2691
        %v2717 = vunpack.c.l.s4 1983009808
        %v2718 = vunpack.c.0.s8 %v2717
        %v2719 = vperm.slane %v2715, %v2718
        %v2720 = vrot.slane %v2703, 4
        %v2721 = vsel %vm565, %v2720, %v2701
        %v2723 = vunpack.c.l.s4 1983009808
        %v2724 = vunpack.c.0.s8 %v2723
        %v2725 = vperm.slane %v2721, %v2724
        %v2726 = vrot.slane %v2714, 4
        %v2727 = vsel %vm565, %v2726, %v2708
        %v2728 = vrot.slane %v2708, 4
        %v2729 = vsel %vm565, %v2714, %v2728
        %v2731 = vunpack.c.l.s4 1934713408
        %v2732 = vunpack.c.0.s8 %v2731
        %v2733 = vperm.slane %v2727, %v2732
        %v2735 = vunpack.c.l.s4 1934713408
        %v2736 = vunpack.c.0.s8 %v2735
        %v2737 = vperm.slane %v2729, %v2736
        %v2738 = vrot.slane %v2725, 4
        %v2739 = vsel %vm565, %v2738, %v2719
        %v2740 = vrot.slane %v2719, 4
        %v2741 = vsel %vm565, %v2725, %v2740
        %v2743 = vunpack.c.l.s4 1934713408
        %v2744 = vunpack.c.0.s8 %v2743
        %v2745 = vperm.slane %v2739, %v2744
        %v2747 = vunpack.c.l.s4 1934713408
        %v2748 = vunpack.c.0.s8 %v2747
        %v2749 = vperm.slane %v2741, %v2748
        %v2750 = vrot.slane %v2745, 4
        %v2751 = vsel %vm565, %v2750, %v2733
        %v2752 = vrot.slane %v2733, 4
        %v2753 = vsel %vm565, %v2745, %v2752
        %v2754 = vrot.slane %v2749, 4
        %v2755 = vsel %vm565, %v2754, %v2737
        %v2756 = vrot.slane %v2737, 4
        %v2757 = vsel %vm565, %v2749, %v2756
        %2758 = vrot.lane.b32.xlu0 %v2514, 96
        %v2759 = vpop.permute.xlu0 %2758
        %2760 = vrot.lane.b32.xlu0 %v2640, 96
        %v2761 = vpop.permute.xlu0 %2760
        %2762 = vrot.lane.b32.xlu0 %v2643, 96
        %v2763 = vpop.permute.xlu0 %2762
        %2764 = vrot.lane.b32.xlu0 %v2646, 96
        %v2765 = vpop.permute.xlu0 %2764
        %v2770 = vrot.slane %v2763, 4
        %v2771 = vsel %vm565, %v2770, %v2759
        %v2772 = vrot.slane %v2759, 4
        %v2773 = vsel %vm565, %v2763, %v2772
        %v2775 = vunpack.c.l.s4 1983009808
        %v2776 = vunpack.c.0.s8 %v2775
        %v2777 = vperm.slane %v2771, %v2776
        %v2779 = vunpack.c.l.s4 1983009808
        %v2780 = vunpack.c.0.s8 %v2779
        %v2781 = vperm.slane %v2773, %v2780
        %v2782 = vrot.slane %v2765, 4
        %v2783 = vsel %vm565, %v2782, %v2761
        %v2784 = vrot.slane %v2761, 4
        %v2785 = vsel %vm565, %v2765, %v2784
        %v2787 = vunpack.c.l.s4 1983009808
        %v2788 = vunpack.c.0.s8 %v2787
        %v2789 = vperm.slane %v2783, %v2788
        %v2791 = vunpack.c.l.s4 1983009808
        %v2792 = vunpack.c.0.s8 %v2791
        %v2793 = vperm.slane %v2785, %v2792
        %v2794 = vrot.slane %v2789, 4
        %v2795 = vsel %vm565, %v2794, %v2777
        %v2796 = vrot.slane %v2777, 4
        %v2797 = vsel %vm565, %v2789, %v2796
        %v2799 = vunpack.c.l.s4 1934713408
        %v2800 = vunpack.c.0.s8 %v2799
        %v2801 = vperm.slane %v2795, %v2800
        %v2803 = vunpack.c.l.s4 1934713408
        %v2804 = vunpack.c.0.s8 %v2803
        %v2805 = vperm.slane %v2797, %v2804
        %v2806 = vrot.slane %v2793, 4
        %v2807 = vsel %vm565, %v2806, %v2781
        %v2808 = vrot.slane %v2781, 4
        %v2809 = vsel %vm565, %v2793, %v2808
        %v2811 = vunpack.c.l.s4 1934713408
        %v2812 = vunpack.c.0.s8 %v2811
        %v2813 = vperm.slane %v2807, %v2812
        %v2815 = vunpack.c.l.s4 1934713408
        %v2816 = vunpack.c.0.s8 %v2815
        %v2817 = vperm.slane %v2809, %v2816
        %v2818 = vrot.slane %v2801, 4
        %v2819 = vsel %vm565, 0.0, %v2818
        %v2820 = vrot.slane %v2805, 4
        %v2821 = vsel %vm565, 0.0, %v2820
        %v2822 = vrot.slane %v2813, 4
        %v2823 = vsel %vm565, 0.0, %v2822
        %v2824 = vrot.slane %v2817, 4
        %v2825 = vsel %vm565, 0.0, %v2824
        %v2826 = vsel %vm565, %v2820, %v2801
        %v2828 = vunpack.c.l.s4 1983009808
        %v2829 = vunpack.c.0.s8 %v2828
        %v2830 = vperm.slane %v2826, %v2829
        %v2831 = vrot.slane %v2821, 4
        %v2832 = vsel %vm565, %v2831, %v2819
        %v2834 = vunpack.c.l.s4 1983009808
        %v2835 = vunpack.c.0.s8 %v2834
        %v2836 = vperm.slane %v2832, %v2835
        %v2837 = vsel %vm565, %v2824, %v2813
        %v2839 = vunpack.c.l.s4 1983009808
        %v2840 = vunpack.c.0.s8 %v2839
        %v2841 = vperm.slane %v2837, %v2840
        %v2842 = vrot.slane %v2825, 4
        %v2843 = vsel %vm565, %v2842, %v2823
        %v2845 = vunpack.c.l.s4 1983009808
        %v2846 = vunpack.c.0.s8 %v2845
        %v2847 = vperm.slane %v2843, %v2846
        %v2848 = vrot.slane %v2836, 4
        %v2849 = vsel %vm565, %v2848, %v2830
        %v2850 = vrot.slane %v2830, 4
        %v2851 = vsel %vm565, %v2836, %v2850
        %v2853 = vunpack.c.l.s4 1934713408
        %v2854 = vunpack.c.0.s8 %v2853
        %v2855 = vperm.slane %v2849, %v2854
        %v2857 = vunpack.c.l.s4 1934713408
        %v2858 = vunpack.c.0.s8 %v2857
        %v2859 = vperm.slane %v2851, %v2858
        %v2860 = vrot.slane %v2847, 4
        %v2861 = vsel %vm565, %v2860, %v2841
        %v2862 = vrot.slane %v2841, 4
        %v2863 = vsel %vm565, %v2847, %v2862
        %v2865 = vunpack.c.l.s4 1934713408
        %v2866 = vunpack.c.0.s8 %v2865
        %v2867 = vperm.slane %v2861, %v2866
        %v2869 = vunpack.c.l.s4 1934713408
        %v2870 = vunpack.c.0.s8 %v2869
        %v2871 = vperm.slane %v2863, %v2870
        %v2872 = vrot.slane %v2867, 4
        %v2873 = vsel %vm565, %v2872, %v2855
        %v2874 = vrot.slane %v2855, 4
        %v2875 = vsel %vm565, %v2867, %v2874
        %v2876 = vrot.slane %v2871, 4
        %v2877 = vsel %vm565, %v2876, %v2859
        %v2878 = vrot.slane %v2859, 4
        %v2879 = vsel %vm565, %v2871, %v2878
        %v2880 = vpack.c.bf16 %v2631, %v2631
        %v2881 = vpack.c.bf16 %v2633, %v2633
        %v2882 = vpack.c.bf16 %v2635, %v2635
        %v2883 = vpack.c.bf16 %v2637, %v2637
        %v2884 = vpack.c.bf16 %v2751, %v2751
        %v2885 = vpack.c.bf16 %v2753, %v2753
        %v2886 = vpack.c.bf16 %v2755, %v2755
        %v2887 = vpack.c.bf16 %v2757, %v2757
        %v2889 = vsel %vm927, %v2880, 0
        %v2892 = vsel %vm927, %v2884, 0
        %2894 = vmatpush.bf16.xpose.msra.mxu0 0
        %2895 = vmatpush.bf16.xpose.msra.mxu0 0
        %2896 = vmatpush.bf16.xpose.msra.mxu0 0
        %2897 = vmatpush.bf16.xpose.msra.mxu0 0
        %2898 = vmatpush.bf16.xpose.msra.mxu0 0
        %2899 = vmatpush.bf16.xpose.msra.mxu0 0
        %2900 = vmatpush.bf16.xpose.msra.mxu0 0
        %2901 = vmatpush.bf16.xpose.msra.mxu0 %v2892
        %2902 = vmatmul.bf16.gmra.mxu0 %v2889
        %v2903 = vpop.f32.mrf.mxu0
        %v2904 = vadd.f32 0.0, %v2903
        %v2905 = vpop.f32.mrf.mxu0
        %2906 = vdwg.mxu0
        %v2908 = vsel %vm927, %v2881, 0
        %v2911 = vsel %vm927, %v2885, 0
        %2913 = vmatpush.bf16.xpose.msra.mxu0 0
        %2914 = vmatpush.bf16.xpose.msra.mxu0 0
        %2915 = vmatpush.bf16.xpose.msra.mxu0 0
        %2916 = vmatpush.bf16.xpose.msra.mxu0 0
        %2917 = vmatpush.bf16.xpose.msra.mxu0 0
        %2918 = vmatpush.bf16.xpose.msra.mxu0 0
        %2919 = vmatpush.bf16.xpose.msra.mxu0 0
        %2920 = vmatpush.bf16.xpose.msra.mxu0 %v2911
        %2921 = vmatmul.bf16.gmra.mxu0 %v2908
        %v2922 = vpop.f32.mrf.mxu0
        %v2923 = vadd.f32 0.0, %v2922
        %v2924 = vpop.f32.mrf.mxu0
        %2925 = vdwg.mxu0
        %v2927 = vsel %vm927, %v2882, 0
        %v2930 = vsel %vm927, %v2886, 0
        %2932 = vmatpush.bf16.xpose.msra.mxu0 0
        %2933 = vmatpush.bf16.xpose.msra.mxu0 0
        %2934 = vmatpush.bf16.xpose.msra.mxu0 0
        %2935 = vmatpush.bf16.xpose.msra.mxu0 0
        %2936 = vmatpush.bf16.xpose.msra.mxu0 0
        %2937 = vmatpush.bf16.xpose.msra.mxu0 0
        %2938 = vmatpush.bf16.xpose.msra.mxu0 0
        %2939 = vmatpush.bf16.xpose.msra.mxu0 %v2930
        %2940 = vmatmul.bf16.gmra.mxu0 %v2927
        %v2941 = vpop.f32.mrf.mxu0
        %v2942 = vadd.f32 0.0, %v2941
        %v2943 = vpop.f32.mrf.mxu0
        %2944 = vdwg.mxu0
        %v2946 = vsel %vm927, %v2883, 0
        %v2949 = vsel %vm927, %v2887, 0
        %2951 = vmatpush.bf16.xpose.msra.mxu0 0
        %2952 = vmatpush.bf16.xpose.msra.mxu0 0
        %2953 = vmatpush.bf16.xpose.msra.mxu0 0
        %2954 = vmatpush.bf16.xpose.msra.mxu0 0
        %2955 = vmatpush.bf16.xpose.msra.mxu0 0
        %2956 = vmatpush.bf16.xpose.msra.mxu0 0
        %2957 = vmatpush.bf16.xpose.msra.mxu0 0
        %2958 = vmatpush.bf16.xpose.msra.mxu0 %v2949
        %2959 = vmatmul.bf16.gmra.mxu0 %v2946
        %v2960 = vpop.f32.mrf.mxu0
        %v2961 = vadd.f32 0.0, %v2960
        %v2962 = vpop.f32.mrf.mxu0
        %2963 = vdwg.mxu0
        %v2964 = vsel %vm927, %v2904, -inf
        %2965 = vmax.xlane.f32.xlu0 %v2964
        %v2966 = vpop.xlane.xlu0 %2965
        %v2967 = vsel %vm927, %v2923, -inf
        %2968 = vmax.xlane.f32.xlu0 %v2967
        %v2969 = vpop.xlane.xlu0 %2968
        %v2970 = vsel %vm927, %v2942, -inf
        %2971 = vmax.xlane.f32.xlu0 %v2970
        %v2972 = vpop.xlane.xlu0 %2971
        %v2973 = vsel %vm927, %v2961, -inf
        %2974 = vmax.xlane.f32.xlu0 %v2973
        %v2975 = vpop.xlane.xlu0 %2974
        %v2976 = vsub.f32 %v2904, %v2966
        %v2977 = vsub.f32 %v2923, %v2969
        %v2978 = vsub.f32 %v2942, %v2972
        %v2979 = vsub.f32 %v2961, %v2975
        %v2980 = vmul.f32 %v2976, 1.442695
        %v2981 = vpow.pop %v2980
        %v2982 = vmul.f32 %v2977, 1.442695
        %v2983 = vpow.pop %v2982
        %v2984 = vmul.f32 %v2978, 1.442695
        %v2985 = vpow.pop %v2984
        %v2986 = vmul.f32 %v2979, 1.442695
        %v2987 = vpow.pop %v2986
        %v2988 = vsel %vm927, %v2981, 0.0
        %2989 = vadd.xlane.f32.xlu0 %v2988
        %v2990 = vpop.xlane.xlu0 %2989
        %v2991 = vsel %vm927, %v2983, 0.0
        %2992 = vadd.xlane.f32.xlu0 %v2991
        %v2993 = vpop.xlane.xlu0 %2992
        %v2994 = vsel %vm927, %v2985, 0.0
        %2995 = vadd.xlane.f32.xlu0 %v2994
        %v2996 = vpop.xlane.xlu0 %2995
        %v2997 = vsel %vm927, %v2987, 0.0
        %2998 = vadd.xlane.f32.xlu0 %v2997
        %v2999 = vpop.xlane.xlu0 %2998
        %v3000 = vrcp.pop %v2990
        %v3001 = vrcp.pop %v2993
        %v3002 = vrcp.pop %v2996
        %v3003 = vrcp.pop %v2999
        %v3004 = vmul.f32 %v2981, %v3000
        %v3005 = vmul.f32 %v2983, %v3001
        %v3006 = vmul.f32 %v2985, %v3002
        %v3007 = vmul.f32 %v2987, %v3003
        %v3008 = vpack.c.bf16 %v3004, %v3004
        %v3009 = vpack.c.bf16 %v3005, %v3005
        %v3010 = vpack.c.bf16 %v3006, %v3006
        %v3011 = vpack.c.bf16 %v3007, %v3007
        %v3012 = vpack.c.bf16 %v2873, %v2873
        %v3013 = vpack.c.bf16 %v2875, %v2875
        %v3014 = vpack.c.bf16 %v2877, %v2877
        %v3015 = vpack.c.bf16 %v2879, %v2879
        %3016 = vxpose.xlu0.c.b16.start [1/8] %v3012, 128
        %3017 = vxpose.xlu0.c.b16.cont [2/8] 0, 128
        %3018 = vxpose.xlu0.c.b16.cont [3/8] 0, 128
        %3019 = vxpose.xlu0.c.b16.cont [4/8] 0, 128
        %3020 = vxpose.xlu0.c.b16.cont [5/8] 0, 128
        %3021 = vxpose.xlu0.c.b16.cont [6/8] 0, 128
        %3022 = vxpose.xlu0.c.b16.cont [7/8] 0, 128
        %3023 = vxpose.xlu0.c.b16.end [8/8] 0, 128
        %v3024 = vpop.trf.xlu0
        %v3025 = vpop.trf.xlu0
        %v3026 = vpop.trf.xlu0
        %v3027 = vpop.trf.xlu0
        %v3028 = vpop.trf.xlu0
        %v3029 = vpop.trf.xlu0
        %v3030 = vpop.trf.xlu0
        %v3031 = vpop.trf.xlu0
        %v3033 = vsel %vm927, %v3024, 0
        %v3036 = vsel %vm927, %v3008, 0
        %3038 = vmatpush.bf16.xpose.msra.mxu0 0
        %3039 = vmatpush.bf16.xpose.msra.mxu0 0
        %3040 = vmatpush.bf16.xpose.msra.mxu0 0
        %3041 = vmatpush.bf16.xpose.msra.mxu0 0
        %3042 = vmatpush.bf16.xpose.msra.mxu0 0
        %3043 = vmatpush.bf16.xpose.msra.mxu0 0
        %3044 = vmatpush.bf16.xpose.msra.mxu0 0
        %3045 = vmatpush.bf16.xpose.msra.mxu0 %v3036
        %3046 = vmatmul.bf16.gmra.mxu0 %v3033
        %v3047 = vpop.f32.mrf.mxu0
        %v3048 = vadd.f32 0.0, %v3047
        %v3049 = vpop.f32.mrf.mxu0
        %3050 = vdwg.mxu0
        %3051 = vxpose.xlu0.c.b16.start [1/8] %v3013, 128
        %3052 = vxpose.xlu0.c.b16.cont [2/8] 0, 128
        %3053 = vxpose.xlu0.c.b16.cont [3/8] 0, 128
        %3054 = vxpose.xlu0.c.b16.cont [4/8] 0, 128
        %3055 = vxpose.xlu0.c.b16.cont [5/8] 0, 128
        %3056 = vxpose.xlu0.c.b16.cont [6/8] 0, 128
        %3057 = vxpose.xlu0.c.b16.cont [7/8] 0, 128
        %3058 = vxpose.xlu0.c.b16.end [8/8] 0, 128
        %v3059 = vpop.trf.xlu0
        %v3060 = vpop.trf.xlu0
        %v3061 = vpop.trf.xlu0
        %v3062 = vpop.trf.xlu0
        %v3063 = vpop.trf.xlu0
        %v3064 = vpop.trf.xlu0
        %v3065 = vpop.trf.xlu0
        %v3066 = vpop.trf.xlu0
        %v3068 = vsel %vm927, %v3059, 0
        %v3071 = vsel %vm927, %v3009, 0
        %3073 = vmatpush.bf16.xpose.msra.mxu0 0
        %3074 = vmatpush.bf16.xpose.msra.mxu0 0
        %3075 = vmatpush.bf16.xpose.msra.mxu0 0
        %3076 = vmatpush.bf16.xpose.msra.mxu0 0
        %3077 = vmatpush.bf16.xpose.msra.mxu0 0
        %3078 = vmatpush.bf16.xpose.msra.mxu0 0
        %3079 = vmatpush.bf16.xpose.msra.mxu0 0
        %3080 = vmatpush.bf16.xpose.msra.mxu0 %v3071
        %3081 = vmatmul.bf16.gmra.mxu0 %v3068
        %v3082 = vpop.f32.mrf.mxu0
        %v3083 = vadd.f32 0.0, %v3082
        %v3084 = vpop.f32.mrf.mxu0
        %3085 = vdwg.mxu0
        %3086 = vxpose.xlu0.c.b16.start [1/8] %v3014, 128
        %3087 = vxpose.xlu0.c.b16.cont [2/8] 0, 128
        %3088 = vxpose.xlu0.c.b16.cont [3/8] 0, 128
        %3089 = vxpose.xlu0.c.b16.cont [4/8] 0, 128
        %3090 = vxpose.xlu0.c.b16.cont [5/8] 0, 128
        %3091 = vxpose.xlu0.c.b16.cont [6/8] 0, 128
        %3092 = vxpose.xlu0.c.b16.cont [7/8] 0, 128
        %3093 = vxpose.xlu0.c.b16.end [8/8] 0, 128
        %v3094 = vpop.trf.xlu0
        %v3095 = vpop.trf.xlu0
        %v3096 = vpop.trf.xlu0
        %v3097 = vpop.trf.xlu0
        %v3098 = vpop.trf.xlu0
        %v3099 = vpop.trf.xlu0
        %v3100 = vpop.trf.xlu0
        %v3101 = vpop.trf.xlu0
        %v3103 = vsel %vm927, %v3094, 0
        %v3106 = vsel %vm927, %v3010, 0
        %3108 = vmatpush.bf16.xpose.msra.mxu0 0
        %3109 = vmatpush.bf16.xpose.msra.mxu0 0
        %3110 = vmatpush.bf16.xpose.msra.mxu0 0
        %3111 = vmatpush.bf16.xpose.msra.mxu0 0
        %3112 = vmatpush.bf16.xpose.msra.mxu0 0
        %3113 = vmatpush.bf16.xpose.msra.mxu0 0
        %3114 = vmatpush.bf16.xpose.msra.mxu0 0
        %3115 = vmatpush.bf16.xpose.msra.mxu0 %v3106
        %3116 = vmatmul.bf16.gmra.mxu0 %v3103
        %v3117 = vpop.f32.mrf.mxu0
        %v3118 = vadd.f32 0.0, %v3117
        %v3119 = vpop.f32.mrf.mxu0
        %3120 = vdwg.mxu0
        %3121 = vxpose.xlu0.c.b16.start [1/8] %v3015, 128
        %3122 = vxpose.xlu0.c.b16.cont [2/8] 0, 128
        %3123 = vxpose.xlu0.c.b16.cont [3/8] 0, 128
        %3124 = vxpose.xlu0.c.b16.cont [4/8] 0, 128
        %3125 = vxpose.xlu0.c.b16.cont [5/8] 0, 128
        %3126 = vxpose.xlu0.c.b16.cont [6/8] 0, 128
        %3127 = vxpose.xlu0.c.b16.cont [7/8] 0, 128
        %3128 = vxpose.xlu0.c.b16.end [8/8] 0, 128
        %v3129 = vpop.trf.xlu0
        %v3130 = vpop.trf.xlu0
        %v3131 = vpop.trf.xlu0
        %v3132 = vpop.trf.xlu0
        %v3133 = vpop.trf.xlu0
        %v3134 = vpop.trf.xlu0
        %v3135 = vpop.trf.xlu0
        %v3136 = vpop.trf.xlu0
        %v3138 = vsel %vm927, %v3129, 0
        %v3141 = vsel %vm927, %v3011, 0
        %3143 = vmatpush.bf16.xpose.msra.mxu0 0
        %3144 = vmatpush.bf16.xpose.msra.mxu0 0
        %3145 = vmatpush.bf16.xpose.msra.mxu0 0
        %3146 = vmatpush.bf16.xpose.msra.mxu0 0
        %3147 = vmatpush.bf16.xpose.msra.mxu0 0
        %3148 = vmatpush.bf16.xpose.msra.mxu0 0
        %3149 = vmatpush.bf16.xpose.msra.mxu0 0
        %3150 = vmatpush.bf16.xpose.msra.mxu0 %v3141
        %3151 = vmatmul.bf16.gmra.mxu0 %v3138
        %v3152 = vpop.f32.mrf.mxu0
        %v3153 = vadd.f32 0.0, %v3152
        %v3154 = vpop.f32.mrf.mxu0
        %3155 = vdwg.mxu0
        %3156 = vxpose.xlu0.b32.start [1/16] %v3048, 128
        %3157 = vxpose.xlu0.b32.cont [2/16] 0.0, 128
        %3158 = vxpose.xlu0.b32.cont [3/16] 0.0, 128
        %3159 = vxpose.xlu0.b32.cont [4/16] 0.0, 128
        %3160 = vxpose.xlu0.b32.cont [5/16] 0.0, 128
        %3161 = vxpose.xlu0.b32.cont [6/16] 0.0, 128
        %3162 = vxpose.xlu0.b32.cont [7/16] 0.0, 128
        %3163 = vxpose.xlu0.b32.cont [8/16] 0.0, 128
        %3164 = vxpose.xlu0.b32.cont [9/16] 0.0, 128
        %3165 = vxpose.xlu0.b32.cont [10/16] 0.0, 128
        %3166 = vxpose.xlu0.b32.cont [11/16] 0.0, 128
        %3167 = vxpose.xlu0.b32.cont [12/16] 0.0, 128
        %3168 = vxpose.xlu0.b32.cont [13/16] 0.0, 128
        %3169 = vxpose.xlu0.b32.cont [14/16] 0.0, 128
        %3170 = vxpose.xlu0.b32.cont [15/16] 0.0, 128
        %3171 = vxpose.xlu0.b32.end [16/16] 0.0, 128
        %v3172 = vpop.trf.xlu0
        %v3173 = vpop.trf.xlu0
        %v3174 = vpop.trf.xlu0
        %v3175 = vpop.trf.xlu0
        %v3176 = vpop.trf.xlu0
        %v3177 = vpop.trf.xlu0
        %v3178 = vpop.trf.xlu0
        %v3179 = vpop.trf.xlu0
        %v3180 = vpop.trf.xlu0
        %v3181 = vpop.trf.xlu0
        %v3182 = vpop.trf.xlu0
        %v3183 = vpop.trf.xlu0
        %v3184 = vpop.trf.xlu0
        %v3185 = vpop.trf.xlu0
        %v3186 = vpop.trf.xlu0
        %v3187 = vpop.trf.xlu0
        %3188 = vxpose.xlu0.b32.start [1/16] %v3083, 128
        %3189 = vxpose.xlu0.b32.cont [2/16] 0.0, 128
        %3190 = vxpose.xlu0.b32.cont [3/16] 0.0, 128
        %3191 = vxpose.xlu0.b32.cont [4/16] 0.0, 128
        %3192 = vxpose.xlu0.b32.cont [5/16] 0.0, 128
        %3193 = vxpose.xlu0.b32.cont [6/16] 0.0, 128
        %3194 = vxpose.xlu0.b32.cont [7/16] 0.0, 128
        %3195 = vxpose.xlu0.b32.cont [8/16] 0.0, 128
        %3196 = vxpose.xlu0.b32.cont [9/16] 0.0, 128
        %3197 = vxpose.xlu0.b32.cont [10/16] 0.0, 128
        %3198 = vxpose.xlu0.b32.cont [11/16] 0.0, 128
        %3199 = vxpose.xlu0.b32.cont [12/16] 0.0, 128
        %3200 = vxpose.xlu0.b32.cont [13/16] 0.0, 128
        %3201 = vxpose.xlu0.b32.cont [14/16] 0.0, 128
        %3202 = vxpose.xlu0.b32.cont [15/16] 0.0, 128
        %3203 = vxpose.xlu0.b32.end [16/16] 0.0, 128
        %v3204 = vpop.trf.xlu0
        %v3205 = vpop.trf.xlu0
        %v3206 = vpop.trf.xlu0
        %v3207 = vpop.trf.xlu0
        %v3208 = vpop.trf.xlu0
        %v3209 = vpop.trf.xlu0
        %v3210 = vpop.trf.xlu0
        %v3211 = vpop.trf.xlu0
        %v3212 = vpop.trf.xlu0
        %v3213 = vpop.trf.xlu0
        %v3214 = vpop.trf.xlu0
        %v3215 = vpop.trf.xlu0
        %v3216 = vpop.trf.xlu0
        %v3217 = vpop.trf.xlu0
        %v3218 = vpop.trf.xlu0
        %v3219 = vpop.trf.xlu0
        %3220 = vxpose.xlu0.b32.start [1/16] %v3118, 128
        %3221 = vxpose.xlu0.b32.cont [2/16] 0.0, 128
        %3222 = vxpose.xlu0.b32.cont [3/16] 0.0, 128
        %3223 = vxpose.xlu0.b32.cont [4/16] 0.0, 128
        %3224 = vxpose.xlu0.b32.cont [5/16] 0.0, 128
        %3225 = vxpose.xlu0.b32.cont [6/16] 0.0, 128
        %3226 = vxpose.xlu0.b32.cont [7/16] 0.0, 128
        %3227 = vxpose.xlu0.b32.cont [8/16] 0.0, 128
        %3228 = vxpose.xlu0.b32.cont [9/16] 0.0, 128
        %3229 = vxpose.xlu0.b32.cont [10/16] 0.0, 128
        %3230 = vxpose.xlu0.b32.cont [11/16] 0.0, 128
        %3231 = vxpose.xlu0.b32.cont [12/16] 0.0, 128
        %3232 = vxpose.xlu0.b32.cont [13/16] 0.0, 128
        %3233 = vxpose.xlu0.b32.cont [14/16] 0.0, 128
        %3234 = vxpose.xlu0.b32.cont [15/16] 0.0, 128
        %3235 = vxpose.xlu0.b32.end [16/16] 0.0, 128
        %v3236 = vpop.trf.xlu0
        %v3237 = vpop.trf.xlu0
        %v3238 = vpop.trf.xlu0
        %v3239 = vpop.trf.xlu0
        %v3240 = vpop.trf.xlu0
        %v3241 = vpop.trf.xlu0
        %v3242 = vpop.trf.xlu0
        %v3243 = vpop.trf.xlu0
        %v3244 = vpop.trf.xlu0
        %v3245 = vpop.trf.xlu0
        %v3246 = vpop.trf.xlu0
        %v3247 = vpop.trf.xlu0
        %v3248 = vpop.trf.xlu0
        %v3249 = vpop.trf.xlu0
        %v3250 = vpop.trf.xlu0
        %v3251 = vpop.trf.xlu0
        %3252 = vxpose.xlu0.b32.start [1/16] %v3153, 128
        %3253 = vxpose.xlu0.b32.cont [2/16] 0.0, 128
        %3254 = vxpose.xlu0.b32.cont [3/16] 0.0, 128
        %3255 = vxpose.xlu0.b32.cont [4/16] 0.0, 128
        %3256 = vxpose.xlu0.b32.cont [5/16] 0.0, 128
        %3257 = vxpose.xlu0.b32.cont [6/16] 0.0, 128
        %3258 = vxpose.xlu0.b32.cont [7/16] 0.0, 128
        %3259 = vxpose.xlu0.b32.cont [8/16] 0.0, 128
        %3260 = vxpose.xlu0.b32.cont [9/16] 0.0, 128
        %3261 = vxpose.xlu0.b32.cont [10/16] 0.0, 128
        %3262 = vxpose.xlu0.b32.cont [11/16] 0.0, 128
        %3263 = vxpose.xlu0.b32.cont [12/16] 0.0, 128
        %3264 = vxpose.xlu0.b32.cont [13/16] 0.0, 128
        %3265 = vxpose.xlu0.b32.cont [14/16] 0.0, 128
        %3266 = vxpose.xlu0.b32.cont [15/16] 0.0, 128
        %3267 = vxpose.xlu0.b32.end [16/16] 0.0, 128
        %v3268 = vpop.trf.xlu0
        %v3269 = vpop.trf.xlu0
        %v3270 = vpop.trf.xlu0
        %v3271 = vpop.trf.xlu0
        %v3272 = vpop.trf.xlu0
        %v3273 = vpop.trf.xlu0
        %v3274 = vpop.trf.xlu0
        %v3275 = vpop.trf.xlu0
        %v3276 = vpop.trf.xlu0
        %v3277 = vpop.trf.xlu0
        %v3278 = vpop.trf.xlu0
        %v3279 = vpop.trf.xlu0
        %v3280 = vpop.trf.xlu0
        %v3281 = vpop.trf.xlu0
        %v3282 = vpop.trf.xlu0
        %v3283 = vpop.trf.xlu0
        %v3284 = vrot.slane %v3236, 4
        %v3285 = vsel %vm565, %v3284, %v3172
        %v3286 = vrot.slane %v3172, 4
        %v3287 = vsel %vm565, %v3236, %v3286
        %v3289 = vunpack.c.l.s4 1983009808
        %v3290 = vunpack.c.0.s8 %v3289
        %v3291 = vperm.slane %v3285, %v3290
        %v3293 = vunpack.c.l.s4 1983009808
        %v3294 = vunpack.c.0.s8 %v3293
        %v3295 = vperm.slane %v3287, %v3294
        %v3296 = vrot.slane %v3268, 4
        %v3297 = vsel %vm565, %v3296, %v3204
        %v3298 = vrot.slane %v3204, 4
        %v3299 = vsel %vm565, %v3268, %v3298
        %v3301 = vunpack.c.l.s4 1983009808
        %v3302 = vunpack.c.0.s8 %v3301
        %v3303 = vperm.slane %v3297, %v3302
        %v3305 = vunpack.c.l.s4 1983009808
        %v3306 = vunpack.c.0.s8 %v3305
        %v3307 = vperm.slane %v3299, %v3306
        %v3308 = vrot.slane %v3303, 4
        %v3309 = vsel %vm565, %v3308, %v3291
        %v3310 = vrot.slane %v3291, 4
        %v3311 = vsel %vm565, %v3303, %v3310
        %v3313 = vunpack.c.l.s4 1934713408
        %v3314 = vunpack.c.0.s8 %v3313
        %v3315 = vperm.slane %v3309, %v3314
        %v3317 = vunpack.c.l.s4 1934713408
        %v3318 = vunpack.c.0.s8 %v3317
        %v3319 = vperm.slane %v3311, %v3318
        %v3320 = vrot.slane %v3307, 4
        %v3321 = vsel %vm565, %v3320, %v3295
        %v3322 = vrot.slane %v3295, 4
        %v3323 = vsel %vm565, %v3307, %v3322
        %v3325 = vunpack.c.l.s4 1934713408
        %v3326 = vunpack.c.0.s8 %v3325
        %v3327 = vperm.slane %v3321, %v3326
        %v3329 = vunpack.c.l.s4 1934713408
        %v3330 = vunpack.c.0.s8 %v3329
        %v3331 = vperm.slane %v3323, %v3330
        %v3332 = vrot.slane %v3315, 4
        %v3333 = vsel %vm565, 0.0, %v3332
        %v3334 = vrot.slane %v3319, 4
        %v3335 = vsel %vm565, 0.0, %v3334
        %v3336 = vrot.slane %v3327, 4
        %v3337 = vsel %vm565, 0.0, %v3336
        %v3338 = vrot.slane %v3331, 4
        %v3339 = vsel %vm565, 0.0, %v3338
        %3341 = vrot.lane.b32.xlu0 %v2481, 120
        %v3342 = vpop.permute.xlu0 %3341
        %3344 = vrot.lane.b32.xlu0 %v2481, 112
        %v3345 = vpop.permute.xlu0 %3344
        %3347 = vrot.lane.b32.xlu0 %v2481, 104
        %v3348 = vpop.permute.xlu0 %3347
        %v3350 = vrot.slane %v3345, 4
        %v3351 = vsel %vm565, %v3350, %v2481
        %v3352 = vrot.slane %v2481, 4
        %v3353 = vsel %vm565, %v3345, %v3352
        %v3355 = vunpack.c.l.s4 1983009808
        %v3356 = vunpack.c.0.s8 %v3355
        %v3357 = vperm.slane %v3351, %v3356
        %v3359 = vunpack.c.l.s4 1983009808
        %v3360 = vunpack.c.0.s8 %v3359
        %v3361 = vperm.slane %v3353, %v3360
        %v3362 = vrot.slane %v3348, 4
        %v3363 = vsel %vm565, %v3362, %v3342
        %v3364 = vrot.slane %v3342, 4
        %v3365 = vsel %vm565, %v3348, %v3364
        %v3367 = vunpack.c.l.s4 1983009808
        %v3368 = vunpack.c.0.s8 %v3367
        %v3369 = vperm.slane %v3363, %v3368
        %v3371 = vunpack.c.l.s4 1983009808
        %v3372 = vunpack.c.0.s8 %v3371
        %v3373 = vperm.slane %v3365, %v3372
        %v3374 = vrot.slane %v3369, 4
        %v3375 = vsel %vm565, %v3374, %v3357
        %v3376 = vrot.slane %v3357, 4
        %v3377 = vsel %vm565, %v3369, %v3376
        %v3379 = vunpack.c.l.s4 1934713408
        %v3380 = vunpack.c.0.s8 %v3379
        %v3381 = vperm.slane %v3375, %v3380
        %v3383 = vunpack.c.l.s4 1934713408
        %v3384 = vunpack.c.0.s8 %v3383
        %v3385 = vperm.slane %v3377, %v3384
        %v3386 = vrot.slane %v3373, 4
        %v3387 = vsel %vm565, %v3386, %v3361
        %v3388 = vrot.slane %v3361, 4
        %v3389 = vsel %vm565, %v3373, %v3388
        %v3391 = vunpack.c.l.s4 1934713408
        %v3392 = vunpack.c.0.s8 %v3391
        %v3393 = vperm.slane %v3387, %v3392
        %v3395 = vunpack.c.l.s4 1934713408
        %v3396 = vunpack.c.0.s8 %v3395
        %v3397 = vperm.slane %v3389, %v3396
        %v3398 = vrot.slane %v3381, 4
        %v3399 = vsel %vm565, 0.0, %v3398
        %v3400 = vrot.slane %v3385, 4
        %v3401 = vsel %vm565, 0.0, %v3400
        %v3402 = vrot.slane %v3393, 4
        %v3403 = vsel %vm565, 0.0, %v3402
        %v3404 = vrot.slane %v3397, 4
        %v3405 = vsel %vm565, 0.0, %v3404
        %v3406 = vsel %vm565, %v3400, %v3381
        %v3408 = vunpack.c.l.s4 1983009808
        %v3409 = vunpack.c.0.s8 %v3408
        %v3410 = vperm.slane %v3406, %v3409
        %v3411 = vrot.slane %v3401, 4
        %v3412 = vsel %vm565, %v3411, %v3399
        %v3414 = vunpack.c.l.s4 1983009808
        %v3415 = vunpack.c.0.s8 %v3414
        %v3416 = vperm.slane %v3412, %v3415
        %v3417 = vsel %vm565, %v3404, %v3393
        %v3419 = vunpack.c.l.s4 1983009808
        %v3420 = vunpack.c.0.s8 %v3419
        %v3421 = vperm.slane %v3417, %v3420
        %v3422 = vrot.slane %v3405, 4
        %v3423 = vsel %vm565, %v3422, %v3403
        %v3425 = vunpack.c.l.s4 1983009808
        %v3426 = vunpack.c.0.s8 %v3425
        %v3427 = vperm.slane %v3423, %v3426
        %v3428 = vrot.slane %v3416, 4
        %v3429 = vsel %vm565, %v3428, %v3410
        %v3430 = vrot.slane %v3410, 4
        %v3431 = vsel %vm565, %v3416, %v3430
        %v3433 = vunpack.c.l.s4 1934713408
        %v3434 = vunpack.c.0.s8 %v3433
        %v3435 = vperm.slane %v3429, %v3434
        %v3437 = vunpack.c.l.s4 1934713408
        %v3438 = vunpack.c.0.s8 %v3437
        %v3439 = vperm.slane %v3431, %v3438
        %v3440 = vrot.slane %v3427, 4
        %v3441 = vsel %vm565, %v3440, %v3421
        %v3442 = vrot.slane %v3421, 4
        %v3443 = vsel %vm565, %v3427, %v3442
        %v3445 = vunpack.c.l.s4 1934713408
        %v3446 = vunpack.c.0.s8 %v3445
        %v3447 = vperm.slane %v3441, %v3446
        %v3449 = vunpack.c.l.s4 1934713408
        %v3450 = vunpack.c.0.s8 %v3449
        %v3451 = vperm.slane %v3443, %v3450
        %v3452 = vrot.slane %v3447, 4
        %v3453 = vsel %vm565, %v3452, %v3435
        %v3454 = vrot.slane %v3435, 4
        %v3455 = vsel %vm565, %v3447, %v3454
        %v3456 = vrot.slane %v3451, 4
        %v3457 = vsel %vm565, %v3456, %v3439
        %v3458 = vrot.slane %v3439, 4
        %v3459 = vsel %vm565, %v3451, %v3458
        %3461 = vrot.lane.b32.xlu0 %v2516, 120
        %v3462 = vpop.permute.xlu0 %3461
        %3464 = vrot.lane.b32.xlu0 %v2516, 112
        %v3465 = vpop.permute.xlu0 %3464
        %3467 = vrot.lane.b32.xlu0 %v2516, 104
        %v3468 = vpop.permute.xlu0 %3467
        %v3470 = vrot.slane %v3465, 4
        %v3471 = vsel %vm565, %v3470, %v2516
        %v3472 = vrot.slane %v2516, 4
        %v3473 = vsel %vm565, %v3465, %v3472
        %v3475 = vunpack.c.l.s4 1983009808
        %v3476 = vunpack.c.0.s8 %v3475
        %v3477 = vperm.slane %v3471, %v3476
        %v3479 = vunpack.c.l.s4 1983009808
        %v3480 = vunpack.c.0.s8 %v3479
        %v3481 = vperm.slane %v3473, %v3480
        %v3482 = vrot.slane %v3468, 4
        %v3483 = vsel %vm565, %v3482, %v3462
        %v3484 = vrot.slane %v3462, 4
        %v3485 = vsel %vm565, %v3468, %v3484
        %v3487 = vunpack.c.l.s4 1983009808
        %v3488 = vunpack.c.0.s8 %v3487
        %v3489 = vperm.slane %v3483, %v3488
        %v3491 = vunpack.c.l.s4 1983009808
        %v3492 = vunpack.c.0.s8 %v3491
        %v3493 = vperm.slane %v3485, %v3492
        %v3494 = vrot.slane %v3489, 4
        %v3495 = vsel %vm565, %v3494, %v3477
        %v3496 = vrot.slane %v3477, 4
        %v3497 = vsel %vm565, %v3489, %v3496
        %v3499 = vunpack.c.l.s4 1934713408
        %v3500 = vunpack.c.0.s8 %v3499
        %v3501 = vperm.slane %v3495, %v3500
        %v3503 = vunpack.c.l.s4 1934713408
        %v3504 = vunpack.c.0.s8 %v3503
        %v3505 = vperm.slane %v3497, %v3504
        %v3506 = vrot.slane %v3493, 4
        %v3507 = vsel %vm565, %v3506, %v3481
        %v3508 = vrot.slane %v3481, 4
        %v3509 = vsel %vm565, %v3493, %v3508
        %v3511 = vunpack.c.l.s4 1934713408
        %v3512 = vunpack.c.0.s8 %v3511
        %v3513 = vperm.slane %v3507, %v3512
        %v3515 = vunpack.c.l.s4 1934713408
        %v3516 = vunpack.c.0.s8 %v3515
        %v3517 = vperm.slane %v3509, %v3516
        %v3518 = vrot.slane %v3501, 4
        %v3519 = vsel %vm565, 0.0, %v3518
        %v3520 = vrot.slane %v3505, 4
        %v3521 = vsel %vm565, 0.0, %v3520
        %v3522 = vrot.slane %v3513, 4
        %v3523 = vsel %vm565, 0.0, %v3522
        %v3524 = vrot.slane %v3517, 4
        %v3525 = vsel %vm565, 0.0, %v3524
        %v3526 = vsel %vm565, %v3520, %v3501
        %v3528 = vunpack.c.l.s4 1983009808
        %v3529 = vunpack.c.0.s8 %v3528
        %v3530 = vperm.slane %v3526, %v3529
        %v3531 = vrot.slane %v3521, 4
        %v3532 = vsel %vm565, %v3531, %v3519
        %v3534 = vunpack.c.l.s4 1983009808
        %v3535 = vunpack.c.0.s8 %v3534
        %v3536 = vperm.slane %v3532, %v3535
        %v3537 = vsel %vm565, %v3524, %v3513
        %v3539 = vunpack.c.l.s4 1983009808
        %v3540 = vunpack.c.0.s8 %v3539
        %v3541 = vperm.slane %v3537, %v3540
        %v3542 = vrot.slane %v3525, 4
        %v3543 = vsel %vm565, %v3542, %v3523
        %v3545 = vunpack.c.l.s4 1983009808
        %v3546 = vunpack.c.0.s8 %v3545
        %v3547 = vperm.slane %v3543, %v3546
        %v3548 = vrot.slane %v3536, 4
        %v3549 = vsel %vm565, %v3548, %v3530
        %v3550 = vrot.slane %v3530, 4
        %v3551 = vsel %vm565, %v3536, %v3550
        %v3553 = vunpack.c.l.s4 1934713408
        %v3554 = vunpack.c.0.s8 %v3553
        %v3555 = vperm.slane %v3549, %v3554
        %v3557 = vunpack.c.l.s4 1934713408
        %v3558 = vunpack.c.0.s8 %v3557
        %v3559 = vperm.slane %v3551, %v3558
        %v3560 = vrot.slane %v3547, 4
        %v3561 = vsel %vm565, %v3560, %v3541
        %v3562 = vrot.slane %v3541, 4
        %v3563 = vsel %vm565, %v3547, %v3562
        %v3565 = vunpack.c.l.s4 1934713408
        %v3566 = vunpack.c.0.s8 %v3565
        %v3567 = vperm.slane %v3561, %v3566
        %v3569 = vunpack.c.l.s4 1934713408
        %v3570 = vunpack.c.0.s8 %v3569
        %v3571 = vperm.slane %v3563, %v3570
        %v3572 = vrot.slane %v3567, 4
        %v3573 = vsel %vm565, %v3572, %v3555
        %v3574 = vrot.slane %v3555, 4
        %v3575 = vsel %vm565, %v3567, %v3574
        %v3576 = vrot.slane %v3571, 4
        %v3577 = vsel %vm565, %v3576, %v3559
        %v3578 = vrot.slane %v3559, 4
        %v3579 = vsel %vm565, %v3571, %v3578
        %3580 = vrot.lane.b32.xlu0 %v2516, 96
        %v3581 = vpop.permute.xlu0 %3580
        %3582 = vrot.lane.b32.xlu0 %v3462, 96
        %v3583 = vpop.permute.xlu0 %3582
        %3584 = vrot.lane.b32.xlu0 %v3465, 96
        %v3585 = vpop.permute.xlu0 %3584
        %3586 = vrot.lane.b32.xlu0 %v3468, 96
        %v3587 = vpop.permute.xlu0 %3586
        %v3592 = vrot.slane %v3585, 4
        %v3593 = vsel %vm565, %v3592, %v3581
        %v3594 = vrot.slane %v3581, 4
        %v3595 = vsel %vm565, %v3585, %v3594
        %v3597 = vunpack.c.l.s4 1983009808
        %v3598 = vunpack.c.0.s8 %v3597
        %v3599 = vperm.slane %v3593, %v3598
        %v3601 = vunpack.c.l.s4 1983009808
        %v3602 = vunpack.c.0.s8 %v3601
        %v3603 = vperm.slane %v3595, %v3602
        %v3604 = vrot.slane %v3587, 4
        %v3605 = vsel %vm565, %v3604, %v3583
        %v3606 = vrot.slane %v3583, 4
        %v3607 = vsel %vm565, %v3587, %v3606
        %v3609 = vunpack.c.l.s4 1983009808
        %v3610 = vunpack.c.0.s8 %v3609
        %v3611 = vperm.slane %v3605, %v3610
        %v3613 = vunpack.c.l.s4 1983009808
        %v3614 = vunpack.c.0.s8 %v3613
        %v3615 = vperm.slane %v3607, %v3614
        %v3616 = vrot.slane %v3611, 4
        %v3617 = vsel %vm565, %v3616, %v3599
        %v3618 = vrot.slane %v3599, 4
        %v3619 = vsel %vm565, %v3611, %v3618
        %v3621 = vunpack.c.l.s4 1934713408
        %v3622 = vunpack.c.0.s8 %v3621
        %v3623 = vperm.slane %v3617, %v3622
        %v3625 = vunpack.c.l.s4 1934713408
        %v3626 = vunpack.c.0.s8 %v3625
        %v3627 = vperm.slane %v3619, %v3626
        %v3628 = vrot.slane %v3615, 4
        %v3629 = vsel %vm565, %v3628, %v3603
        %v3630 = vrot.slane %v3603, 4
        %v3631 = vsel %vm565, %v3615, %v3630
        %v3633 = vunpack.c.l.s4 1934713408
        %v3634 = vunpack.c.0.s8 %v3633
        %v3635 = vperm.slane %v3629, %v3634
        %v3637 = vunpack.c.l.s4 1934713408
        %v3638 = vunpack.c.0.s8 %v3637
        %v3639 = vperm.slane %v3631, %v3638
        %v3640 = vrot.slane %v3623, 4
        %v3641 = vsel %vm565, 0.0, %v3640
        %v3642 = vrot.slane %v3627, 4
        %v3643 = vsel %vm565, 0.0, %v3642
        %v3644 = vrot.slane %v3635, 4
        %v3645 = vsel %vm565, 0.0, %v3644
        %v3646 = vrot.slane %v3639, 4
        %v3647 = vsel %vm565, 0.0, %v3646
        %v3648 = vsel %vm565, %v3642, %v3623
        %v3650 = vunpack.c.l.s4 1983009808
        %v3651 = vunpack.c.0.s8 %v3650
        %v3652 = vperm.slane %v3648, %v3651
        %v3653 = vrot.slane %v3643, 4
        %v3654 = vsel %vm565, %v3653, %v3641
        %v3656 = vunpack.c.l.s4 1983009808
        %v3657 = vunpack.c.0.s8 %v3656
        %v3658 = vperm.slane %v3654, %v3657
        %v3659 = vsel %vm565, %v3646, %v3635
        %v3661 = vunpack.c.l.s4 1983009808
        %v3662 = vunpack.c.0.s8 %v3661
        %v3663 = vperm.slane %v3659, %v3662
        %v3664 = vrot.slane %v3647, 4
        %v3665 = vsel %vm565, %v3664, %v3645
        %v3667 = vunpack.c.l.s4 1983009808
        %v3668 = vunpack.c.0.s8 %v3667
        %v3669 = vperm.slane %v3665, %v3668
        %v3670 = vrot.slane %v3658, 4
        %v3671 = vsel %vm565, %v3670, %v3652
        %v3672 = vrot.slane %v3652, 4
        %v3673 = vsel %vm565, %v3658, %v3672
        %v3675 = vunpack.c.l.s4 1934713408
        %v3676 = vunpack.c.0.s8 %v3675
        %v3677 = vperm.slane %v3671, %v3676
        %v3679 = vunpack.c.l.s4 1934713408
        %v3680 = vunpack.c.0.s8 %v3679
        %v3681 = vperm.slane %v3673, %v3680
        %v3682 = vrot.slane %v3669, 4
        %v3683 = vsel %vm565, %v3682, %v3663
        %v3684 = vrot.slane %v3663, 4
        %v3685 = vsel %vm565, %v3669, %v3684
        %v3687 = vunpack.c.l.s4 1934713408
        %v3688 = vunpack.c.0.s8 %v3687
        %v3689 = vperm.slane %v3683, %v3688
        %v3691 = vunpack.c.l.s4 1934713408
        %v3692 = vunpack.c.0.s8 %v3691
        %v3693 = vperm.slane %v3685, %v3692
        %v3694 = vrot.slane %v3689, 4
        %v3695 = vsel %vm565, %v3694, %v3677
        %v3696 = vrot.slane %v3677, 4
        %v3697 = vsel %vm565, %v3689, %v3696
        %v3698 = vrot.slane %v3693, 4
        %v3699 = vsel %vm565, %v3698, %v3681
        %v3700 = vrot.slane %v3681, 4
        %v3701 = vsel %vm565, %v3693, %v3700
        %v3702 = vpack.c.bf16 %v3453, %v3453
        %v3703 = vpack.c.bf16 %v3455, %v3455
        %v3704 = vpack.c.bf16 %v3457, %v3457
        %v3705 = vpack.c.bf16 %v3459, %v3459
        %v3706 = vpack.c.bf16 %v3573, %v3573
        %v3707 = vpack.c.bf16 %v3575, %v3575
        %v3708 = vpack.c.bf16 %v3577, %v3577
        %v3709 = vpack.c.bf16 %v3579, %v3579
        %v3711 = vsel %vm927, %v3702, 0
        %v3714 = vsel %vm927, %v3706, 0
        %3716 = vmatpush.bf16.xpose.msra.mxu0 0
        %3717 = vmatpush.bf16.xpose.msra.mxu0 0
        %3718 = vmatpush.bf16.xpose.msra.mxu0 0
        %3719 = vmatpush.bf16.xpose.msra.mxu0 0
        %3720 = vmatpush.bf16.xpose.msra.mxu0 0
        %3721 = vmatpush.bf16.xpose.msra.mxu0 0
        %3722 = vmatpush.bf16.xpose.msra.mxu0 0
        %3723 = vmatpush.bf16.xpose.msra.mxu0 %v3714
        %3724 = vmatmul.bf16.gmra.mxu0 %v3711
        %v3725 = vpop.f32.mrf.mxu0
        %v3726 = vadd.f32 0.0, %v3725
        %v3727 = vpop.f32.mrf.mxu0
        %3728 = vdwg.mxu0
        %v3730 = vsel %vm927, %v3703, 0
        %v3733 = vsel %vm927, %v3707, 0
        %3735 = vmatpush.bf16.xpose.msra.mxu0 0
        %3736 = vmatpush.bf16.xpose.msra.mxu0 0
        %3737 = vmatpush.bf16.xpose.msra.mxu0 0
        %3738 = vmatpush.bf16.xpose.msra.mxu0 0
        %3739 = vmatpush.bf16.xpose.msra.mxu0 0
        %3740 = vmatpush.bf16.xpose.msra.mxu0 0
        %3741 = vmatpush.bf16.xpose.msra.mxu0 0
        %3742 = vmatpush.bf16.xpose.msra.mxu0 %v3733
        %3743 = vmatmul.bf16.gmra.mxu0 %v3730
        %v3744 = vpop.f32.mrf.mxu0
        %v3745 = vadd.f32 0.0, %v3744
        %v3746 = vpop.f32.mrf.mxu0
        %3747 = vdwg.mxu0
        %v3749 = vsel %vm927, %v3704, 0
        %v3752 = vsel %vm927, %v3708, 0
        %3754 = vmatpush.bf16.xpose.msra.mxu0 0
        %3755 = vmatpush.bf16.xpose.msra.mxu0 0
        %3756 = vmatpush.bf16.xpose.msra.mxu0 0
        %3757 = vmatpush.bf16.xpose.msra.mxu0 0
        %3758 = vmatpush.bf16.xpose.msra.mxu0 0
        %3759 = vmatpush.bf16.xpose.msra.mxu0 0
        %3760 = vmatpush.bf16.xpose.msra.mxu0 0
        %3761 = vmatpush.bf16.xpose.msra.mxu0 %v3752
        %3762 = vmatmul.bf16.gmra.mxu0 %v3749
        %v3763 = vpop.f32.mrf.mxu0
        %v3764 = vadd.f32 0.0, %v3763
        %v3765 = vpop.f32.mrf.mxu0
        %3766 = vdwg.mxu0
        %v3768 = vsel %vm927, %v3705, 0
        %v3771 = vsel %vm927, %v3709, 0
        %3773 = vmatpush.bf16.xpose.msra.mxu0 0
        %3774 = vmatpush.bf16.xpose.msra.mxu0 0
        %3775 = vmatpush.bf16.xpose.msra.mxu0 0
        %3776 = vmatpush.bf16.xpose.msra.mxu0 0
        %3777 = vmatpush.bf16.xpose.msra.mxu0 0
        %3778 = vmatpush.bf16.xpose.msra.mxu0 0
        %3779 = vmatpush.bf16.xpose.msra.mxu0 0
        %3780 = vmatpush.bf16.xpose.msra.mxu0 %v3771
        %3781 = vmatmul.bf16.gmra.mxu0 %v3768
        %v3782 = vpop.f32.mrf.mxu0
        %v3783 = vadd.f32 0.0, %v3782
        %v3784 = vpop.f32.mrf.mxu0
        %3785 = vdwg.mxu0
        %v3786 = vsel %vm927, %v3726, -inf
        %3787 = vmax.xlane.f32.xlu0 %v3786
        %v3788 = vpop.xlane.xlu0 %3787
        %v3789 = vsel %vm927, %v3745, -inf
        %3790 = vmax.xlane.f32.xlu0 %v3789
        %v3791 = vpop.xlane.xlu0 %3790
        %v3792 = vsel %vm927, %v3764, -inf
        %3793 = vmax.xlane.f32.xlu0 %v3792
        %v3794 = vpop.xlane.xlu0 %3793
        %v3795 = vsel %vm927, %v3783, -inf
        %3796 = vmax.xlane.f32.xlu0 %v3795
        %v3797 = vpop.xlane.xlu0 %3796
        %v3798 = vsub.f32 %v3726, %v3788
        %v3799 = vsub.f32 %v3745, %v3791
        %v3800 = vsub.f32 %v3764, %v3794
        %v3801 = vsub.f32 %v3783, %v3797
        %v3802 = vmul.f32 %v3798, 1.442695
        %v3803 = vpow.pop %v3802
        %v3804 = vmul.f32 %v3799, 1.442695
        %v3805 = vpow.pop %v3804
        %v3806 = vmul.f32 %v3800, 1.442695
        %v3807 = vpow.pop %v3806
        %v3808 = vmul.f32 %v3801, 1.442695
        %v3809 = vpow.pop %v3808
        %v3810 = vsel %vm927, %v3803, 0.0
        %3811 = vadd.xlane.f32.xlu0 %v3810
        %v3812 = vpop.xlane.xlu0 %3811
        %v3813 = vsel %vm927, %v3805, 0.0
        %3814 = vadd.xlane.f32.xlu0 %v3813
        %v3815 = vpop.xlane.xlu0 %3814
        %v3816 = vsel %vm927, %v3807, 0.0
        %3817 = vadd.xlane.f32.xlu0 %v3816
        %v3818 = vpop.xlane.xlu0 %3817
        %v3819 = vsel %vm927, %v3809, 0.0
        %3820 = vadd.xlane.f32.xlu0 %v3819
        %v3821 = vpop.xlane.xlu0 %3820
        %v3822 = vrcp.pop %v3812
        %v3823 = vrcp.pop %v3815
        %v3824 = vrcp.pop %v3818
        %v3825 = vrcp.pop %v3821
        %v3826 = vmul.f32 %v3803, %v3822
        %v3827 = vmul.f32 %v3805, %v3823
        %v3828 = vmul.f32 %v3807, %v3824
        %v3829 = vmul.f32 %v3809, %v3825
        %v3830 = vpack.c.bf16 %v3826, %v3826
        %v3831 = vpack.c.bf16 %v3827, %v3827
        %v3832 = vpack.c.bf16 %v3828, %v3828
        %v3833 = vpack.c.bf16 %v3829, %v3829
        %v3834 = vpack.c.bf16 %v3695, %v3695
        %v3835 = vpack.c.bf16 %v3697, %v3697
        %v3836 = vpack.c.bf16 %v3699, %v3699
        %v3837 = vpack.c.bf16 %v3701, %v3701
        %3838 = vxpose.xlu0.c.b16.start [1/8] %v3834, 128
        %3839 = vxpose.xlu0.c.b16.cont [2/8] 0, 128
        %3840 = vxpose.xlu0.c.b16.cont [3/8] 0, 128
        %3841 = vxpose.xlu0.c.b16.cont [4/8] 0, 128
        %3842 = vxpose.xlu0.c.b16.cont [5/8] 0, 128
        %3843 = vxpose.xlu0.c.b16.cont [6/8] 0, 128
        %3844 = vxpose.xlu0.c.b16.cont [7/8] 0, 128
        %3845 = vxpose.xlu0.c.b16.end [8/8] 0, 128
        %v3846 = vpop.trf.xlu0
        %v3847 = vpop.trf.xlu0
        %v3848 = vpop.trf.xlu0
        %v3849 = vpop.trf.xlu0
        %v3850 = vpop.trf.xlu0
        %v3851 = vpop.trf.xlu0
        %v3852 = vpop.trf.xlu0
        %v3853 = vpop.trf.xlu0
        %v3855 = vsel %vm927, %v3846, 0
        %v3858 = vsel %vm927, %v3830, 0
        %3860 = vmatpush.bf16.xpose.msra.mxu0 0
        %3861 = vmatpush.bf16.xpose.msra.mxu0 0
        %3862 = vmatpush.bf16.xpose.msra.mxu0 0
        %3863 = vmatpush.bf16.xpose.msra.mxu0 0
        %3864 = vmatpush.bf16.xpose.msra.mxu0 0
        %3865 = vmatpush.bf16.xpose.msra.mxu0 0
        %3866 = vmatpush.bf16.xpose.msra.mxu0 0
        %3867 = vmatpush.bf16.xpose.msra.mxu0 %v3858
        %3868 = vmatmul.bf16.gmra.mxu0 %v3855
        %v3869 = vpop.f32.mrf.mxu0
        %v3870 = vadd.f32 0.0, %v3869
        %v3871 = vpop.f32.mrf.mxu0
        %3872 = vdwg.mxu0
        %3873 = vxpose.xlu0.c.b16.start [1/8] %v3835, 128
        %3874 = vxpose.xlu0.c.b16.cont [2/8] 0, 128
        %3875 = vxpose.xlu0.c.b16.cont [3/8] 0, 128
        %3876 = vxpose.xlu0.c.b16.cont [4/8] 0, 128
        %3877 = vxpose.xlu0.c.b16.cont [5/8] 0, 128
        %3878 = vxpose.xlu0.c.b16.cont [6/8] 0, 128
        %3879 = vxpose.xlu0.c.b16.cont [7/8] 0, 128
        %3880 = vxpose.xlu0.c.b16.end [8/8] 0, 128
        %v3881 = vpop.trf.xlu0
        %v3882 = vpop.trf.xlu0
        %v3883 = vpop.trf.xlu0
        %v3884 = vpop.trf.xlu0
        %v3885 = vpop.trf.xlu0
        %v3886 = vpop.trf.xlu0
        %v3887 = vpop.trf.xlu0
        %v3888 = vpop.trf.xlu0
        %v3890 = vsel %vm927, %v3881, 0
        %v3893 = vsel %vm927, %v3831, 0
        %3895 = vmatpush.bf16.xpose.msra.mxu0 0
        %3896 = vmatpush.bf16.xpose.msra.mxu0 0
        %3897 = vmatpush.bf16.xpose.msra.mxu0 0
        %3898 = vmatpush.bf16.xpose.msra.mxu0 0
        %3899 = vmatpush.bf16.xpose.msra.mxu0 0
        %3900 = vmatpush.bf16.xpose.msra.mxu0 0
        %3901 = vmatpush.bf16.xpose.msra.mxu0 0
        %3902 = vmatpush.bf16.xpose.msra.mxu0 %v3893
        %3903 = vmatmul.bf16.gmra.mxu0 %v3890
        %v3904 = vpop.f32.mrf.mxu0
        %v3905 = vadd.f32 0.0, %v3904
        %v3906 = vpop.f32.mrf.mxu0
        %3907 = vdwg.mxu0
        %3908 = vxpose.xlu0.c.b16.start [1/8] %v3836, 128
        %3909 = vxpose.xlu0.c.b16.cont [2/8] 0, 128
        %3910 = vxpose.xlu0.c.b16.cont [3/8] 0, 128
        %3911 = vxpose.xlu0.c.b16.cont [4/8] 0, 128
        %3912 = vxpose.xlu0.c.b16.cont [5/8] 0, 128
        %3913 = vxpose.xlu0.c.b16.cont [6/8] 0, 128
        %3914 = vxpose.xlu0.c.b16.cont [7/8] 0, 128
        %3915 = vxpose.xlu0.c.b16.end [8/8] 0, 128
        %v3916 = vpop.trf.xlu0
        %v3917 = vpop.trf.xlu0
        %v3918 = vpop.trf.xlu0
        %v3919 = vpop.trf.xlu0
        %v3920 = vpop.trf.xlu0
        %v3921 = vpop.trf.xlu0
        %v3922 = vpop.trf.xlu0
        %v3923 = vpop.trf.xlu0
        %v3925 = vsel %vm927, %v3916, 0
        %v3928 = vsel %vm927, %v3832, 0
        %3930 = vmatpush.bf16.xpose.msra.mxu0 0
        %3931 = vmatpush.bf16.xpose.msra.mxu0 0
        %3932 = vmatpush.bf16.xpose.msra.mxu0 0
        %3933 = vmatpush.bf16.xpose.msra.mxu0 0
        %3934 = vmatpush.bf16.xpose.msra.mxu0 0
        %3935 = vmatpush.bf16.xpose.msra.mxu0 0
        %3936 = vmatpush.bf16.xpose.msra.mxu0 0
        %3937 = vmatpush.bf16.xpose.msra.mxu0 %v3928
        %3938 = vmatmul.bf16.gmra.mxu0 %v3925
        %v3939 = vpop.f32.mrf.mxu0
        %v3940 = vadd.f32 0.0, %v3939
        %v3941 = vpop.f32.mrf.mxu0
        %3942 = vdwg.mxu0
        %3943 = vxpose.xlu0.c.b16.start [1/8] %v3837, 128
        %3944 = vxpose.xlu0.c.b16.cont [2/8] 0, 128
        %3945 = vxpose.xlu0.c.b16.cont [3/8] 0, 128
        %3946 = vxpose.xlu0.c.b16.cont [4/8] 0, 128
        %3947 = vxpose.xlu0.c.b16.cont [5/8] 0, 128
        %3948 = vxpose.xlu0.c.b16.cont [6/8] 0, 128
        %3949 = vxpose.xlu0.c.b16.cont [7/8] 0, 128
        %3950 = vxpose.xlu0.c.b16.end [8/8] 0, 128
        %v3951 = vpop.trf.xlu0
        %v3952 = vpop.trf.xlu0
        %v3953 = vpop.trf.xlu0
        %v3954 = vpop.trf.xlu0
        %v3955 = vpop.trf.xlu0
        %v3956 = vpop.trf.xlu0
        %v3957 = vpop.trf.xlu0
        %v3958 = vpop.trf.xlu0
        %v3960 = vsel %vm927, %v3951, 0
        %v3963 = vsel %vm927, %v3833, 0
        %3965 = vmatpush.bf16.xpose.msra.mxu0 0
        %3966 = vmatpush.bf16.xpose.msra.mxu0 0
        %3967 = vmatpush.bf16.xpose.msra.mxu0 0
        %3968 = vmatpush.bf16.xpose.msra.mxu0 0
        %3969 = vmatpush.bf16.xpose.msra.mxu0 0
        %3970 = vmatpush.bf16.xpose.msra.mxu0 0
        %3971 = vmatpush.bf16.xpose.msra.mxu0 0
        %3972 = vmatpush.bf16.xpose.msra.mxu0 %v3963
        %3973 = vmatmul.bf16.gmra.mxu0 %v3960
        %v3974 = vpop.f32.mrf.mxu0
        %v3975 = vadd.f32 0.0, %v3974
        %v3976 = vpop.f32.mrf.mxu0
        %3977 = vdwg.mxu0
        %3978 = vxpose.xlu0.b32.start [1/16] %v3870, 128
        %3979 = vxpose.xlu0.b32.cont [2/16] 0.0, 128
        %3980 = vxpose.xlu0.b32.cont [3/16] 0.0, 128
        %3981 = vxpose.xlu0.b32.cont [4/16] 0.0, 128
        %3982 = vxpose.xlu0.b32.cont [5/16] 0.0, 128
        %3983 = vxpose.xlu0.b32.cont [6/16] 0.0, 128
        %3984 = vxpose.xlu0.b32.cont [7/16] 0.0, 128
        %3985 = vxpose.xlu0.b32.cont [8/16] 0.0, 128
        %3986 = vxpose.xlu0.b32.cont [9/16] 0.0, 128
        %3987 = vxpose.xlu0.b32.cont [10/16] 0.0, 128
        %3988 = vxpose.xlu0.b32.cont [11/16] 0.0, 128
        %3989 = vxpose.xlu0.b32.cont [12/16] 0.0, 128
        %3990 = vxpose.xlu0.b32.cont [13/16] 0.0, 128
        %3991 = vxpose.xlu0.b32.cont [14/16] 0.0, 128
        %3992 = vxpose.xlu0.b32.cont [15/16] 0.0, 128
        %3993 = vxpose.xlu0.b32.end [16/16] 0.0, 128
        %v3994 = vpop.trf.xlu0
        %v3995 = vpop.trf.xlu0
        %v3996 = vpop.trf.xlu0
        %v3997 = vpop.trf.xlu0
        %v3998 = vpop.trf.xlu0
        %v3999 = vpop.trf.xlu0
        %v4000 = vpop.trf.xlu0
        %v4001 = vpop.trf.xlu0
        %v4002 = vpop.trf.xlu0
        %v4003 = vpop.trf.xlu0
        %v4004 = vpop.trf.xlu0
        %v4005 = vpop.trf.xlu0
        %v4006 = vpop.trf.xlu0
        %v4007 = vpop.trf.xlu0
        %v4008 = vpop.trf.xlu0
        %v4009 = vpop.trf.xlu0
        %4010 = vxpose.xlu0.b32.start [1/16] %v3905, 128
        %4011 = vxpose.xlu0.b32.cont [2/16] 0.0, 128
        %4012 = vxpose.xlu0.b32.cont [3/16] 0.0, 128
        %4013 = vxpose.xlu0.b32.cont [4/16] 0.0, 128
        %4014 = vxpose.xlu0.b32.cont [5/16] 0.0, 128
        %4015 = vxpose.xlu0.b32.cont [6/16] 0.0, 128
        %4016 = vxpose.xlu0.b32.cont [7/16] 0.0, 128
        %4017 = vxpose.xlu0.b32.cont [8/16] 0.0, 128
        %4018 = vxpose.xlu0.b32.cont [9/16] 0.0, 128
        %4019 = vxpose.xlu0.b32.cont [10/16] 0.0, 128
        %4020 = vxpose.xlu0.b32.cont [11/16] 0.0, 128
        %4021 = vxpose.xlu0.b32.cont [12/16] 0.0, 128
        %4022 = vxpose.xlu0.b32.cont [13/16] 0.0, 128
        %4023 = vxpose.xlu0.b32.cont [14/16] 0.0, 128
        %4024 = vxpose.xlu0.b32.cont [15/16] 0.0, 128
        %4025 = vxpose.xlu0.b32.end [16/16] 0.0, 128
        %v4026 = vpop.trf.xlu0
        %v4027 = vpop.trf.xlu0
        %v4028 = vpop.trf.xlu0
        %v4029 = vpop.trf.xlu0
        %v4030 = vpop.trf.xlu0
        %v4031 = vpop.trf.xlu0
        %v4032 = vpop.trf.xlu0
        %v4033 = vpop.trf.xlu0
        %v4034 = vpop.trf.xlu0
        %v4035 = vpop.trf.xlu0
        %v4036 = vpop.trf.xlu0
        %v4037 = vpop.trf.xlu0
        %v4038 = vpop.trf.xlu0
        %v4039 = vpop.trf.xlu0
        %v4040 = vpop.trf.xlu0
        %v4041 = vpop.trf.xlu0
        %4042 = vxpose.xlu0.b32.start [1/16] %v3940, 128
        %4043 = vxpose.xlu0.b32.cont [2/16] 0.0, 128
        %4044 = vxpose.xlu0.b32.cont [3/16] 0.0, 128
        %4045 = vxpose.xlu0.b32.cont [4/16] 0.0, 128
        %4046 = vxpose.xlu0.b32.cont [5/16] 0.0, 128
        %4047 = vxpose.xlu0.b32.cont [6/16] 0.0, 128
        %4048 = vxpose.xlu0.b32.cont [7/16] 0.0, 128
        %4049 = vxpose.xlu0.b32.cont [8/16] 0.0, 128
        %4050 = vxpose.xlu0.b32.cont [9/16] 0.0, 128
        %4051 = vxpose.xlu0.b32.cont [10/16] 0.0, 128
        %4052 = vxpose.xlu0.b32.cont [11/16] 0.0, 128
        %4053 = vxpose.xlu0.b32.cont [12/16] 0.0, 128
        %4054 = vxpose.xlu0.b32.cont [13/16] 0.0, 128
        %4055 = vxpose.xlu0.b32.cont [14/16] 0.0, 128
        %4056 = vxpose.xlu0.b32.cont [15/16] 0.0, 128
        %4057 = vxpose.xlu0.b32.end [16/16] 0.0, 128
        %v4058 = vpop.trf.xlu0
        %v4059 = vpop.trf.xlu0
        %v4060 = vpop.trf.xlu0
        %v4061 = vpop.trf.xlu0
        %v4062 = vpop.trf.xlu0
        %v4063 = vpop.trf.xlu0
        %v4064 = vpop.trf.xlu0
        %v4065 = vpop.trf.xlu0
        %v4066 = vpop.trf.xlu0
        %v4067 = vpop.trf.xlu0
        %v4068 = vpop.trf.xlu0
        %v4069 = vpop.trf.xlu0
        %v4070 = vpop.trf.xlu0
        %v4071 = vpop.trf.xlu0
        %v4072 = vpop.trf.xlu0
        %v4073 = vpop.trf.xlu0
        %4074 = vxpose.xlu0.b32.start [1/16] %v3975, 128
        %4075 = vxpose.xlu0.b32.cont [2/16] 0.0, 128
        %4076 = vxpose.xlu0.b32.cont [3/16] 0.0, 128
        %4077 = vxpose.xlu0.b32.cont [4/16] 0.0, 128
        %4078 = vxpose.xlu0.b32.cont [5/16] 0.0, 128
        %4079 = vxpose.xlu0.b32.cont [6/16] 0.0, 128
        %4080 = vxpose.xlu0.b32.cont [7/16] 0.0, 128
        %4081 = vxpose.xlu0.b32.cont [8/16] 0.0, 128
        %4082 = vxpose.xlu0.b32.cont [9/16] 0.0, 128
        %4083 = vxpose.xlu0.b32.cont [10/16] 0.0, 128
        %4084 = vxpose.xlu0.b32.cont [11/16] 0.0, 128
        %4085 = vxpose.xlu0.b32.cont [12/16] 0.0, 128
        %4086 = vxpose.xlu0.b32.cont [13/16] 0.0, 128
        %4087 = vxpose.xlu0.b32.cont [14/16] 0.0, 128
        %4088 = vxpose.xlu0.b32.cont [15/16] 0.0, 128
        %4089 = vxpose.xlu0.b32.end [16/16] 0.0, 128
        %v4090 = vpop.trf.xlu0
        %v4091 = vpop.trf.xlu0
        %v4092 = vpop.trf.xlu0
        %v4093 = vpop.trf.xlu0
        %v4094 = vpop.trf.xlu0
        %v4095 = vpop.trf.xlu0
        %v4096 = vpop.trf.xlu0
        %v4097 = vpop.trf.xlu0
        %v4098 = vpop.trf.xlu0
        %v4099 = vpop.trf.xlu0
        %v4100 = vpop.trf.xlu0
        %v4101 = vpop.trf.xlu0
        %v4102 = vpop.trf.xlu0
        %v4103 = vpop.trf.xlu0
        %v4104 = vpop.trf.xlu0
        %v4105 = vpop.trf.xlu0
        %v4106 = vrot.slane %v4058, 4
        %v4107 = vsel %vm565, %v4106, %v3994
        %v4108 = vrot.slane %v3994, 4
        %v4109 = vsel %vm565, %v4058, %v4108
        %v4111 = vunpack.c.l.s4 1983009808
        %v4112 = vunpack.c.0.s8 %v4111
        %v4113 = vperm.slane %v4107, %v4112
        %v4115 = vunpack.c.l.s4 1983009808
        %v4116 = vunpack.c.0.s8 %v4115
        %v4117 = vperm.slane %v4109, %v4116
        %v4118 = vrot.slane %v4090, 4
        %v4119 = vsel %vm565, %v4118, %v4026
        %v4120 = vrot.slane %v4026, 4
        %v4121 = vsel %vm565, %v4090, %v4120
        %v4123 = vunpack.c.l.s4 1983009808
        %v4124 = vunpack.c.0.s8 %v4123
        %v4125 = vperm.slane %v4119, %v4124
        %v4127 = vunpack.c.l.s4 1983009808
        %v4128 = vunpack.c.0.s8 %v4127
        %v4129 = vperm.slane %v4121, %v4128
        %v4130 = vrot.slane %v4125, 4
        %v4131 = vsel %vm565, %v4130, %v4113
        %v4132 = vrot.slane %v4113, 4
        %v4133 = vsel %vm565, %v4125, %v4132
        %v4135 = vunpack.c.l.s4 1934713408
        %v4136 = vunpack.c.0.s8 %v4135
        %v4137 = vperm.slane %v4131, %v4136
        %v4139 = vunpack.c.l.s4 1934713408
        %v4140 = vunpack.c.0.s8 %v4139
        %v4141 = vperm.slane %v4133, %v4140
        %v4142 = vrot.slane %v4129, 4
        %v4143 = vsel %vm565, %v4142, %v4117
        %v4144 = vrot.slane %v4117, 4
        %v4145 = vsel %vm565, %v4129, %v4144
        %v4147 = vunpack.c.l.s4 1934713408
        %v4148 = vunpack.c.0.s8 %v4147
        %v4149 = vperm.slane %v4143, %v4148
        %v4151 = vunpack.c.l.s4 1934713408
        %v4152 = vunpack.c.0.s8 %v4151
        %v4153 = vperm.slane %v4145, %v4152
        %v4154 = vrot.slane %v4137, 4
        %v4155 = vsel %vm565, 0.0, %v4154
        %v4156 = vrot.slane %v4141, 4
        %v4157 = vsel %vm565, 0.0, %v4156
        %v4158 = vrot.slane %v4149, 4
        %v4159 = vsel %vm565, 0.0, %v4158
        %v4160 = vrot.slane %v4153, 4
        %v4161 = vsel %vm565, 0.0, %v4160
        %v4162 = vsel %vm565, %v3334, %v3315
        %v4164 = vunpack.c.l.s4 1983009808
        %v4165 = vunpack.c.0.s8 %v4164
        %v4166 = vperm.slane %v4162, %v4165
        %v4167 = vrot.slane %v3335, 4
        %v4168 = vsel %vm565, %v4167, %v3333
        %v4170 = vunpack.c.l.s4 1983009808
        %v4171 = vunpack.c.0.s8 %v4170
        %v4172 = vperm.slane %v4168, %v4171
        %v4173 = vsel %vm565, %v3338, %v3327
        %v4175 = vunpack.c.l.s4 1983009808
        %v4176 = vunpack.c.0.s8 %v4175
        %v4177 = vperm.slane %v4173, %v4176
        %v4178 = vrot.slane %v3339, 4
        %v4179 = vsel %vm565, %v4178, %v3337
        %v4181 = vunpack.c.l.s4 1983009808
        %v4182 = vunpack.c.0.s8 %v4181
        %v4183 = vperm.slane %v4179, %v4182
        %v4184 = vrot.slane %v4172, 4
        %v4185 = vsel %vm565, %v4184, %v4166
        %v4186 = vrot.slane %v4166, 4
        %v4187 = vsel %vm565, %v4172, %v4186
        %v4189 = vunpack.c.l.s4 1934713408
        %v4190 = vunpack.c.0.s8 %v4189
        %v4191 = vperm.slane %v4185, %v4190
        %v4193 = vunpack.c.l.s4 1934713408
        %v4194 = vunpack.c.0.s8 %v4193
        %v4195 = vperm.slane %v4187, %v4194
        %v4196 = vrot.slane %v4183, 4
        %v4197 = vsel %vm565, %v4196, %v4177
        %v4198 = vrot.slane %v4177, 4
        %v4199 = vsel %vm565, %v4183, %v4198
        %v4201 = vunpack.c.l.s4 1934713408
        %v4202 = vunpack.c.0.s8 %v4201
        %v4203 = vperm.slane %v4197, %v4202
        %v4205 = vunpack.c.l.s4 1934713408
        %v4206 = vunpack.c.0.s8 %v4205
        %v4207 = vperm.slane %v4199, %v4206
        %v4208 = vrot.slane %v4203, 4
        %v4209 = vsel %vm565, %v4208, %v4191
        %v4210 = vrot.slane %v4191, 4
        %v4211 = vsel %vm565, %v4203, %v4210
        %v4212 = vrot.slane %v4207, 4
        %v4213 = vsel %vm565, %v4212, %v4195
        %v4214 = vrot.slane %v4195, 4
        %v4215 = vsel %vm565, %v4207, %v4214
        %4217 = vrot.lane.b32.xlu0 %v4211, 8
        %v4218 = vpop.permute.xlu0 %4217
        %4221 = vrot.lane.b32.xlu0 %v4213, 16
        %v4222 = vpop.permute.xlu0 %4221
        %4225 = vrot.lane.b32.xlu0 %v4215, 24
        %v4226 = vpop.permute.xlu0 %4225
        %v4228 = vsel %vm927, %v4209, %v4218
        %v4229 = vsel %vm2281, %v4228, %v4222
        %v4230 = vsel %vm2283, %v4229, %v4226
        %v4231 = vsel %vm565, %v4156, %v4137
        %v4233 = vunpack.c.l.s4 1983009808
        %v4234 = vunpack.c.0.s8 %v4233
        %v4235 = vperm.slane %v4231, %v4234
        %v4236 = vrot.slane %v4157, 4
        %v4237 = vsel %vm565, %v4236, %v4155
        %v4239 = vunpack.c.l.s4 1983009808
        %v4240 = vunpack.c.0.s8 %v4239
        %v4241 = vperm.slane %v4237, %v4240
        %v4242 = vsel %vm565, %v4160, %v4149
        %v4244 = vunpack.c.l.s4 1983009808
        %v4245 = vunpack.c.0.s8 %v4244
        %v4246 = vperm.slane %v4242, %v4245
        %v4247 = vrot.slane %v4161, 4
        %v4248 = vsel %vm565, %v4247, %v4159
        %v4250 = vunpack.c.l.s4 1983009808
        %v4251 = vunpack.c.0.s8 %v4250
        %v4252 = vperm.slane %v4248, %v4251
        %v4253 = vrot.slane %v4241, 4
        %v4254 = vsel %vm565, %v4253, %v4235
        %v4255 = vrot.slane %v4235, 4
        %v4256 = vsel %vm565, %v4241, %v4255
        %v4258 = vunpack.c.l.s4 1934713408
        %v4259 = vunpack.c.0.s8 %v4258
        %v4260 = vperm.slane %v4254, %v4259
        %v4262 = vunpack.c.l.s4 1934713408
        %v4263 = vunpack.c.0.s8 %v4262
        %v4264 = vperm.slane %v4256, %v4263
        %v4265 = vrot.slane %v4252, 4
        %v4266 = vsel %vm565, %v4265, %v4246
        %v4267 = vrot.slane %v4246, 4
        %v4268 = vsel %vm565, %v4252, %v4267
        %v4270 = vunpack.c.l.s4 1934713408
        %v4271 = vunpack.c.0.s8 %v4270
        %v4272 = vperm.slane %v4266, %v4271
        %v4274 = vunpack.c.l.s4 1934713408
        %v4275 = vunpack.c.0.s8 %v4274
        %v4276 = vperm.slane %v4268, %v4275
        %v4277 = vrot.slane %v4272, 4
        %v4278 = vsel %vm565, %v4277, %v4260
        %v4279 = vrot.slane %v4260, 4
        %v4280 = vsel %vm565, %v4272, %v4279
        %v4281 = vrot.slane %v4276, 4
        %v4282 = vsel %vm565, %v4281, %v4264
        %v4283 = vrot.slane %v4264, 4
        %v4284 = vsel %vm565, %v4276, %v4283
        %4286 = vrot.lane.b32.xlu0 %v4280, 8
        %v4287 = vpop.permute.xlu0 %4286
        %4290 = vrot.lane.b32.xlu0 %v4282, 16
        %v4291 = vpop.permute.xlu0 %4290
        %4294 = vrot.lane.b32.xlu0 %v4284, 24
        %v4295 = vpop.permute.xlu0 %4294
        %v4297 = vsel %vm927, %v4278, %v4287
        %v4298 = vsel %vm2281, %v4297, %v4291
        %v4299 = vsel %vm2283, %v4298, %v4295
        %v4300 = vadd.f32 %v4230, %v2446
        %v4301 = vadd.f32 %v4299, %v2447
        %v4302 = vsel %vm531, %v4300, 0.0
        %4303 = vadd.xlane.f32.xlu0 %v4302
        %v4304 = vpop.xlane.xlu0 %4303
        %v4305 = vsel %vm531, %v4301, 0.0
        %4306 = vadd.xlane.f32.xlu0 %v4305
        %v4307 = vpop.xlane.xlu0 %4306
        %v4308 = vmul.f32 %v4304, %v2403
        %v4309 = vmul.f32 %v4307, %v2403
        %v4310 = vsub.f32 %v4300, %v4308
        %v4311 = vsub.f32 %v4301, %v4309
        %v4312 = vmul.f32 %v4310, %v4310
        %v4313 = vmul.f32 %v4311, %v4311
        %v4314 = vsel %vm531, %v4312, 0.0
        %4315 = vadd.xlane.f32.xlu0 %v4314
        %v4316 = vpop.xlane.xlu0 %4315
        %v4317 = vsel %vm531, %v4313, 0.0
        %4318 = vadd.xlane.f32.xlu0 %v4317
        %v4319 = vpop.xlane.xlu0 %4318
        %v4320 = vmul.f32 %v4316, %v2403
        %v4321 = vmul.f32 %v4319, %v2403
        %v4322 = vadd.f32 %v4320, 1e-05
        %v4323 = vadd.f32 %v4321, 1e-05
        %v4324 = vrsqrt.pop %v4322
        %v4325 = vmul.f32 %v4324, %v4322
        %v4326 = vmul.f32 %v4325, %v4324
        %v4327 = vmul.f32 0.5, %v4326
        %v4328 = vsub.f32 1.5, %v4327
        %v4329 = vmul.f32 %v4324, %v4328
        %vm4330 = vweird.f32 %v4322
        %vm4331 = vweird.f32 %v4324
        %vm4332 = vmor %vm4330, %vm4331
        %v4333 = vsel %vm4332, %v4324, %v4329
        %v4334 = vrsqrt.pop %v4323
        %v4335 = vmul.f32 %v4334, %v4323
        %v4336 = vmul.f32 %v4335, %v4334
        %v4337 = vmul.f32 0.5, %v4336
        %v4338 = vsub.f32 1.5, %v4337
        %v4339 = vmul.f32 %v4334, %v4338
        %vm4340 = vweird.f32 %v4323
        %vm4341 = vweird.f32 %v4334
        %vm4342 = vmor %vm4340, %vm4341
        %v4343 = vsel %vm4342, %v4334, %v4339
        %v4344 = vmul.f32 %v4310, %v4333
        %v4345 = vmul.f32 %v4311, %v4343
        %v4346 = vperm.slane %v511, 6
        %v4347 = vmul.f32 %v4344, %v4346
        %v4348 = vmul.f32 %v4345, %v4346
        %v4349 = vperm.slane %v511, 7
        %v4350 = vadd.f32 %v4347, %v4349
        %v4351 = vadd.f32 %v4348, %v4349
        %v4352 = vld [vmem:[%s411] sm:$0xf]
        %v4353 = vld [vmem:[%s411 + $0x4] sm:$0xf]
        %v4354 = vld [vmem:[%s411 + $0x8] sm:$0xf]
        %v4355 = vld [vmem:[%s411 + $0xc] sm:$0xf]
        %v4356 = vpack.c.bf16 %v4351, %v4350
        %v4357 = vperm.slane %v512, 0
        %v4362 = vunpack.c.l.b16 %v4352
        %v4363 = vunpack.c.l.b16 %v4353
        %v4364 = vunpack.c.l.b16 %v4354
        %v4365 = vunpack.c.l.b16 %v4355
        %v4366 = vpack.c.b16 %v4363, %v4362
        %v4367 = vpack.c.b16 %v4365, %v4364
        %v4371 = vsel %vm531, %v4356, 0
        %4373 = vmatpush.bf16.msra.mxu0 0
        %4374 = vmatpush.bf16.msra.mxu0 0
        %4375 = vmatpush.bf16.msra.mxu0 0
        %4376 = vmatpush.bf16.msra.mxu0 0
        %4377 = vmatpush.bf16.msra.mxu0 0
        %4378 = vmatpush.bf16.msra.mxu0 0
        %4379 = vmatpush.bf16.msra.mxu0 %v4367
        %4380 = vmatpush.bf16.msra.mxu0 %v4366
        %4381 = vmatmul.bf16.gmra.mxu0 %v4371
        %v4382 = vpop.f32.mrf.mxu0
        %v4383 = vadd.f32 %v4357, %v4382
        %v4384 = vpop.f32.mrf.mxu0
        %v4385 = vadd.f32 %v4357, %v4384
        %4386 = vdwg.mxu0
        %v4387 = vmax.f32 %v4383, 0.0
        %v4388 = vmax.f32 %v4385, 0.0
        %v4389 = vld [vmem:[%s491] sm:$0xf]
        %v4390 = vld [vmem:[%s491 + $0x4] sm:$0xf]
        %v4391 = vld [vmem:[%s491 + $0x8] sm:$0xf]
        %v4392 = vld [vmem:[%s491 + $0xc] sm:$0xf]
        %v4393 = vld [vmem:[%s491 + $0x10] sm:$0xf]
        %v4394 = vld [vmem:[%s491 + $0x14] sm:$0xf]
        %v4395 = vld [vmem:[%s491 + $0x18] sm:$0xf]
        %v4396 = vld [vmem:[%s491 + $0x1c] sm:$0xf]
        %v4397 = vpack.c.bf16 %v4388, %v4387
        %v4398 = vperm.slane %v512, 1
        %v4407 = vunpack.c.l.b16 %v4389
        %v4408 = vunpack.c.l.b16 %v4390
        %v4409 = vunpack.c.l.b16 %v4391
        %v4410 = vunpack.c.l.b16 %v4392
        %v4411 = vunpack.c.l.b16 %v4393
        %v4412 = vunpack.c.l.b16 %v4394
        %v4413 = vunpack.c.l.b16 %v4395
        %v4414 = vunpack.c.l.b16 %v4396
        %v4415 = vpack.c.b16 %v4408, %v4407
        %v4416 = vpack.c.b16 %v4410, %v4409
        %v4417 = vpack.c.b16 %v4412, %v4411
        %v4418 = vpack.c.b16 %v4414, %v4413
        %vm4423 = vcmask 523264
        %v4425 = vsel %vm4423, %v4397, 0
        %4427 = vmatpush.bf16.msra.mxu0 0
        %4428 = vmatpush.bf16.msra.mxu0 0
        %4429 = vmatpush.bf16.msra.mxu0 0
        %4430 = vmatpush.bf16.msra.mxu0 0
        %4431 = vmatpush.bf16.msra.mxu0 %v4418
        %4432 = vmatpush.bf16.msra.mxu0 %v4417
        %4433 = vmatpush.bf16.msra.mxu0 %v4416
        %4434 = vmatpush.bf16.msra.mxu0 %v4415
        %4435 = vmatmul.bf16.gmra.mxu0 %v4425
        %v4436 = vpop.f32.mrf.mxu0
        %v4437 = vadd.f32 %v4398, %v4436
        %v4438 = vpop.f32.mrf.mxu0
        %v4439 = vadd.f32 %v4398, %v4438
        %4440 = vdwg.mxu0
        %v4441 = vadd.f32 %v4437, %v4350
        %v4442 = vadd.f32 %v4439, %v4351
        %v4443 = vsel %vm531, %v4441, 0.0
        %4444 = vadd.xlane.f32.xlu0 %v4443
        %v4445 = vpop.xlane.xlu0 %4444
        %v4446 = vsel %vm531, %v4442, 0.0
        %4447 = vadd.xlane.f32.xlu0 %v4446
        %v4448 = vpop.xlane.xlu0 %4447
        %v4449 = vmul.f32 %v4445, %v2403
        %v4450 = vmul.f32 %v4448, %v2403
        %v4451 = vsub.f32 %v4441, %v4449
        %v4452 = vsub.f32 %v4442, %v4450
        %v4453 = vmul.f32 %v4451, %v4451
        %v4454 = vmul.f32 %v4452, %v4452
        %v4455 = vsel %vm531, %v4453, 0.0
        %4456 = vadd.xlane.f32.xlu0 %v4455
        %v4457 = vpop.xlane.xlu0 %4456
        %v4458 = vsel %vm531, %v4454, 0.0
        %4459 = vadd.xlane.f32.xlu0 %v4458
        %v4460 = vpop.xlane.xlu0 %4459
        %v4461 = vmul.f32 %v4457, %v2403
        %v4462 = vmul.f32 %v4460, %v2403
        %v4463 = vadd.f32 %v4461, 1e-05
        %v4464 = vadd.f32 %v4462, 1e-05
        %v4465 = vrsqrt.pop %v4463
        %v4466 = vmul.f32 %v4465, %v4463
        %v4467 = vmul.f32 %v4466, %v4465
        %v4468 = vmul.f32 0.5, %v4467
        %v4469 = vsub.f32 1.5, %v4468
        %v4470 = vmul.f32 %v4465, %v4469
        %vm4471 = vweird.f32 %v4463
        %vm4472 = vweird.f32 %v4465
        %vm4473 = vmor %vm4471, %vm4472
        %v4474 = vsel %vm4473, %v4465, %v4470
        %v4475 = vrsqrt.pop %v4464
        %v4476 = vmul.f32 %v4475, %v4464
        %v4477 = vmul.f32 %v4476, %v4475
        %v4478 = vmul.f32 0.5, %v4477
        %v4479 = vsub.f32 1.5, %v4478
        %v4480 = vmul.f32 %v4475, %v4479
        %vm4481 = vweird.f32 %v4464
        %vm4482 = vweird.f32 %v4475
        %vm4483 = vmor %vm4481, %vm4482
        %v4484 = vsel %vm4483, %v4475, %v4480
        %v4485 = vmul.f32 %v4451, %v4474
        %v4486 = vmul.f32 %v4452, %v4484
        %v4487 = vperm.slane %v512, 2
        %v4488 = vmul.f32 %v4485, %v4487
        %v4489 = vmul.f32 %v4486, %v4487
        %v4490 = vperm.slane %v512, 3
        %v4491 = vadd.f32 %v4488, %v4490
        %v4492 = vadd.f32 %v4489, %v4490
        %4493 = vst.msk [vmem:[#allocation8] sm:$0xff] %vm531, %v4491
        %4494 = vst.msk [vmem:[#allocation8 + $0x8] sm:$0xff] %vm531, %v4492
        // Predicated region
        $region73: #{tpu_custom_call.1} parent=55 // pred_check
          %p4495 = pneg %p262
        $region74: #{tpu_custom_call.1} parent=55 // pred_check_branch
          %4497 = sbr.rel (%p4495) target = $region76
        $region75: #{tpu_custom_call.1} parent=55 // pred_region
          %4499 = vsyncadd [#allocation4], 0
          %s4500 = sshll.u32 [#allocation8], 4
          %s4501 = int_to_ptr.vmem [resolvable:$true] %s4500
          %s4502 = sshll.u32 %s9, 4
          %s4503 = int_to_ptr.hbm [resolvable:$true] %s4502
          %4508 = dma.vmem_to_hbm [thread:$0]  %s4501, 256, %s4503, [#allocation4], 128, 128, 8
        $region76: #{tpu_custom_call.1} parent=55 // pred_fallthru
          _
        // Predicated region
        $region77: #{tpu_custom_call.1} parent=55 // pred_check
          %p4509 = pneg %p262
        $region78: #{tpu_custom_call.1} parent=55 // pred_check_branch
          %4511 = sbr.rel (%p4509) target = $region80
        $region79: #{tpu_custom_call.1} parent=55 // pred_region
          %4513 = dma.done [#allocation4], 256
        $region80: #{tpu_custom_call.1} parent=55 // pred_fallthru
          _
      $region56: #{tpu_custom_call.1} parent=5 // pred_fallthru
        _
      %p4514 = scmp.le.s32.totalorder 2, %s20
      // Predicated region
      $region81: #{tpu_custom_call.1} parent=5 // pred_check
        %p4515 = pneg %p4514
      $region82: #{tpu_custom_call.1} parent=5 // pred_check_branch
        %4517 = sbr.rel (%p4515) target = $region84
      $region83: #{tpu_custom_call.1} parent=5 // pred_region
        %s4518 = ssub.s32 %s20, 2
      $region84: #{tpu_custom_call.1} parent=5 // pred_fallthru
        _
    $region6: #{tpu_custom_call.1} parent=1 // loop_footer
      %s24 = sadd.s32 1, %s20
    $region7: #{tpu_custom_call.1} parent=1 // loop_footer_branch
      %19 = sbr.rel target = $region3
    $region8: #{tpu_custom_call.1} parent=1 // loop_exit
      _
    %4519 = vsyncpa [#allocation3], 1
    %s4520 = scalar_lea.sflag [#allocation3], 1
    %4521 = vsyncpa %s4520, 1
    %4522 = vsyncpa [#allocation6], 1
    %s4523 = scalar_lea.sflag [#allocation6], 1
    %4524 = vsyncpa %s4523, 1
    %4525 = vsyncpa [#allocation4], 1
    %s4526 = scalar_lea.sflag [#allocation4], 1
    %4527 = vsyncpa %s4526, 1

</llo_original>
